<compile_context>
chip_gen: v7x
topology: tpu7x:2x2x1
jax: 0.10.0
libtpu: 0.0.40
codegen_flags: <defaults>
</compile_context>

<pallas_src>
import jax
import jax.numpy as jnp
from jax import lax
from jax.experimental import pallas as pl
from jax.experimental.pallas import tpu as pltpu

EPS = 1e-5  # PyTorch InstanceNorm2d default eps, affine=False


def _make_kernel(Bn, C, H, W):
    HW = H * W

    def kernel(x_ref, w1_ref, w2_ref, o_ref):
        # Single full-block load; lane-dense (Bn, C, HW) layout.
        x = x_ref[...].astype(jnp.float32)                      # (Bn, C, HW)

        # Boundary masks depend only on the lane (flattened H*W) position:
        # compute once at (1, 1, HW), let jnp.where broadcast over (Bn, C).
        idx = lax.broadcasted_iota(jnp.int32, (1, 1, HW), 2)
        col = idx % W
        is_w0 = col == 0            # w == 0
        is_wl = col == W - 1        # w == W-1
        is_h0 = idx < W             # h == 0
        is_hl = idx >= HW - W       # h == H-1

        def taps9(u):
            # 3x3 reflect-padded taps from XLU lane rotations + masked selects
            # at the reflect boundary; the (H+2, W+2) padded tensor is never
            # materialized.  Row variants built once, reused for all columns.
            up = pltpu.roll(u, shift=W, axis=2)           # u[h-1, w] (wraps h==0)
            dn = pltpu.roll(u, shift=HW - W, axis=2)      # u[h+1, w] (wraps h==H-1)
            r_m1 = jnp.where(is_h0, dn, up)               # reflect: row -1 -> 1
            r_p1 = jnp.where(is_hl, up, dn)               # reflect: row H  -> H-2
            out = []
            for r in (r_m1, u, r_p1):
                rt = pltpu.roll(r, shift=1, axis=2)       # r[h, w-1] (wraps w==0)
                lt = pltpu.roll(r, shift=HW - 1, axis=2)  # r[h, w+1] (wraps w==W-1)
                c_m1 = jnp.where(is_w0, lt, rt)           # reflect: col -1 -> 1
                c_p1 = jnp.where(is_wl, rt, lt)           # reflect: col W  -> W-2
                out.append((c_m1, r, c_p1))
            return out                                    # out[dh][dw], -1..+1

        def conv3x3(u, w_ref):
            # w_ref: (C_out, 9*C_in) f32, column index = (dh*3 + dw)*C + c_in.
            # Channel contraction as C*9 full-(Bn, C, HW) FMAs on the VPU:
            # the per-input-channel tap slice broadcasts across the output-
            # channel sublanes, the per-output-channel weight column
            # broadcasts across lanes.  No one-sublane accumulators, no
            # sublane concat.  Bias omitted on purpose: it is exactly
            # cancelled by the affine-free InstanceNorm that follows.
            # TODO(synk): for large C (>=64) switch to im2col + MXU jnp.dot
            # with preferred_element_type=f32 instead of VPU FMAs.
            wm = w_ref[...].astype(jnp.float32)           # (C, 9C), one load
            t = taps9(u)
            acc = None
            for dh in range(3):
                for dw in range(3):
                    tv = t[dh][dw]                        # (Bn, C, HW)
                    for i in range(C):
                        k = (dh * 3 + dw) * C + i
                        wv = wm[:, k:k + 1][None]         # (1, C, 1)
                        term = wv * tv[:, i:i + 1, :]     # -> (Bn, C, HW)
                        acc = term if acc is None else acc + term
            return acc

        def inorm(u):
            # InstanceNorm2d(affine=False): mean-subtracted two-pass moments
            # over the lane (H*W) axis, vectorized over channels & samples.
            inv = 1.0 / HW
            mean = jnp.sum(u, axis=-1, keepdims=True) * inv
            c = u - mean
            var = jnp.sum(c * c, axis=-1, keepdims=True) * inv
            return c * lax.rsqrt(var + EPS)

        y = inorm(conv3x3(x, w1_ref))
        y = jnp.maximum(y, 0.0)                           # ReLU
        y = inorm(conv3x3(y, w2_ref))

        # Residual add + single unmasked lane-dense store.
        o_ref[...] = (x + y).astype(o_ref.dtype)

    return kernel


def _num_tensorcores():
    # Only multi-TensorCore chips (v7x, v4 megacore) benefit from >=2
    # "parallel" grid steps; v5e/v6e are single-TC so extra steps are pure
    # serial overhead.
    try:
        kind = jax.devices()[0].device_kind.lower()
        if "v7" in kind or "v4" in kind:
            return 2
    except Exception:
        pass
    return 1


def _pick_block_batch(N, C, HW):
    # Largest divisor of N such that
    #   (a) ~16 block-sized f32 temporaries stay a few MiB (well under any
    #       scoped-VMEM default on v5e/v6e/v7x), and
    #   (b) on multi-TC chips at least one grid step per TensorCore remains.
    n_tc = _num_tensorcores()
    vmem_budget = 4 * 1024 * 1024
    cap_vmem = max(1, vmem_budget // (16 * C * HW * 4))
    cap = max(1, min(N // n_tc if N >= n_tc else N, cap_vmem))
    best = 1
    for bn in range(1, cap + 1):
        if N % bn == 0:
            best = bn
    return best


def residual_block(x, w1, b1, w2, b2):
    # b1/b2 are accepted for API parity with nn.Conv2d but are mathematically
    # cancelled by the affine-free InstanceNorm following each conv, so they
    # are not passed to (or used by) the kernel.
    del b1, b2
    N, C, H, W = x.shape
    assert H >= 2 and W >= 2, "ReflectionPad2d(1) requires H >= 2 and W >= 2"
    HW = H * W
    Bn = _pick_block_batch(N, C, HW)

    xr = x.reshape(N, C, HW)       # lane-dense: last axis is H*W
    # Weight layout (C_out, 9*C_in): column index = (dh*3 + dw)*C_in + c_in.
    w1m = w1.transpose(0, 2, 3, 1).reshape(C, 9 * C)
    w2m = w2.transpose(0, 2, 3, 1).reshape(C, 9 * C)
    wspec = pl.BlockSpec((C, 9 * C), lambda n: (0, 0))   # full, VMEM-resident

    out = pl.pallas_call(
        _make_kernel(Bn, C, H, W),
        out_shape=jax.ShapeDtypeStruct((N, C, HW), x.dtype),
        grid=(N // Bn,),
        in_specs=[
            pl.BlockSpec((Bn, C, HW), lambda n: (n, 0, 0)),
            wspec,   # w1 (C, 9C)
            wspec,   # w2 (C, 9C)
        ],
        out_specs=pl.BlockSpec((Bn, C, HW), lambda n: (n, 0, 0)),
        compiler_params=pltpu.CompilerParams(
            dimension_semantics=("parallel",)),
    )(xr, w1m, w2m)
    return out.reshape(N, C, H, W)


def residual_block_ref(x, w1, b1, w2, b2):
    # Pure-JAX reference for correctness checking (keeps the biases).
    def conv(xin, w, b):
        xp = jnp.pad(xin, ((0, 0), (0, 0), (1, 1), (1, 1)), mode="reflect")
        y = lax.conv_general_dilated(
            xp, w, window_strides=(1, 1), padding="VALID",
            dimension_numbers=("NCHW", "OIHW", "NCHW"))
        return y + b.reshape(1, -1, 1, 1)

    def inorm(y):
        mean = y.mean(axis=(2, 3), keepdims=True)
        var = ((y - mean) ** 2).mean(axis=(2, 3), keepdims=True)
        return (y - mean) * lax.rsqrt(var + EPS)

    y = inorm(conv(x, w1, b1))
    y = jnp.maximum(y, 0.0)
    y = inorm(conv(y, w2, b2))
    return x + y


if __name__ == "__main__":
    key = jax.random.PRNGKey(0)
    kx, k1, k2, k3, k4 = jax.random.split(key, 5)
    N, C, H, W = 2, 4, 16, 16
    x = jax.random.normal(kx, (N, C, H, W), jnp.float32)

    # Deterministic parameter init (PyTorch Conv2d-style uniform bounds).
    bound = 1.0 / (C * 3 * 3) ** 0.5
    w1 = jax.random.uniform(k1, (C, C, 3, 3), jnp.float32, -bound, bound)
    b1 = jax.random.uniform(k2, (C,), jnp.float32, -bound, bound)
    w2 = jax.random.uniform(k3, (C, C, 3, 3), jnp.float32, -bound, bound)
    b2 = jax.random.uniform(k4, (C,), jnp.float32, -bound, bound)

    out = residual_block(x, w1, b1, w2, b2)
    out = jax.block_until_ready(out)

    ref = residual_block_ref(x, w1, b1, w2, b2)
    assert out.shape == (N, C, H, W)
    err = float(jnp.max(jnp.abs(out - ref)))
    assert jnp.allclose(out, ref, atol=1e-4, rtol=1e-4), err
    print("KERNEL_OK")
</pallas_src>

<mosaic_0001>
module attributes {stable_mosaic.version = 11 : i64} {
  func.func @kernel(%arg0: i32, %arg1: memref<2x4x256xf32, #tpu.memory_space<vmem>>, %arg2: memref<4x36xf32, #tpu.memory_space<vmem>>, %arg3: memref<4x36xf32, #tpu.memory_space<vmem>>, %arg4: memref<2x4x256xf32, #tpu.memory_space<vmem>>) attributes {dimension_semantics = [#tpu.dimension_semantics<parallel>], iteration_bounds = array<i64: 1>, scalar_prefetch = 0 : i64, scratch_operands = 0 : i64, tpu.core_type = #tpu.core_type<tc>, window_params = [{transform_indices = @transform_0, window_bounds = array<i64: 2, 4, 256>}, {pipeline_mode = #tpu.pipeline_mode<synchronous>, transform_indices = @transform_1, window_bounds = array<i64: 4, 36>}, {pipeline_mode = #tpu.pipeline_mode<synchronous>, transform_indices = @transform_2, window_bounds = array<i64: 4, 36>}, {transform_indices = @transform_3, window_bounds = array<i64: 2, 4, 256>}]} {
    %c0 = arith.constant 0 : index
    %c0_0 = arith.constant 0 : index
    %c0_1 = arith.constant 0 : index
    %0 = vector.load %arg1[%c0, %c0_0, %c0_1] : memref<2x4x256xf32, #tpu.memory_space<vmem>>, vector<2x4x256xf32>
    %1 = tpu.iota {dimensions = array<i32: 2>} : vector<1x1x256xi32>
    %c16_i32 = arith.constant 16 : i32
    %c0_i32 = arith.constant 0 : i32
    %2 = arith.cmpi eq, %c16_i32, %c0_i32 : i32
    %c1_i32 = arith.constant 1 : i32
    %3 = arith.select %2, %c1_i32, %c16_i32 : i32
    %4 = vector.broadcast %3 : i32 to vector<1x1x256xi32>
    %5 = arith.remsi %1, %4 : vector<1x1x256xi32>
    %c0_i32_2 = arith.constant 0 : i32
    %6 = vector.broadcast %c0_i32_2 : i32 to vector<1x1x256xi32>
    %7 = arith.cmpi ne, %5, %6 : vector<1x1x256xi32>
    %c0_i32_3 = arith.constant 0 : i32
    %8 = vector.broadcast %c0_i32_3 : i32 to vector<1x1x256xi32>
    %9 = arith.cmpi slt, %5, %8 : vector<1x1x256xi32>
    %c0_i32_4 = arith.constant 0 : i32
    %10 = arith.cmpi slt, %3, %c0_i32_4 : i32
    %11 = vector.broadcast %10 : i1 to vector<1x1x256xi1>
    %12 = vector.broadcast %11 : vector<1x1x256xi1> to vector<1x1x256xi1>
    %13 = arith.xori %9, %12 : vector<1x1x256xi1>
    %14 = arith.andi %13, %7 : vector<1x1x256xi1>
    %15 = vector.broadcast %3 : i32 to vector<1x1x256xi32>
    %16 = arith.addi %5, %15 : vector<1x1x256xi32>
    %17 = arith.select %14, %16, %5 : vector<1x1x256xi1>, vector<1x1x256xi32>
    %c0_i32_5 = arith.constant 0 : i32
    %18 = vector.broadcast %c0_i32_5 : i32 to vector<1x1x256xi32>
    %19 = arith.cmpi eq, %17, %18 : vector<1x1x256xi32>
    %c15_i32 = arith.constant 15 : i32
    %20 = vector.broadcast %c15_i32 : i32 to vector<1x1x256xi32>
    %21 = arith.cmpi eq, %17, %20 : vector<1x1x256xi32>
    %c16_i32_6 = arith.constant 16 : i32
    %22 = vector.broadcast %c16_i32_6 : i32 to vector<1x1x256xi32>
    %23 = arith.cmpi slt, %1, %22 : vector<1x1x256xi32>
    %c240_i32 = arith.constant 240 : i32
    %24 = vector.broadcast %c240_i32 : i32 to vector<1x1x256xi32>
    %25 = arith.cmpi sge, %1, %24 : vector<1x1x256xi32>
    %c0_7 = arith.constant 0 : index
    %c0_8 = arith.constant 0 : index
    %26 = vector.load %arg2[%c0_7, %c0_8] : memref<4x36xf32, #tpu.memory_space<vmem>>, vector<4x36xf32>
    %c16_i32_9 = arith.constant 16 : i32
    %27 = tpu.dynamic_rotate %0 by %c16_i32_9 dim 2 : vector<2x4x256xf32>, i32 -> vector<2x4x256xf32>
    %c240_i32_10 = arith.constant 240 : i32
    %28 = tpu.dynamic_rotate %0 by %c240_i32_10 dim 2 : vector<2x4x256xf32>, i32 -> vector<2x4x256xf32>
    %29 = vector.shape_cast %23 : vector<1x1x256xi1> to vector<1x1x256xi1>
    %30 = vector.broadcast %29 : vector<1x1x256xi1> to vector<2x4x256xi1>
    %31 = arith.select %30, %28, %27 : vector<2x4x256xi1>, vector<2x4x256xf32>
    %32 = vector.shape_cast %25 : vector<1x1x256xi1> to vector<1x1x256xi1>
    %33 = vector.broadcast %32 : vector<1x1x256xi1> to vector<2x4x256xi1>
    %34 = arith.select %33, %27, %28 : vector<2x4x256xi1>, vector<2x4x256xf32>
    %c1_i32_11 = arith.constant 1 : i32
    %35 = tpu.dynamic_rotate %31 by %c1_i32_11 dim 2 : vector<2x4x256xf32>, i32 -> vector<2x4x256xf32>
    %c255_i32 = arith.constant 255 : i32
    %36 = tpu.dynamic_rotate %31 by %c255_i32 dim 2 : vector<2x4x256xf32>, i32 -> vector<2x4x256xf32>
    %37 = vector.shape_cast %19 : vector<1x1x256xi1> to vector<1x1x256xi1>
    %38 = vector.broadcast %37 : vector<1x1x256xi1> to vector<2x4x256xi1>
    %39 = arith.select %38, %36, %35 : vector<2x4x256xi1>, vector<2x4x256xf32>
    %40 = vector.shape_cast %21 : vector<1x1x256xi1> to vector<1x1x256xi1>
    %41 = vector.broadcast %40 : vector<1x1x256xi1> to vector<2x4x256xi1>
    %42 = arith.select %41, %35, %36 : vector<2x4x256xi1>, vector<2x4x256xf32>
    %c1_i32_12 = arith.constant 1 : i32
    %43 = tpu.dynamic_rotate %0 by %c1_i32_12 dim 2 : vector<2x4x256xf32>, i32 -> vector<2x4x256xf32>
    %c255_i32_13 = arith.constant 255 : i32
    %44 = tpu.dynamic_rotate %0 by %c255_i32_13 dim 2 : vector<2x4x256xf32>, i32 -> vector<2x4x256xf32>
    %45 = vector.shape_cast %19 : vector<1x1x256xi1> to vector<1x1x256xi1>
    %46 = vector.broadcast %45 : vector<1x1x256xi1> to vector<2x4x256xi1>
    %47 = arith.select %46, %44, %43 : vector<2x4x256xi1>, vector<2x4x256xf32>
    %48 = vector.shape_cast %21 : vector<1x1x256xi1> to vector<1x1x256xi1>
    %49 = vector.broadcast %48 : vector<1x1x256xi1> to vector<2x4x256xi1>
    %50 = arith.select %49, %43, %44 : vector<2x4x256xi1>, vector<2x4x256xf32>
    %c1_i32_14 = arith.constant 1 : i32
    %51 = tpu.dynamic_rotate %34 by %c1_i32_14 dim 2 : vector<2x4x256xf32>, i32 -> vector<2x4x256xf32>
    %c255_i32_15 = arith.constant 255 : i32
    %52 = tpu.dynamic_rotate %34 by %c255_i32_15 dim 2 : vector<2x4x256xf32>, i32 -> vector<2x4x256xf32>
    %53 = vector.shape_cast %19 : vector<1x1x256xi1> to vector<1x1x256xi1>
    %54 = vector.broadcast %53 : vector<1x1x256xi1> to vector<2x4x256xi1>
    %55 = arith.select %54, %52, %51 : vector<2x4x256xi1>, vector<2x4x256xf32>
    %56 = vector.shape_cast %21 : vector<1x1x256xi1> to vector<1x1x256xi1>
    %57 = vector.broadcast %56 : vector<1x1x256xi1> to vector<2x4x256xi1>
    %58 = arith.select %57, %51, %52 : vector<2x4x256xi1>, vector<2x4x256xf32>
    %59 = vector.extract_strided_slice %26 {offsets = [0, 0], sizes = [4, 1], strides = [1, 1]} : vector<4x36xf32> to vector<4x1xf32>
    %60 = vector.shape_cast %59 : vector<4x1xf32> to vector<1x4x1xf32>
    %61 = vector.extract_strided_slice %39 {offsets = [0, 0, 0], sizes = [2, 1, 256], strides = [1, 1, 1]} : vector<2x4x256xf32> to vector<2x1x256xf32>
    %62 = vector.broadcast %60 : vector<1x4x1xf32> to vector<2x4x256xf32>
    %63 = vector.broadcast %61 : vector<2x1x256xf32> to vector<2x4x256xf32>
    %64 = arith.mulf %62, %63 : vector<2x4x256xf32>
    %65 = vector.extract_strided_slice %26 {offsets = [0, 1], sizes = [4, 1], strides = [1, 1]} : vector<4x36xf32> to vector<4x1xf32>
    %66 = vector.shape_cast %65 : vector<4x1xf32> to vector<1x4x1xf32>
    %67 = vector.extract_strided_slice %39 {offsets = [0, 1, 0], sizes = [2, 1, 256], strides = [1, 1, 1]} : vector<2x4x256xf32> to vector<2x1x256xf32>
    %68 = vector.broadcast %66 : vector<1x4x1xf32> to vector<2x4x256xf32>
    %69 = vector.broadcast %67 : vector<2x1x256xf32> to vector<2x4x256xf32>
    %70 = arith.mulf %68, %69 : vector<2x4x256xf32>
    %71 = arith.addf %64, %70 : vector<2x4x256xf32>
    %72 = vector.extract_strided_slice %26 {offsets = [0, 2], sizes = [4, 1], strides = [1, 1]} : vector<4x36xf32> to vector<4x1xf32>
    %73 = vector.shape_cast %72 : vector<4x1xf32> to vector<1x4x1xf32>
    %74 = vector.extract_strided_slice %39 {offsets = [0, 2, 0], sizes = [2, 1, 256], strides = [1, 1, 1]} : vector<2x4x256xf32> to vector<2x1x256xf32>
    %75 = vector.broadcast %73 : vector<1x4x1xf32> to vector<2x4x256xf32>
    %76 = vector.broadcast %74 : vector<2x1x256xf32> to vector<2x4x256xf32>
    %77 = arith.mulf %75, %76 : vector<2x4x256xf32>
    %78 = arith.addf %71, %77 : vector<2x4x256xf32>
    %79 = vector.extract_strided_slice %26 {offsets = [0, 3], sizes = [4, 1], strides = [1, 1]} : vector<4x36xf32> to vector<4x1xf32>
    %80 = vector.shape_cast %79 : vector<4x1xf32> to vector<1x4x1xf32>
    %81 = vector.extract_strided_slice %39 {offsets = [0, 3, 0], sizes = [2, 1, 256], strides = [1, 1, 1]} : vector<2x4x256xf32> to vector<2x1x256xf32>
    %82 = vector.broadcast %80 : vector<1x4x1xf32> to vector<2x4x256xf32>
    %83 = vector.broadcast %81 : vector<2x1x256xf32> to vector<2x4x256xf32>
    %84 = arith.mulf %82, %83 : vector<2x4x256xf32>
    %85 = arith.addf %78, %84 : vector<2x4x256xf32>
    %86 = vector.extract_strided_slice %26 {offsets = [0, 4], sizes = [4, 1], strides = [1, 1]} : vector<4x36xf32> to vector<4x1xf32>
    %87 = vector.shape_cast %86 : vector<4x1xf32> to vector<1x4x1xf32>
    %88 = vector.extract_strided_slice %31 {offsets = [0, 0, 0], sizes = [2, 1, 256], strides = [1, 1, 1]} : vector<2x4x256xf32> to vector<2x1x256xf32>
    %89 = vector.broadcast %87 : vector<1x4x1xf32> to vector<2x4x256xf32>
    %90 = vector.broadcast %88 : vector<2x1x256xf32> to vector<2x4x256xf32>
    %91 = arith.mulf %89, %90 : vector<2x4x256xf32>
    %92 = arith.addf %85, %91 : vector<2x4x256xf32>
    %93 = vector.extract_strided_slice %26 {offsets = [0, 5], sizes = [4, 1], strides = [1, 1]} : vector<4x36xf32> to vector<4x1xf32>
    %94 = vector.shape_cast %93 : vector<4x1xf32> to vector<1x4x1xf32>
    %95 = vector.extract_strided_slice %31 {offsets = [0, 1, 0], sizes = [2, 1, 256], strides = [1, 1, 1]} : vector<2x4x256xf32> to vector<2x1x256xf32>
    %96 = vector.broadcast %94 : vector<1x4x1xf32> to vector<2x4x256xf32>
    %97 = vector.broadcast %95 : vector<2x1x256xf32> to vector<2x4x256xf32>
    %98 = arith.mulf %96, %97 : vector<2x4x256xf32>
    %99 = arith.addf %92, %98 : vector<2x4x256xf32>
    %100 = vector.extract_strided_slice %26 {offsets = [0, 6], sizes = [4, 1], strides = [1, 1]} : vector<4x36xf32> to vector<4x1xf32>
    %101 = vector.shape_cast %100 : vector<4x1xf32> to vector<1x4x1xf32>
    %102 = vector.extract_strided_slice %31 {offsets = [0, 2, 0], sizes = [2, 1, 256], strides = [1, 1, 1]} : vector<2x4x256xf32> to vector<2x1x256xf32>
    %103 = vector.broadcast %101 : vector<1x4x1xf32> to vector<2x4x256xf32>
    %104 = vector.broadcast %102 : vector<2x1x256xf32> to vector<2x4x256xf32>
    %105 = arith.mulf %103, %104 : vector<2x4x256xf32>
    %106 = arith.addf %99, %105 : vector<2x4x256xf32>
    %107 = vector.extract_strided_slice %26 {offsets = [0, 7], sizes = [4, 1], strides = [1, 1]} : vector<4x36xf32> to vector<4x1xf32>
    %108 = vector.shape_cast %107 : vector<4x1xf32> to vector<1x4x1xf32>
    %109 = vector.extract_strided_slice %31 {offsets = [0, 3, 0], sizes = [2, 1, 256], strides = [1, 1, 1]} : vector<2x4x256xf32> to vector<2x1x256xf32>
    %110 = vector.broadcast %108 : vector<1x4x1xf32> to vector<2x4x256xf32>
    %111 = vector.broadcast %109 : vector<2x1x256xf32> to vector<2x4x256xf32>
    %112 = arith.mulf %110, %111 : vector<2x4x256xf32>
    %113 = arith.addf %106, %112 : vector<2x4x256xf32>
    %114 = vector.extract_strided_slice %26 {offsets = [0, 8], sizes = [4, 1], strides = [1, 1]} : vector<4x36xf32> to vector<4x1xf32>
    %115 = vector.shape_cast %114 : vector<4x1xf32> to vector<1x4x1xf32>
    %116 = vector.extract_strided_slice %42 {offsets = [0, 0, 0], sizes = [2, 1, 256], strides = [1, 1, 1]} : vector<2x4x256xf32> to vector<2x1x256xf32>
    %117 = vector.broadcast %115 : vector<1x4x1xf32> to vector<2x4x256xf32>
    %118 = vector.broadcast %116 : vector<2x1x256xf32> to vector<2x4x256xf32>
    %119 = arith.mulf %117, %118 : vector<2x4x256xf32>
    %120 = arith.addf %113, %119 : vector<2x4x256xf32>
    %121 = vector.extract_strided_slice %26 {offsets = [0, 9], sizes = [4, 1], strides = [1, 1]} : vector<4x36xf32> to vector<4x1xf32>
    %122 = vector.shape_cast %121 : vector<4x1xf32> to vector<1x4x1xf32>
    %123 = vector.extract_strided_slice %42 {offsets = [0, 1, 0], sizes = [2, 1, 256], strides = [1, 1, 1]} : vector<2x4x256xf32> to vector<2x1x256xf32>
    %124 = vector.broadcast %122 : vector<1x4x1xf32> to vector<2x4x256xf32>
    %125 = vector.broadcast %123 : vector<2x1x256xf32> to vector<2x4x256xf32>
    %126 = arith.mulf %124, %125 : vector<2x4x256xf32>
    %127 = arith.addf %120, %126 : vector<2x4x256xf32>
    %128 = vector.extract_strided_slice %26 {offsets = [0, 10], sizes = [4, 1], strides = [1, 1]} : vector<4x36xf32> to vector<4x1xf32>
    %129 = vector.shape_cast %128 : vector<4x1xf32> to vector<1x4x1xf32>
    %130 = vector.extract_strided_slice %42 {offsets = [0, 2, 0], sizes = [2, 1, 256], strides = [1, 1, 1]} : vector<2x4x256xf32> to vector<2x1x256xf32>
    %131 = vector.broadcast %129 : vector<1x4x1xf32> to vector<2x4x256xf32>
    %132 = vector.broadcast %130 : vector<2x1x256xf32> to vector<2x4x256xf32>
    %133 = arith.mulf %131, %132 : vector<2x4x256xf32>
    %134 = arith.addf %127, %133 : vector<2x4x256xf32>
    %135 = vector.extract_strided_slice %26 {offsets = [0, 11], sizes = [4, 1], strides = [1, 1]} : vector<4x36xf32> to vector<4x1xf32>
    %136 = vector.shape_cast %135 : vector<4x1xf32> to vector<1x4x1xf32>
    %137 = vector.extract_strided_slice %42 {offsets = [0, 3, 0], sizes = [2, 1, 256], strides = [1, 1, 1]} : vector<2x4x256xf32> to vector<2x1x256xf32>
    %138 = vector.broadcast %136 : vector<1x4x1xf32> to vector<2x4x256xf32>
    %139 = vector.broadcast %137 : vector<2x1x256xf32> to vector<2x4x256xf32>
    %140 = arith.mulf %138, %139 : vector<2x4x256xf32>
    %141 = arith.addf %134, %140 : vector<2x4x256xf32>
    %142 = vector.extract_strided_slice %26 {offsets = [0, 12], sizes = [4, 1], strides = [1, 1]} : vector<4x36xf32> to vector<4x1xf32>
    %143 = vector.shape_cast %142 : vector<4x1xf32> to vector<1x4x1xf32>
    %144 = vector.extract_strided_slice %47 {offsets = [0, 0, 0], sizes = [2, 1, 256], strides = [1, 1, 1]} : vector<2x4x256xf32> to vector<2x1x256xf32>
    %145 = vector.broadcast %143 : vector<1x4x1xf32> to vector<2x4x256xf32>
    %146 = vector.broadcast %144 : vector<2x1x256xf32> to vector<2x4x256xf32>
    %147 = arith.mulf %145, %146 : vector<2x4x256xf32>
    %148 = arith.addf %141, %147 : vector<2x4x256xf32>
    %149 = vector.extract_strided_slice %26 {offsets = [0, 13], sizes = [4, 1], strides = [1, 1]} : vector<4x36xf32> to vector<4x1xf32>
    %150 = vector.shape_cast %149 : vector<4x1xf32> to vector<1x4x1xf32>
    %151 = vector.extract_strided_slice %47 {offsets = [0, 1, 0], sizes = [2, 1, 256], strides = [1, 1, 1]} : vector<2x4x256xf32> to vector<2x1x256xf32>
    %152 = vector.broadcast %150 : vector<1x4x1xf32> to vector<2x4x256xf32>
    %153 = vector.broadcast %151 : vector<2x1x256xf32> to vector<2x4x256xf32>
    %154 = arith.mulf %152, %153 : vector<2x4x256xf32>
    %155 = arith.addf %148, %154 : vector<2x4x256xf32>
    %156 = vector.extract_strided_slice %26 {offsets = [0, 14], sizes = [4, 1], strides = [1, 1]} : vector<4x36xf32> to vector<4x1xf32>
    %157 = vector.shape_cast %156 : vector<4x1xf32> to vector<1x4x1xf32>
    %158 = vector.extract_strided_slice %47 {offsets = [0, 2, 0], sizes = [2, 1, 256], strides = [1, 1, 1]} : vector<2x4x256xf32> to vector<2x1x256xf32>
    %159 = vector.broadcast %157 : vector<1x4x1xf32> to vector<2x4x256xf32>
    %160 = vector.broadcast %158 : vector<2x1x256xf32> to vector<2x4x256xf32>
    %161 = arith.mulf %159, %160 : vector<2x4x256xf32>
    %162 = arith.addf %155, %161 : vector<2x4x256xf32>
    %163 = vector.extract_strided_slice %26 {offsets = [0, 15], sizes = [4, 1], strides = [1, 1]} : vector<4x36xf32> to vector<4x1xf32>
    %164 = vector.shape_cast %163 : vector<4x1xf32> to vector<1x4x1xf32>
    %165 = vector.extract_strided_slice %47 {offsets = [0, 3, 0], sizes = [2, 1, 256], strides = [1, 1, 1]} : vector<2x4x256xf32> to vector<2x1x256xf32>
    %166 = vector.broadcast %164 : vector<1x4x1xf32> to vector<2x4x256xf32>
    %167 = vector.broadcast %165 : vector<2x1x256xf32> to vector<2x4x256xf32>
    %168 = arith.mulf %166, %167 : vector<2x4x256xf32>
    %169 = arith.addf %162, %168 : vector<2x4x256xf32>
    %170 = vector.extract_strided_slice %26 {offsets = [0, 16], sizes = [4, 1], strides = [1, 1]} : vector<4x36xf32> to vector<4x1xf32>
    %171 = vector.shape_cast %170 : vector<4x1xf32> to vector<1x4x1xf32>
    %172 = vector.extract_strided_slice %0 {offsets = [0, 0, 0], sizes = [2, 1, 256], strides = [1, 1, 1]} : vector<2x4x256xf32> to vector<2x1x256xf32>
    %173 = vector.broadcast %171 : vector<1x4x1xf32> to vector<2x4x256xf32>
    %174 = vector.broadcast %172 : vector<2x1x256xf32> to vector<2x4x256xf32>
    %175 = arith.mulf %173, %174 : vector<2x4x256xf32>
    %176 = arith.addf %169, %175 : vector<2x4x256xf32>
    %177 = vector.extract_strided_slice %26 {offsets = [0, 17], sizes = [4, 1], strides = [1, 1]} : vector<4x36xf32> to vector<4x1xf32>
    %178 = vector.shape_cast %177 : vector<4x1xf32> to vector<1x4x1xf32>
    %179 = vector.extract_strided_slice %0 {offsets = [0, 1, 0], sizes = [2, 1, 256], strides = [1, 1, 1]} : vector<2x4x256xf32> to vector<2x1x256xf32>
    %180 = vector.broadcast %178 : vector<1x4x1xf32> to vector<2x4x256xf32>
    %181 = vector.broadcast %179 : vector<2x1x256xf32> to vector<2x4x256xf32>
    %182 = arith.mulf %180, %181 : vector<2x4x256xf32>
    %183 = arith.addf %176, %182 : vector<2x4x256xf32>
    %184 = vector.extract_strided_slice %26 {offsets = [0, 18], sizes = [4, 1], strides = [1, 1]} : vector<4x36xf32> to vector<4x1xf32>
    %185 = vector.shape_cast %184 : vector<4x1xf32> to vector<1x4x1xf32>
    %186 = vector.extract_strided_slice %0 {offsets = [0, 2, 0], sizes = [2, 1, 256], strides = [1, 1, 1]} : vector<2x4x256xf32> to vector<2x1x256xf32>
    %187 = vector.broadcast %185 : vector<1x4x1xf32> to vector<2x4x256xf32>
    %188 = vector.broadcast %186 : vector<2x1x256xf32> to vector<2x4x256xf32>
    %189 = arith.mulf %187, %188 : vector<2x4x256xf32>
    %190 = arith.addf %183, %189 : vector<2x4x256xf32>
    %191 = vector.extract_strided_slice %26 {offsets = [0, 19], sizes = [4, 1], strides = [1, 1]} : vector<4x36xf32> to vector<4x1xf32>
    %192 = vector.shape_cast %191 : vector<4x1xf32> to vector<1x4x1xf32>
    %193 = vector.extract_strided_slice %0 {offsets = [0, 3, 0], sizes = [2, 1, 256], strides = [1, 1, 1]} : vector<2x4x256xf32> to vector<2x1x256xf32>
    %194 = vector.broadcast %192 : vector<1x4x1xf32> to vector<2x4x256xf32>
    %195 = vector.broadcast %193 : vector<2x1x256xf32> to vector<2x4x256xf32>
    %196 = arith.mulf %194, %195 : vector<2x4x256xf32>
    %197 = arith.addf %190, %196 : vector<2x4x256xf32>
    %198 = vector.extract_strided_slice %26 {offsets = [0, 20], sizes = [4, 1], strides = [1, 1]} : vector<4x36xf32> to vector<4x1xf32>
    %199 = vector.shape_cast %198 : vector<4x1xf32> to vector<1x4x1xf32>
    %200 = vector.extract_strided_slice %50 {offsets = [0, 0, 0], sizes = [2, 1, 256], strides = [1, 1, 1]} : vector<2x4x256xf32> to vector<2x1x256xf32>
    %201 = vector.broadcast %199 : vector<1x4x1xf32> to vector<2x4x256xf32>
    %202 = vector.broadcast %200 : vector<2x1x256xf32> to vector<2x4x256xf32>
    %203 = arith.mulf %201, %202 : vector<2x4x256xf32>
    %204 = arith.addf %197, %203 : vector<2x4x256xf32>
    %205 = vector.extract_strided_slice %26 {offsets = [0, 21], sizes = [4, 1], strides = [1, 1]} : vector<4x36xf32> to vector<4x1xf32>
    %206 = vector.shape_cast %205 : vector<4x1xf32> to vector<1x4x1xf32>
    %207 = vector.extract_strided_slice %50 {offsets = [0, 1, 0], sizes = [2, 1, 256], strides = [1, 1, 1]} : vector<2x4x256xf32> to vector<2x1x256xf32>
    %208 = vector.broadcast %206 : vector<1x4x1xf32> to vector<2x4x256xf32>
    %209 = vector.broadcast %207 : vector<2x1x256xf32> to vector<2x4x256xf32>
    %210 = arith.mulf %208, %209 : vector<2x4x256xf32>
    %211 = arith.addf %204, %210 : vector<2x4x256xf32>
    %212 = vector.extract_strided_slice %26 {offsets = [0, 22], sizes = [4, 1], strides = [1, 1]} : vector<4x36xf32> to vector<4x1xf32>
    %213 = vector.shape_cast %212 : vector<4x1xf32> to vector<1x4x1xf32>
    %214 = vector.extract_strided_slice %50 {offsets = [0, 2, 0], sizes = [2, 1, 256], strides = [1, 1, 1]} : vector<2x4x256xf32> to vector<2x1x256xf32>
    %215 = vector.broadcast %213 : vector<1x4x1xf32> to vector<2x4x256xf32>
    %216 = vector.broadcast %214 : vector<2x1x256xf32> to vector<2x4x256xf32>
    %217 = arith.mulf %215, %216 : vector<2x4x256xf32>
    %218 = arith.addf %211, %217 : vector<2x4x256xf32>
    %219 = vector.extract_strided_slice %26 {offsets = [0, 23], sizes = [4, 1], strides = [1, 1]} : vector<4x36xf32> to vector<4x1xf32>
    %220 = vector.shape_cast %219 : vector<4x1xf32> to vector<1x4x1xf32>
    %221 = vector.extract_strided_slice %50 {offsets = [0, 3, 0], sizes = [2, 1, 256], strides = [1, 1, 1]} : vector<2x4x256xf32> to vector<2x1x256xf32>
    %222 = vector.broadcast %220 : vector<1x4x1xf32> to vector<2x4x256xf32>
    %223 = vector.broadcast %221 : vector<2x1x256xf32> to vector<2x4x256xf32>
    %224 = arith.mulf %222, %223 : vector<2x4x256xf32>
    %225 = arith.addf %218, %224 : vector<2x4x256xf32>
    %226 = vector.extract_strided_slice %26 {offsets = [0, 24], sizes = [4, 1], strides = [1, 1]} : vector<4x36xf32> to vector<4x1xf32>
    %227 = vector.shape_cast %226 : vector<4x1xf32> to vector<1x4x1xf32>
    %228 = vector.extract_strided_slice %55 {offsets = [0, 0, 0], sizes = [2, 1, 256], strides = [1, 1, 1]} : vector<2x4x256xf32> to vector<2x1x256xf32>
    %229 = vector.broadcast %227 : vector<1x4x1xf32> to vector<2x4x256xf32>
    %230 = vector.broadcast %228 : vector<2x1x256xf32> to vector<2x4x256xf32>
    %231 = arith.mulf %229, %230 : vector<2x4x256xf32>
    %232 = arith.addf %225, %231 : vector<2x4x256xf32>
    %233 = vector.extract_strided_slice %26 {offsets = [0, 25], sizes = [4, 1], strides = [1, 1]} : vector<4x36xf32> to vector<4x1xf32>
    %234 = vector.shape_cast %233 : vector<4x1xf32> to vector<1x4x1xf32>
    %235 = vector.extract_strided_slice %55 {offsets = [0, 1, 0], sizes = [2, 1, 256], strides = [1, 1, 1]} : vector<2x4x256xf32> to vector<2x1x256xf32>
    %236 = vector.broadcast %234 : vector<1x4x1xf32> to vector<2x4x256xf32>
    %237 = vector.broadcast %235 : vector<2x1x256xf32> to vector<2x4x256xf32>
    %238 = arith.mulf %236, %237 : vector<2x4x256xf32>
    %239 = arith.addf %232, %238 : vector<2x4x256xf32>
    %240 = vector.extract_strided_slice %26 {offsets = [0, 26], sizes = [4, 1], strides = [1, 1]} : vector<4x36xf32> to vector<4x1xf32>
    %241 = vector.shape_cast %240 : vector<4x1xf32> to vector<1x4x1xf32>
    %242 = vector.extract_strided_slice %55 {offsets = [0, 2, 0], sizes = [2, 1, 256], strides = [1, 1, 1]} : vector<2x4x256xf32> to vector<2x1x256xf32>
    %243 = vector.broadcast %241 : vector<1x4x1xf32> to vector<2x4x256xf32>
    %244 = vector.broadcast %242 : vector<2x1x256xf32> to vector<2x4x256xf32>
    %245 = arith.mulf %243, %244 : vector<2x4x256xf32>
    %246 = arith.addf %239, %245 : vector<2x4x256xf32>
    %247 = vector.extract_strided_slice %26 {offsets = [0, 27], sizes = [4, 1], strides = [1, 1]} : vector<4x36xf32> to vector<4x1xf32>
    %248 = vector.shape_cast %247 : vector<4x1xf32> to vector<1x4x1xf32>
    %249 = vector.extract_strided_slice %55 {offsets = [0, 3, 0], sizes = [2, 1, 256], strides = [1, 1, 1]} : vector<2x4x256xf32> to vector<2x1x256xf32>
    %250 = vector.broadcast %248 : vector<1x4x1xf32> to vector<2x4x256xf32>
    %251 = vector.broadcast %249 : vector<2x1x256xf32> to vector<2x4x256xf32>
    %252 = arith.mulf %250, %251 : vector<2x4x256xf32>
    %253 = arith.addf %246, %252 : vector<2x4x256xf32>
    %254 = vector.extract_strided_slice %26 {offsets = [0, 28], sizes = [4, 1], strides = [1, 1]} : vector<4x36xf32> to vector<4x1xf32>
    %255 = vector.shape_cast %254 : vector<4x1xf32> to vector<1x4x1xf32>
    %256 = vector.extract_strided_slice %34 {offsets = [0, 0, 0], sizes = [2, 1, 256], strides = [1, 1, 1]} : vector<2x4x256xf32> to vector<2x1x256xf32>
    %257 = vector.broadcast %255 : vector<1x4x1xf32> to vector<2x4x256xf32>
    %258 = vector.broadcast %256 : vector<2x1x256xf32> to vector<2x4x256xf32>
    %259 = arith.mulf %257, %258 : vector<2x4x256xf32>
    %260 = arith.addf %253, %259 : vector<2x4x256xf32>
    %261 = vector.extract_strided_slice %26 {offsets = [0, 29], sizes = [4, 1], strides = [1, 1]} : vector<4x36xf32> to vector<4x1xf32>
    %262 = vector.shape_cast %261 : vector<4x1xf32> to vector<1x4x1xf32>
    %263 = vector.extract_strided_slice %34 {offsets = [0, 1, 0], sizes = [2, 1, 256], strides = [1, 1, 1]} : vector<2x4x256xf32> to vector<2x1x256xf32>
    %264 = vector.broadcast %262 : vector<1x4x1xf32> to vector<2x4x256xf32>
    %265 = vector.broadcast %263 : vector<2x1x256xf32> to vector<2x4x256xf32>
    %266 = arith.mulf %264, %265 : vector<2x4x256xf32>
    %267 = arith.addf %260, %266 : vector<2x4x256xf32>
    %268 = vector.extract_strided_slice %26 {offsets = [0, 30], sizes = [4, 1], strides = [1, 1]} : vector<4x36xf32> to vector<4x1xf32>
    %269 = vector.shape_cast %268 : vector<4x1xf32> to vector<1x4x1xf32>
    %270 = vector.extract_strided_slice %34 {offsets = [0, 2, 0], sizes = [2, 1, 256], strides = [1, 1, 1]} : vector<2x4x256xf32> to vector<2x1x256xf32>
    %271 = vector.broadcast %269 : vector<1x4x1xf32> to vector<2x4x256xf32>
    %272 = vector.broadcast %270 : vector<2x1x256xf32> to vector<2x4x256xf32>
    %273 = arith.mulf %271, %272 : vector<2x4x256xf32>
    %274 = arith.addf %267, %273 : vector<2x4x256xf32>
    %275 = vector.extract_strided_slice %26 {offsets = [0, 31], sizes = [4, 1], strides = [1, 1]} : vector<4x36xf32> to vector<4x1xf32>
    %276 = vector.shape_cast %275 : vector<4x1xf32> to vector<1x4x1xf32>
    %277 = vector.extract_strided_slice %34 {offsets = [0, 3, 0], sizes = [2, 1, 256], strides = [1, 1, 1]} : vector<2x4x256xf32> to vector<2x1x256xf32>
    %278 = vector.broadcast %276 : vector<1x4x1xf32> to vector<2x4x256xf32>
    %279 = vector.broadcast %277 : vector<2x1x256xf32> to vector<2x4x256xf32>
    %280 = arith.mulf %278, %279 : vector<2x4x256xf32>
    %281 = arith.addf %274, %280 : vector<2x4x256xf32>
    %282 = vector.extract_strided_slice %26 {offsets = [0, 32], sizes = [4, 1], strides = [1, 1]} : vector<4x36xf32> to vector<4x1xf32>
    %283 = vector.shape_cast %282 : vector<4x1xf32> to vector<1x4x1xf32>
    %284 = vector.extract_strided_slice %58 {offsets = [0, 0, 0], sizes = [2, 1, 256], strides = [1, 1, 1]} : vector<2x4x256xf32> to vector<2x1x256xf32>
    %285 = vector.broadcast %283 : vector<1x4x1xf32> to vector<2x4x256xf32>
    %286 = vector.broadcast %284 : vector<2x1x256xf32> to vector<2x4x256xf32>
    %287 = arith.mulf %285, %286 : vector<2x4x256xf32>
    %288 = arith.addf %281, %287 : vector<2x4x256xf32>
    %289 = vector.extract_strided_slice %26 {offsets = [0, 33], sizes = [4, 1], strides = [1, 1]} : vector<4x36xf32> to vector<4x1xf32>
    %290 = vector.shape_cast %289 : vector<4x1xf32> to vector<1x4x1xf32>
    %291 = vector.extract_strided_slice %58 {offsets = [0, 1, 0], sizes = [2, 1, 256], strides = [1, 1, 1]} : vector<2x4x256xf32> to vector<2x1x256xf32>
    %292 = vector.broadcast %290 : vector<1x4x1xf32> to vector<2x4x256xf32>
    %293 = vector.broadcast %291 : vector<2x1x256xf32> to vector<2x4x256xf32>
    %294 = arith.mulf %292, %293 : vector<2x4x256xf32>
    %295 = arith.addf %288, %294 : vector<2x4x256xf32>
    %296 = vector.extract_strided_slice %26 {offsets = [0, 34], sizes = [4, 1], strides = [1, 1]} : vector<4x36xf32> to vector<4x1xf32>
    %297 = vector.shape_cast %296 : vector<4x1xf32> to vector<1x4x1xf32>
    %298 = vector.extract_strided_slice %58 {offsets = [0, 2, 0], sizes = [2, 1, 256], strides = [1, 1, 1]} : vector<2x4x256xf32> to vector<2x1x256xf32>
    %299 = vector.broadcast %297 : vector<1x4x1xf32> to vector<2x4x256xf32>
    %300 = vector.broadcast %298 : vector<2x1x256xf32> to vector<2x4x256xf32>
    %301 = arith.mulf %299, %300 : vector<2x4x256xf32>
    %302 = arith.addf %295, %301 : vector<2x4x256xf32>
    %303 = vector.extract_strided_slice %26 {offsets = [0, 35], sizes = [4, 1], strides = [1, 1]} : vector<4x36xf32> to vector<4x1xf32>
    %304 = vector.shape_cast %303 : vector<4x1xf32> to vector<1x4x1xf32>
    %305 = vector.extract_strided_slice %58 {offsets = [0, 3, 0], sizes = [2, 1, 256], strides = [1, 1, 1]} : vector<2x4x256xf32> to vector<2x1x256xf32>
    %306 = vector.broadcast %304 : vector<1x4x1xf32> to vector<2x4x256xf32>
    %307 = vector.broadcast %305 : vector<2x1x256xf32> to vector<2x4x256xf32>
    %308 = arith.mulf %306, %307 : vector<2x4x256xf32>
    %309 = arith.addf %302, %308 : vector<2x4x256xf32>
    %cst = arith.constant dense<0.000000e+00> : vector<2x4xf32>
    %310 = vector.multi_reduction <add>, %309, %cst [2] : vector<2x4x256xf32> to vector<2x4xf32>
    %311 = vector.shape_cast %310 : vector<2x4xf32> to vector<2x4x1xf32>
    %cst_16 = arith.constant 3.906250e-03 : f32
    %312 = vector.broadcast %cst_16 : f32 to vector<2x4x1xf32>
    %313 = arith.mulf %311, %312 : vector<2x4x1xf32>
    %314 = vector.broadcast %313 : vector<2x4x1xf32> to vector<2x4x256xf32>
    %315 = arith.subf %309, %314 : vector<2x4x256xf32>
    %316 = arith.mulf %315, %315 : vector<2x4x256xf32>
    %cst_17 = arith.constant dense<0.000000e+00> : vector<2x4xf32>
    %317 = vector.multi_reduction <add>, %316, %cst_17 [2] : vector<2x4x256xf32> to vector<2x4xf32>
    %318 = vector.shape_cast %317 : vector<2x4xf32> to vector<2x4x1xf32>
    %cst_18 = arith.constant 3.906250e-03 : f32
    %319 = vector.broadcast %cst_18 : f32 to vector<2x4x1xf32>
    %320 = arith.mulf %318, %319 : vector<2x4x1xf32>
    %cst_19 = arith.constant 9.99999974E-6 : f32
    %321 = vector.broadcast %cst_19 : f32 to vector<2x4x1xf32>
    %322 = arith.addf %320, %321 : vector<2x4x1xf32>
    %323 = math.rsqrt %322 : vector<2x4x1xf32>
    %324 = vector.broadcast %323 : vector<2x4x1xf32> to vector<2x4x256xf32>
    %325 = arith.mulf %315, %324 : vector<2x4x256xf32>
    %cst_20 = arith.constant 0.000000e+00 : f32
    %326 = vector.broadcast %cst_20 : f32 to vector<2x4x256xf32>
    %327 = arith.maximumf %325, %326 : vector<2x4x256xf32>
    %c0_21 = arith.constant 0 : index
    %c0_22 = arith.constant 0 : index
    %328 = vector.load %arg3[%c0_21, %c0_22] : memref<4x36xf32, #tpu.memory_space<vmem>>, vector<4x36xf32>
    %c16_i32_23 = arith.constant 16 : i32
    %329 = tpu.dynamic_rotate %327 by %c16_i32_23 dim 2 : vector<2x4x256xf32>, i32 -> vector<2x4x256xf32>
    %c240_i32_24 = arith.constant 240 : i32
    %330 = tpu.dynamic_rotate %327 by %c240_i32_24 dim 2 : vector<2x4x256xf32>, i32 -> vector<2x4x256xf32>
    %331 = vector.shape_cast %23 : vector<1x1x256xi1> to vector<1x1x256xi1>
    %332 = vector.broadcast %331 : vector<1x1x256xi1> to vector<2x4x256xi1>
    %333 = arith.select %332, %330, %329 : vector<2x4x256xi1>, vector<2x4x256xf32>
    %334 = vector.shape_cast %25 : vector<1x1x256xi1> to vector<1x1x256xi1>
    %335 = vector.broadcast %334 : vector<1x1x256xi1> to vector<2x4x256xi1>
    %336 = arith.select %335, %329, %330 : vector<2x4x256xi1>, vector<2x4x256xf32>
    %c1_i32_25 = arith.constant 1 : i32
    %337 = tpu.dynamic_rotate %333 by %c1_i32_25 dim 2 : vector<2x4x256xf32>, i32 -> vector<2x4x256xf32>
    %c255_i32_26 = arith.constant 255 : i32
    %338 = tpu.dynamic_rotate %333 by %c255_i32_26 dim 2 : vector<2x4x256xf32>, i32 -> vector<2x4x256xf32>
    %339 = vector.shape_cast %19 : vector<1x1x256xi1> to vector<1x1x256xi1>
    %340 = vector.broadcast %339 : vector<1x1x256xi1> to vector<2x4x256xi1>
    %341 = arith.select %340, %338, %337 : vector<2x4x256xi1>, vector<2x4x256xf32>
    %342 = vector.shape_cast %21 : vector<1x1x256xi1> to vector<1x1x256xi1>
    %343 = vector.broadcast %342 : vector<1x1x256xi1> to vector<2x4x256xi1>
    %344 = arith.select %343, %337, %338 : vector<2x4x256xi1>, vector<2x4x256xf32>
    %c1_i32_27 = arith.constant 1 : i32
    %345 = tpu.dynamic_rotate %327 by %c1_i32_27 dim 2 : vector<2x4x256xf32>, i32 -> vector<2x4x256xf32>
    %c255_i32_28 = arith.constant 255 : i32
    %346 = tpu.dynamic_rotate %327 by %c255_i32_28 dim 2 : vector<2x4x256xf32>, i32 -> vector<2x4x256xf32>
    %347 = vector.shape_cast %19 : vector<1x1x256xi1> to vector<1x1x256xi1>
    %348 = vector.broadcast %347 : vector<1x1x256xi1> to vector<2x4x256xi1>
    %349 = arith.select %348, %346, %345 : vector<2x4x256xi1>, vector<2x4x256xf32>
    %350 = vector.shape_cast %21 : vector<1x1x256xi1> to vector<1x1x256xi1>
    %351 = vector.broadcast %350 : vector<1x1x256xi1> to vector<2x4x256xi1>
    %352 = arith.select %351, %345, %346 : vector<2x4x256xi1>, vector<2x4x256xf32>
    %c1_i32_29 = arith.constant 1 : i32
    %353 = tpu.dynamic_rotate %336 by %c1_i32_29 dim 2 : vector<2x4x256xf32>, i32 -> vector<2x4x256xf32>
    %c255_i32_30 = arith.constant 255 : i32
    %354 = tpu.dynamic_rotate %336 by %c255_i32_30 dim 2 : vector<2x4x256xf32>, i32 -> vector<2x4x256xf32>
    %355 = vector.shape_cast %19 : vector<1x1x256xi1> to vector<1x1x256xi1>
    %356 = vector.broadcast %355 : vector<1x1x256xi1> to vector<2x4x256xi1>
    %357 = arith.select %356, %354, %353 : vector<2x4x256xi1>, vector<2x4x256xf32>
    %358 = vector.shape_cast %21 : vector<1x1x256xi1> to vector<1x1x256xi1>
    %359 = vector.broadcast %358 : vector<1x1x256xi1> to vector<2x4x256xi1>
    %360 = arith.select %359, %353, %354 : vector<2x4x256xi1>, vector<2x4x256xf32>
    %361 = vector.extract_strided_slice %328 {offsets = [0, 0], sizes = [4, 1], strides = [1, 1]} : vector<4x36xf32> to vector<4x1xf32>
    %362 = vector.shape_cast %361 : vector<4x1xf32> to vector<1x4x1xf32>
    %363 = vector.extract_strided_slice %341 {offsets = [0, 0, 0], sizes = [2, 1, 256], strides = [1, 1, 1]} : vector<2x4x256xf32> to vector<2x1x256xf32>
    %364 = vector.broadcast %362 : vector<1x4x1xf32> to vector<2x4x256xf32>
    %365 = vector.broadcast %363 : vector<2x1x256xf32> to vector<2x4x256xf32>
    %366 = arith.mulf %364, %365 : vector<2x4x256xf32>
    %367 = vector.extract_strided_slice %328 {offsets = [0, 1], sizes = [4, 1], strides = [1, 1]} : vector<4x36xf32> to vector<4x1xf32>
    %368 = vector.shape_cast %367 : vector<4x1xf32> to vector<1x4x1xf32>
    %369 = vector.extract_strided_slice %341 {offsets = [0, 1, 0], sizes = [2, 1, 256], strides = [1, 1, 1]} : vector<2x4x256xf32> to vector<2x1x256xf32>
    %370 = vector.broadcast %368 : vector<1x4x1xf32> to vector<2x4x256xf32>
    %371 = vector.broadcast %369 : vector<2x1x256xf32> to vector<2x4x256xf32>
    %372 = arith.mulf %370, %371 : vector<2x4x256xf32>
    %373 = arith.addf %366, %372 : vector<2x4x256xf32>
    %374 = vector.extract_strided_slice %328 {offsets = [0, 2], sizes = [4, 1], strides = [1, 1]} : vector<4x36xf32> to vector<4x1xf32>
    %375 = vector.shape_cast %374 : vector<4x1xf32> to vector<1x4x1xf32>
    %376 = vector.extract_strided_slice %341 {offsets = [0, 2, 0], sizes = [2, 1, 256], strides = [1, 1, 1]} : vector<2x4x256xf32> to vector<2x1x256xf32>
    %377 = vector.broadcast %375 : vector<1x4x1xf32> to vector<2x4x256xf32>
    %378 = vector.broadcast %376 : vector<2x1x256xf32> to vector<2x4x256xf32>
    %379 = arith.mulf %377, %378 : vector<2x4x256xf32>
    %380 = arith.addf %373, %379 : vector<2x4x256xf32>
    %381 = vector.extract_strided_slice %328 {offsets = [0, 3], sizes = [4, 1], strides = [1, 1]} : vector<4x36xf32> to vector<4x1xf32>
    %382 = vector.shape_cast %381 : vector<4x1xf32> to vector<1x4x1xf32>
    %383 = vector.extract_strided_slice %341 {offsets = [0, 3, 0], sizes = [2, 1, 256], strides = [1, 1, 1]} : vector<2x4x256xf32> to vector<2x1x256xf32>
    %384 = vector.broadcast %382 : vector<1x4x1xf32> to vector<2x4x256xf32>
    %385 = vector.broadcast %383 : vector<2x1x256xf32> to vector<2x4x256xf32>
    %386 = arith.mulf %384, %385 : vector<2x4x256xf32>
    %387 = arith.addf %380, %386 : vector<2x4x256xf32>
    %388 = vector.extract_strided_slice %328 {offsets = [0, 4], sizes = [4, 1], strides = [1, 1]} : vector<4x36xf32> to vector<4x1xf32>
    %389 = vector.shape_cast %388 : vector<4x1xf32> to vector<1x4x1xf32>
    %390 = vector.extract_strided_slice %333 {offsets = [0, 0, 0], sizes = [2, 1, 256], strides = [1, 1, 1]} : vector<2x4x256xf32> to vector<2x1x256xf32>
    %391 = vector.broadcast %389 : vector<1x4x1xf32> to vector<2x4x256xf32>
    %392 = vector.broadcast %390 : vector<2x1x256xf32> to vector<2x4x256xf32>
    %393 = arith.mulf %391, %392 : vector<2x4x256xf32>
    %394 = arith.addf %387, %393 : vector<2x4x256xf32>
    %395 = vector.extract_strided_slice %328 {offsets = [0, 5], sizes = [4, 1], strides = [1, 1]} : vector<4x36xf32> to vector<4x1xf32>
    %396 = vector.shape_cast %395 : vector<4x1xf32> to vector<1x4x1xf32>
    %397 = vector.extract_strided_slice %333 {offsets = [0, 1, 0], sizes = [2, 1, 256], strides = [1, 1, 1]} : vector<2x4x256xf32> to vector<2x1x256xf32>
    %398 = vector.broadcast %396 : vector<1x4x1xf32> to vector<2x4x256xf32>
    %399 = vector.broadcast %397 : vector<2x1x256xf32> to vector<2x4x256xf32>
    %400 = arith.mulf %398, %399 : vector<2x4x256xf32>
    %401 = arith.addf %394, %400 : vector<2x4x256xf32>
    %402 = vector.extract_strided_slice %328 {offsets = [0, 6], sizes = [4, 1], strides = [1, 1]} : vector<4x36xf32> to vector<4x1xf32>
    %403 = vector.shape_cast %402 : vector<4x1xf32> to vector<1x4x1xf32>
    %404 = vector.extract_strided_slice %333 {offsets = [0, 2, 0], sizes = [2, 1, 256], strides = [1, 1, 1]} : vector<2x4x256xf32> to vector<2x1x256xf32>
    %405 = vector.broadcast %403 : vector<1x4x1xf32> to vector<2x4x256xf32>
    %406 = vector.broadcast %404 : vector<2x1x256xf32> to vector<2x4x256xf32>
    %407 = arith.mulf %405, %406 : vector<2x4x256xf32>
    %408 = arith.addf %401, %407 : vector<2x4x256xf32>
    %409 = vector.extract_strided_slice %328 {offsets = [0, 7], sizes = [4, 1], strides = [1, 1]} : vector<4x36xf32> to vector<4x1xf32>
    %410 = vector.shape_cast %409 : vector<4x1xf32> to vector<1x4x1xf32>
    %411 = vector.extract_strided_slice %333 {offsets = [0, 3, 0], sizes = [2, 1, 256], strides = [1, 1, 1]} : vector<2x4x256xf32> to vector<2x1x256xf32>
    %412 = vector.broadcast %410 : vector<1x4x1xf32> to vector<2x4x256xf32>
    %413 = vector.broadcast %411 : vector<2x1x256xf32> to vector<2x4x256xf32>
    %414 = arith.mulf %412, %413 : vector<2x4x256xf32>
    %415 = arith.addf %408, %414 : vector<2x4x256xf32>
    %416 = vector.extract_strided_slice %328 {offsets = [0, 8], sizes = [4, 1], strides = [1, 1]} : vector<4x36xf32> to vector<4x1xf32>
    %417 = vector.shape_cast %416 : vector<4x1xf32> to vector<1x4x1xf32>
    %418 = vector.extract_strided_slice %344 {offsets = [0, 0, 0], sizes = [2, 1, 256], strides = [1, 1, 1]} : vector<2x4x256xf32> to vector<2x1x256xf32>
    %419 = vector.broadcast %417 : vector<1x4x1xf32> to vector<2x4x256xf32>
    %420 = vector.broadcast %418 : vector<2x1x256xf32> to vector<2x4x256xf32>
    %421 = arith.mulf %419, %420 : vector<2x4x256xf32>
    %422 = arith.addf %415, %421 : vector<2x4x256xf32>
    %423 = vector.extract_strided_slice %328 {offsets = [0, 9], sizes = [4, 1], strides = [1, 1]} : vector<4x36xf32> to vector<4x1xf32>
    %424 = vector.shape_cast %423 : vector<4x1xf32> to vector<1x4x1xf32>
    %425 = vector.extract_strided_slice %344 {offsets = [0, 1, 0], sizes = [2, 1, 256], strides = [1, 1, 1]} : vector<2x4x256xf32> to vector<2x1x256xf32>
    %426 = vector.broadcast %424 : vector<1x4x1xf32> to vector<2x4x256xf32>
    %427 = vector.broadcast %425 : vector<2x1x256xf32> to vector<2x4x256xf32>
    %428 = arith.mulf %426, %427 : vector<2x4x256xf32>
    %429 = arith.addf %422, %428 : vector<2x4x256xf32>
    %430 = vector.extract_strided_slice %328 {offsets = [0, 10], sizes = [4, 1], strides = [1, 1]} : vector<4x36xf32> to vector<4x1xf32>
    %431 = vector.shape_cast %430 : vector<4x1xf32> to vector<1x4x1xf32>
    %432 = vector.extract_strided_slice %344 {offsets = [0, 2, 0], sizes = [2, 1, 256], strides = [1, 1, 1]} : vector<2x4x256xf32> to vector<2x1x256xf32>
    %433 = vector.broadcast %431 : vector<1x4x1xf32> to vector<2x4x256xf32>
    %434 = vector.broadcast %432 : vector<2x1x256xf32> to vector<2x4x256xf32>
    %435 = arith.mulf %433, %434 : vector<2x4x256xf32>
    %436 = arith.addf %429, %435 : vector<2x4x256xf32>
    %437 = vector.extract_strided_slice %328 {offsets = [0, 11], sizes = [4, 1], strides = [1, 1]} : vector<4x36xf32> to vector<4x1xf32>
    %438 = vector.shape_cast %437 : vector<4x1xf32> to vector<1x4x1xf32>
    %439 = vector.extract_strided_slice %344 {offsets = [0, 3, 0], sizes = [2, 1, 256], strides = [1, 1, 1]} : vector<2x4x256xf32> to vector<2x1x256xf32>
    %440 = vector.broadcast %438 : vector<1x4x1xf32> to vector<2x4x256xf32>
    %441 = vector.broadcast %439 : vector<2x1x256xf32> to vector<2x4x256xf32>
    %442 = arith.mulf %440, %441 : vector<2x4x256xf32>
    %443 = arith.addf %436, %442 : vector<2x4x256xf32>
    %444 = vector.extract_strided_slice %328 {offsets = [0, 12], sizes = [4, 1], strides = [1, 1]} : vector<4x36xf32> to vector<4x1xf32>
    %445 = vector.shape_cast %444 : vector<4x1xf32> to vector<1x4x1xf32>
    %446 = vector.extract_strided_slice %349 {offsets = [0, 0, 0], sizes = [2, 1, 256], strides = [1, 1, 1]} : vector<2x4x256xf32> to vector<2x1x256xf32>
    %447 = vector.broadcast %445 : vector<1x4x1xf32> to vector<2x4x256xf32>
    %448 = vector.broadcast %446 : vector<2x1x256xf32> to vector<2x4x256xf32>
    %449 = arith.mulf %447, %448 : vector<2x4x256xf32>
    %450 = arith.addf %443, %449 : vector<2x4x256xf32>
    %451 = vector.extract_strided_slice %328 {offsets = [0, 13], sizes = [4, 1], strides = [1, 1]} : vector<4x36xf32> to vector<4x1xf32>
    %452 = vector.shape_cast %451 : vector<4x1xf32> to vector<1x4x1xf32>
    %453 = vector.extract_strided_slice %349 {offsets = [0, 1, 0], sizes = [2, 1, 256], strides = [1, 1, 1]} : vector<2x4x256xf32> to vector<2x1x256xf32>
    %454 = vector.broadcast %452 : vector<1x4x1xf32> to vector<2x4x256xf32>
    %455 = vector.broadcast %453 : vector<2x1x256xf32> to vector<2x4x256xf32>
    %456 = arith.mulf %454, %455 : vector<2x4x256xf32>
    %457 = arith.addf %450, %456 : vector<2x4x256xf32>
    %458 = vector.extract_strided_slice %328 {offsets = [0, 14], sizes = [4, 1], strides = [1, 1]} : vector<4x36xf32> to vector<4x1xf32>
    %459 = vector.shape_cast %458 : vector<4x1xf32> to vector<1x4x1xf32>
    %460 = vector.extract_strided_slice %349 {offsets = [0, 2, 0], sizes = [2, 1, 256], strides = [1, 1, 1]} : vector<2x4x256xf32> to vector<2x1x256xf32>
    %461 = vector.broadcast %459 : vector<1x4x1xf32> to vector<2x4x256xf32>
    %462 = vector.broadcast %460 : vector<2x1x256xf32> to vector<2x4x256xf32>
    %463 = arith.mulf %461, %462 : vector<2x4x256xf32>
    %464 = arith.addf %457, %463 : vector<2x4x256xf32>
    %465 = vector.extract_strided_slice %328 {offsets = [0, 15], sizes = [4, 1], strides = [1, 1]} : vector<4x36xf32> to vector<4x1xf32>
    %466 = vector.shape_cast %465 : vector<4x1xf32> to vector<1x4x1xf32>
    %467 = vector.extract_strided_slice %349 {offsets = [0, 3, 0], sizes = [2, 1, 256], strides = [1, 1, 1]} : vector<2x4x256xf32> to vector<2x1x256xf32>
    %468 = vector.broadcast %466 : vector<1x4x1xf32> to vector<2x4x256xf32>
    %469 = vector.broadcast %467 : vector<2x1x256xf32> to vector<2x4x256xf32>
    %470 = arith.mulf %468, %469 : vector<2x4x256xf32>
    %471 = arith.addf %464, %470 : vector<2x4x256xf32>
    %472 = vector.extract_strided_slice %328 {offsets = [0, 16], sizes = [4, 1], strides = [1, 1]} : vector<4x36xf32> to vector<4x1xf32>
    %473 = vector.shape_cast %472 : vector<4x1xf32> to vector<1x4x1xf32>
    %474 = vector.extract_strided_slice %327 {offsets = [0, 0, 0], sizes = [2, 1, 256], strides = [1, 1, 1]} : vector<2x4x256xf32> to vector<2x1x256xf32>
    %475 = vector.broadcast %473 : vector<1x4x1xf32> to vector<2x4x256xf32>
    %476 = vector.broadcast %474 : vector<2x1x256xf32> to vector<2x4x256xf32>
    %477 = arith.mulf %475, %476 : vector<2x4x256xf32>
    %478 = arith.addf %471, %477 : vector<2x4x256xf32>
    %479 = vector.extract_strided_slice %328 {offsets = [0, 17], sizes = [4, 1], strides = [1, 1]} : vector<4x36xf32> to vector<4x1xf32>
    %480 = vector.shape_cast %479 : vector<4x1xf32> to vector<1x4x1xf32>
    %481 = vector.extract_strided_slice %327 {offsets = [0, 1, 0], sizes = [2, 1, 256], strides = [1, 1, 1]} : vector<2x4x256xf32> to vector<2x1x256xf32>
    %482 = vector.broadcast %480 : vector<1x4x1xf32> to vector<2x4x256xf32>
    %483 = vector.broadcast %481 : vector<2x1x256xf32> to vector<2x4x256xf32>
    %484 = arith.mulf %482, %483 : vector<2x4x256xf32>
    %485 = arith.addf %478, %484 : vector<2x4x256xf32>
    %486 = vector.extract_strided_slice %328 {offsets = [0, 18], sizes = [4, 1], strides = [1, 1]} : vector<4x36xf32> to vector<4x1xf32>
    %487 = vector.shape_cast %486 : vector<4x1xf32> to vector<1x4x1xf32>
    %488 = vector.extract_strided_slice %327 {offsets = [0, 2, 0], sizes = [2, 1, 256], strides = [1, 1, 1]} : vector<2x4x256xf32> to vector<2x1x256xf32>
    %489 = vector.broadcast %487 : vector<1x4x1xf32> to vector<2x4x256xf32>
    %490 = vector.broadcast %488 : vector<2x1x256xf32> to vector<2x4x256xf32>
    %491 = arith.mulf %489, %490 : vector<2x4x256xf32>
    %492 = arith.addf %485, %491 : vector<2x4x256xf32>
    %493 = vector.extract_strided_slice %328 {offsets = [0, 19], sizes = [4, 1], strides = [1, 1]} : vector<4x36xf32> to vector<4x1xf32>
    %494 = vector.shape_cast %493 : vector<4x1xf32> to vector<1x4x1xf32>
    %495 = vector.extract_strided_slice %327 {offsets = [0, 3, 0], sizes = [2, 1, 256], strides = [1, 1, 1]} : vector<2x4x256xf32> to vector<2x1x256xf32>
    %496 = vector.broadcast %494 : vector<1x4x1xf32> to vector<2x4x256xf32>
    %497 = vector.broadcast %495 : vector<2x1x256xf32> to vector<2x4x256xf32>
    %498 = arith.mulf %496, %497 : vector<2x4x256xf32>
    %499 = arith.addf %492, %498 : vector<2x4x256xf32>
    %500 = vector.extract_strided_slice %328 {offsets = [0, 20], sizes = [4, 1], strides = [1, 1]} : vector<4x36xf32> to vector<4x1xf32>
    %501 = vector.shape_cast %500 : vector<4x1xf32> to vector<1x4x1xf32>
    %502 = vector.extract_strided_slice %352 {offsets = [0, 0, 0], sizes = [2, 1, 256], strides = [1, 1, 1]} : vector<2x4x256xf32> to vector<2x1x256xf32>
    %503 = vector.broadcast %501 : vector<1x4x1xf32> to vector<2x4x256xf32>
    %504 = vector.broadcast %502 : vector<2x1x256xf32> to vector<2x4x256xf32>
    %505 = arith.mulf %503, %504 : vector<2x4x256xf32>
    %506 = arith.addf %499, %505 : vector<2x4x256xf32>
    %507 = vector.extract_strided_slice %328 {offsets = [0, 21], sizes = [4, 1], strides = [1, 1]} : vector<4x36xf32> to vector<4x1xf32>
    %508 = vector.shape_cast %507 : vector<4x1xf32> to vector<1x4x1xf32>
    %509 = vector.extract_strided_slice %352 {offsets = [0, 1, 0], sizes = [2, 1, 256], strides = [1, 1, 1]} : vector<2x4x256xf32> to vector<2x1x256xf32>
    %510 = vector.broadcast %508 : vector<1x4x1xf32> to vector<2x4x256xf32>
    %511 = vector.broadcast %509 : vector<2x1x256xf32> to vector<2x4x256xf32>
    %512 = arith.mulf %510, %511 : vector<2x4x256xf32>
    %513 = arith.addf %506, %512 : vector<2x4x256xf32>
    %514 = vector.extract_strided_slice %328 {offsets = [0, 22], sizes = [4, 1], strides = [1, 1]} : vector<4x36xf32> to vector<4x1xf32>
    %515 = vector.shape_cast %514 : vector<4x1xf32> to vector<1x4x1xf32>
    %516 = vector.extract_strided_slice %352 {offsets = [0, 2, 0], sizes = [2, 1, 256], strides = [1, 1, 1]} : vector<2x4x256xf32> to vector<2x1x256xf32>
    %517 = vector.broadcast %515 : vector<1x4x1xf32> to vector<2x4x256xf32>
    %518 = vector.broadcast %516 : vector<2x1x256xf32> to vector<2x4x256xf32>
    %519 = arith.mulf %517, %518 : vector<2x4x256xf32>
    %520 = arith.addf %513, %519 : vector<2x4x256xf32>
    %521 = vector.extract_strided_slice %328 {offsets = [0, 23], sizes = [4, 1], strides = [1, 1]} : vector<4x36xf32> to vector<4x1xf32>
    %522 = vector.shape_cast %521 : vector<4x1xf32> to vector<1x4x1xf32>
    %523 = vector.extract_strided_slice %352 {offsets = [0, 3, 0], sizes = [2, 1, 256], strides = [1, 1, 1]} : vector<2x4x256xf32> to vector<2x1x256xf32>
    %524 = vector.broadcast %522 : vector<1x4x1xf32> to vector<2x4x256xf32>
    %525 = vector.broadcast %523 : vector<2x1x256xf32> to vector<2x4x256xf32>
    %526 = arith.mulf %524, %525 : vector<2x4x256xf32>
    %527 = arith.addf %520, %526 : vector<2x4x256xf32>
    %528 = vector.extract_strided_slice %328 {offsets = [0, 24], sizes = [4, 1], strides = [1, 1]} : vector<4x36xf32> to vector<4x1xf32>
    %529 = vector.shape_cast %528 : vector<4x1xf32> to vector<1x4x1xf32>
    %530 = vector.extract_strided_slice %357 {offsets = [0, 0, 0], sizes = [2, 1, 256], strides = [1, 1, 1]} : vector<2x4x256xf32> to vector<2x1x256xf32>
    %531 = vector.broadcast %529 : vector<1x4x1xf32> to vector<2x4x256xf32>
    %532 = vector.broadcast %530 : vector<2x1x256xf32> to vector<2x4x256xf32>
    %533 = arith.mulf %531, %532 : vector<2x4x256xf32>
    %534 = arith.addf %527, %533 : vector<2x4x256xf32>
    %535 = vector.extract_strided_slice %328 {offsets = [0, 25], sizes = [4, 1], strides = [1, 1]} : vector<4x36xf32> to vector<4x1xf32>
    %536 = vector.shape_cast %535 : vector<4x1xf32> to vector<1x4x1xf32>
    %537 = vector.extract_strided_slice %357 {offsets = [0, 1, 0], sizes = [2, 1, 256], strides = [1, 1, 1]} : vector<2x4x256xf32> to vector<2x1x256xf32>
    %538 = vector.broadcast %536 : vector<1x4x1xf32> to vector<2x4x256xf32>
    %539 = vector.broadcast %537 : vector<2x1x256xf32> to vector<2x4x256xf32>
    %540 = arith.mulf %538, %539 : vector<2x4x256xf32>
    %541 = arith.addf %534, %540 : vector<2x4x256xf32>
    %542 = vector.extract_strided_slice %328 {offsets = [0, 26], sizes = [4, 1], strides = [1, 1]} : vector<4x36xf32> to vector<4x1xf32>
    %543 = vector.shape_cast %542 : vector<4x1xf32> to vector<1x4x1xf32>
    %544 = vector.extract_strided_slice %357 {offsets = [0, 2, 0], sizes = [2, 1, 256], strides = [1, 1, 1]} : vector<2x4x256xf32> to vector<2x1x256xf32>
    %545 = vector.broadcast %543 : vector<1x4x1xf32> to vector<2x4x256xf32>
    %546 = vector.broadcast %544 : vector<2x1x256xf32> to vector<2x4x256xf32>
    %547 = arith.mulf %545, %546 : vector<2x4x256xf32>
    %548 = arith.addf %541, %547 : vector<2x4x256xf32>
    %549 = vector.extract_strided_slice %328 {offsets = [0, 27], sizes = [4, 1], strides = [1, 1]} : vector<4x36xf32> to vector<4x1xf32>
    %550 = vector.shape_cast %549 : vector<4x1xf32> to vector<1x4x1xf32>
    %551 = vector.extract_strided_slice %357 {offsets = [0, 3, 0], sizes = [2, 1, 256], strides = [1, 1, 1]} : vector<2x4x256xf32> to vector<2x1x256xf32>
    %552 = vector.broadcast %550 : vector<1x4x1xf32> to vector<2x4x256xf32>
    %553 = vector.broadcast %551 : vector<2x1x256xf32> to vector<2x4x256xf32>
    %554 = arith.mulf %552, %553 : vector<2x4x256xf32>
    %555 = arith.addf %548, %554 : vector<2x4x256xf32>
    %556 = vector.extract_strided_slice %328 {offsets = [0, 28], sizes = [4, 1], strides = [1, 1]} : vector<4x36xf32> to vector<4x1xf32>
    %557 = vector.shape_cast %556 : vector<4x1xf32> to vector<1x4x1xf32>
    %558 = vector.extract_strided_slice %336 {offsets = [0, 0, 0], sizes = [2, 1, 256], strides = [1, 1, 1]} : vector<2x4x256xf32> to vector<2x1x256xf32>
    %559 = vector.broadcast %557 : vector<1x4x1xf32> to vector<2x4x256xf32>
    %560 = vector.broadcast %558 : vector<2x1x256xf32> to vector<2x4x256xf32>
    %561 = arith.mulf %559, %560 : vector<2x4x256xf32>
    %562 = arith.addf %555, %561 : vector<2x4x256xf32>
    %563 = vector.extract_strided_slice %328 {offsets = [0, 29], sizes = [4, 1], strides = [1, 1]} : vector<4x36xf32> to vector<4x1xf32>
    %564 = vector.shape_cast %563 : vector<4x1xf32> to vector<1x4x1xf32>
    %565 = vector.extract_strided_slice %336 {offsets = [0, 1, 0], sizes = [2, 1, 256], strides = [1, 1, 1]} : vector<2x4x256xf32> to vector<2x1x256xf32>
    %566 = vector.broadcast %564 : vector<1x4x1xf32> to vector<2x4x256xf32>
    %567 = vector.broadcast %565 : vector<2x1x256xf32> to vector<2x4x256xf32>
    %568 = arith.mulf %566, %567 : vector<2x4x256xf32>
    %569 = arith.addf %562, %568 : vector<2x4x256xf32>
    %570 = vector.extract_strided_slice %328 {offsets = [0, 30], sizes = [4, 1], strides = [1, 1]} : vector<4x36xf32> to vector<4x1xf32>
    %571 = vector.shape_cast %570 : vector<4x1xf32> to vector<1x4x1xf32>
    %572 = vector.extract_strided_slice %336 {offsets = [0, 2, 0], sizes = [2, 1, 256], strides = [1, 1, 1]} : vector<2x4x256xf32> to vector<2x1x256xf32>
    %573 = vector.broadcast %571 : vector<1x4x1xf32> to vector<2x4x256xf32>
    %574 = vector.broadcast %572 : vector<2x1x256xf32> to vector<2x4x256xf32>
    %575 = arith.mulf %573, %574 : vector<2x4x256xf32>
    %576 = arith.addf %569, %575 : vector<2x4x256xf32>
    %577 = vector.extract_strided_slice %328 {offsets = [0, 31], sizes = [4, 1], strides = [1, 1]} : vector<4x36xf32> to vector<4x1xf32>
    %578 = vector.shape_cast %577 : vector<4x1xf32> to vector<1x4x1xf32>
    %579 = vector.extract_strided_slice %336 {offsets = [0, 3, 0], sizes = [2, 1, 256], strides = [1, 1, 1]} : vector<2x4x256xf32> to vector<2x1x256xf32>
    %580 = vector.broadcast %578 : vector<1x4x1xf32> to vector<2x4x256xf32>
    %581 = vector.broadcast %579 : vector<2x1x256xf32> to vector<2x4x256xf32>
    %582 = arith.mulf %580, %581 : vector<2x4x256xf32>
    %583 = arith.addf %576, %582 : vector<2x4x256xf32>
    %584 = vector.extract_strided_slice %328 {offsets = [0, 32], sizes = [4, 1], strides = [1, 1]} : vector<4x36xf32> to vector<4x1xf32>
    %585 = vector.shape_cast %584 : vector<4x1xf32> to vector<1x4x1xf32>
    %586 = vector.extract_strided_slice %360 {offsets = [0, 0, 0], sizes = [2, 1, 256], strides = [1, 1, 1]} : vector<2x4x256xf32> to vector<2x1x256xf32>
    %587 = vector.broadcast %585 : vector<1x4x1xf32> to vector<2x4x256xf32>
    %588 = vector.broadcast %586 : vector<2x1x256xf32> to vector<2x4x256xf32>
    %589 = arith.mulf %587, %588 : vector<2x4x256xf32>
    %590 = arith.addf %583, %589 : vector<2x4x256xf32>
    %591 = vector.extract_strided_slice %328 {offsets = [0, 33], sizes = [4, 1], strides = [1, 1]} : vector<4x36xf32> to vector<4x1xf32>
    %592 = vector.shape_cast %591 : vector<4x1xf32> to vector<1x4x1xf32>
    %593 = vector.extract_strided_slice %360 {offsets = [0, 1, 0], sizes = [2, 1, 256], strides = [1, 1, 1]} : vector<2x4x256xf32> to vector<2x1x256xf32>
    %594 = vector.broadcast %592 : vector<1x4x1xf32> to vector<2x4x256xf32>
    %595 = vector.broadcast %593 : vector<2x1x256xf32> to vector<2x4x256xf32>
    %596 = arith.mulf %594, %595 : vector<2x4x256xf32>
    %597 = arith.addf %590, %596 : vector<2x4x256xf32>
    %598 = vector.extract_strided_slice %328 {offsets = [0, 34], sizes = [4, 1], strides = [1, 1]} : vector<4x36xf32> to vector<4x1xf32>
    %599 = vector.shape_cast %598 : vector<4x1xf32> to vector<1x4x1xf32>
    %600 = vector.extract_strided_slice %360 {offsets = [0, 2, 0], sizes = [2, 1, 256], strides = [1, 1, 1]} : vector<2x4x256xf32> to vector<2x1x256xf32>
    %601 = vector.broadcast %599 : vector<1x4x1xf32> to vector<2x4x256xf32>
    %602 = vector.broadcast %600 : vector<2x1x256xf32> to vector<2x4x256xf32>
    %603 = arith.mulf %601, %602 : vector<2x4x256xf32>
    %604 = arith.addf %597, %603 : vector<2x4x256xf32>
    %605 = vector.extract_strided_slice %328 {offsets = [0, 35], sizes = [4, 1], strides = [1, 1]} : vector<4x36xf32> to vector<4x1xf32>
    %606 = vector.shape_cast %605 : vector<4x1xf32> to vector<1x4x1xf32>
    %607 = vector.extract_strided_slice %360 {offsets = [0, 3, 0], sizes = [2, 1, 256], strides = [1, 1, 1]} : vector<2x4x256xf32> to vector<2x1x256xf32>
    %608 = vector.broadcast %606 : vector<1x4x1xf32> to vector<2x4x256xf32>
    %609 = vector.broadcast %607 : vector<2x1x256xf32> to vector<2x4x256xf32>
    %610 = arith.mulf %608, %609 : vector<2x4x256xf32>
    %611 = arith.addf %604, %610 : vector<2x4x256xf32>
    %cst_31 = arith.constant dense<0.000000e+00> : vector<2x4xf32>
    %612 = vector.multi_reduction <add>, %611, %cst_31 [2] : vector<2x4x256xf32> to vector<2x4xf32>
    %613 = vector.shape_cast %612 : vector<2x4xf32> to vector<2x4x1xf32>
    %cst_32 = arith.constant 3.906250e-03 : f32
    %614 = vector.broadcast %cst_32 : f32 to vector<2x4x1xf32>
    %615 = arith.mulf %613, %614 : vector<2x4x1xf32>
    %616 = vector.broadcast %615 : vector<2x4x1xf32> to vector<2x4x256xf32>
    %617 = arith.subf %611, %616 : vector<2x4x256xf32>
    %618 = arith.mulf %617, %617 : vector<2x4x256xf32>
    %cst_33 = arith.constant dense<0.000000e+00> : vector<2x4xf32>
    %619 = vector.multi_reduction <add>, %618, %cst_33 [2] : vector<2x4x256xf32> to vector<2x4xf32>
    %620 = vector.shape_cast %619 : vector<2x4xf32> to vector<2x4x1xf32>
    %cst_34 = arith.constant 3.906250e-03 : f32
    %621 = vector.broadcast %cst_34 : f32 to vector<2x4x1xf32>
    %622 = arith.mulf %620, %621 : vector<2x4x1xf32>
    %cst_35 = arith.constant 9.99999974E-6 : f32
    %623 = vector.broadcast %cst_35 : f32 to vector<2x4x1xf32>
    %624 = arith.addf %622, %623 : vector<2x4x1xf32>
    %625 = math.rsqrt %624 : vector<2x4x1xf32>
    %626 = vector.broadcast %625 : vector<2x4x1xf32> to vector<2x4x256xf32>
    %627 = arith.mulf %617, %626 : vector<2x4x256xf32>
    %628 = arith.addf %0, %627 : vector<2x4x256xf32>
    %c0_36 = arith.constant 0 : index
    %c0_37 = arith.constant 0 : index
    %c0_38 = arith.constant 0 : index
    %629 = vector.load %arg4[%c0_36, %c0_37, %c0_38] : memref<2x4x256xf32, #tpu.memory_space<vmem>>, vector<2x4x256xf32>
    tpu.vector_store %arg4[%c0_36, %c0_37, %c0_38], %628 {strides = array<i32>} : memref<2x4x256xf32, #tpu.memory_space<vmem>>, vector<2x4x256xf32>,
    return
  }
  func.func @transform_0(%arg0: i32) -> (i32, i32, i32) {
    %c0_i32 = arith.constant 0 : i32
    %c0_i32_0 = arith.constant 0 : i32
    %c0_i32_1 = arith.constant 0 : i32
    return %arg0, %c0_i32, %c0_i32_0 : i32, i32, i32
  }
  func.func @transform_1(%arg0: i32) -> (i32, i32) {
    %c0_i32 = arith.constant 0 : i32
    %c0_i32_0 = arith.constant 0 : i32
    %c0_i32_1 = arith.constant 0 : i32
    return %c0_i32, %c0_i32_0 : i32, i32
  }
  func.func @transform_2(%arg0: i32) -> (i32, i32) {
    %c0_i32 = arith.constant 0 : i32
    %c0_i32_0 = arith.constant 0 : i32
    %c0_i32_1 = arith.constant 0 : i32
    return %c0_i32, %c0_i32_0 : i32, i32
  }
  func.func @transform_3(%arg0: i32) -> (i32, i32, i32) {
    %c0_i32 = arith.constant 0 : i32
    %c0_i32_0 = arith.constant 0 : i32
    %c0_i32_1 = arith.constant 0 : i32
    return %arg0, %c0_i32, %c0_i32_0 : i32, i32, i32
  }
}

</mosaic_0001>

<llo_original>
// kernel: tpu_custom_call.1
$region0: #{tpu_custom_call.1}
  #allocation0 [shape = 'u32[]', space=smem, size = 0x4, offset = 0x4, fixed_abs, tag = 'smem constant byte address 0x4 - core index']
  #allocation1 [shape = 'u32[144,128]{1,0:T(1,128)}', space=vmem, size = 0x12000, scoped, tag = 'internal scratch']
  %s0 = inlined_call_operand.hbm [shape: f32[2,4,256], index: 0, kind: input, shape index: {}]
  %s1 = inlined_call_operand.hbm [shape: f32[4,36], index: 1, kind: input, shape index: {}]
  %s2 = inlined_call_operand.vmem [shape: f32[4,36], index: 2, kind: input, shape index: {}]
  %s3 = inlined_call_operand.hbm [shape: f32[2,4,256], index: 3, kind: output, shape index: {}]
  %s4 = sld [smem:[#allocation0]]
  $region30: #{tpu_custom_call.1} parent=0
    _
  %s6 = ssub.s32 1, %s4
  %s7 = scalar_select 0, %s6, %s4
  $region1: #{tpu_custom_call.1} parent=0
    #allocation2 [shape = 'u8[8192]{0}', space=vmem, size = 0x2000, scoped, tag = 'input window, operand 0, single buffered']
    #allocation3 [shape = 's32[1]{0}', space=sflag, size = 0x4, scoped, tag = 'scoped memory for tpu_custom_call.1']
    #allocation4 [shape = 's32[1]{0}', space=sflag, size = 0x4, scoped, tag = 'scoped memory for tpu_custom_call.1']
    #allocation5 [shape = 'u8[2048]{0}', space=vmem, size = 0x800, scoped, tag = 'input window, operand 1, single buffered']
    #allocation6 [shape = 's32[1]{0}', space=sflag, size = 0x4, scoped, tag = 'scoped memory for tpu_custom_call.1']
    #allocation7 [shape = 'u8[8192]{0}', space=vmem, size = 0x2000, scoped, tag = 'output window, operand 0, single buffered']
    %8 = vsyncpa [#allocation3], 0
    %9 = vsyncpa [#allocation6], 0
    %10 = vsyncpa [#allocation4], 0
    // Predicated region
    $region2: #{tpu_custom_call.1} parent=1 // pred_check
      _
    $region3: #{tpu_custom_call.1} parent=1 // pred_check_branch
      %12 = sbr.rel (0) target = $region5
    $region4: #{tpu_custom_call.1} parent=1 // pred_region
      %s14 = ssub.s32 256, 256
      %15 = vsyncadd [#allocation3], %s14
      %s16 = sshll.u32 [#allocation2], 4
      %s17 = int_to_ptr.vmem [resolvable:$true] %s16
      %22 = dma.hbm_to_vmem [thread:$0]  %s0, 256, %s17, [#allocation3], 128, 128, 8
    $region5: #{tpu_custom_call.1} parent=1 // pred_fallthru
      _
    // Predicated region
    $region6: #{tpu_custom_call.1} parent=1 // pred_check
      _
    $region7: #{tpu_custom_call.1} parent=1 // pred_check_branch
      %24 = sbr.rel (0) target = $region9
    $region8: #{tpu_custom_call.1} parent=1 // pred_region
      %s26 = ssub.s32 64, 64
      %27 = vsyncadd [#allocation6], %s26
      %s29 = sshll.u32 [#allocation5], 4
      %s30 = int_to_ptr.vmem [resolvable:$true] %s29
      %32 = dma.hbm_to_vmem [thread:$0]  %s1, 64, %s30, [#allocation6]
    $region9: #{tpu_custom_call.1} parent=1 // pred_fallthru
      _
    // Predicated region
    $region10: #{tpu_custom_call.1} parent=1 // pred_check
      _
    $region11: #{tpu_custom_call.1} parent=1 // pred_check_branch
      %34 = sbr.rel (0) target = $region13
    $region12: #{tpu_custom_call.1} parent=1 // pred_region
      _
    $region13: #{tpu_custom_call.1} parent=1 // pred_fallthru
      _
    // Predicated region
    $region14: #{tpu_custom_call.1} parent=1 // pred_check
      _
    $region15: #{tpu_custom_call.1} parent=1 // pred_check_branch
      %36 = sbr.rel (0) target = $region17
    $region16: #{tpu_custom_call.1} parent=1 // pred_region
      %37 = dma.done [#allocation3], 256
    $region17: #{tpu_custom_call.1} parent=1 // pred_fallthru
      _
    // Predicated region
    $region18: #{tpu_custom_call.1} parent=1 // pred_check
      _
    $region19: #{tpu_custom_call.1} parent=1 // pred_check_branch
      %39 = sbr.rel (0) target = $region21
    $region20: #{tpu_custom_call.1} parent=1 // pred_region
      %40 = dma.done [#allocation6], 64
    $region21: #{tpu_custom_call.1} parent=1 // pred_fallthru
      _
    %v41 = vld [vmem:[#allocation2] sm:$0xff]
    %v42 = vld [vmem:[#allocation2 + $0x8] sm:$0xff]
    %v43 = vlaneseq
    %v44 = vand.u32 %v43, 127
    %v45 = vadd.s32 %v44, 128
    %vm46 = vcmp.lt.s32.totalorder %v44, 0
    %v47 = vsub.s32 0, %v44
    %v48 = vsel %vm46, %v47, %v44
    %v49 = vshrl.u32 %v48, 4
    %v50 = vand.u32 %v48, 15
    %v51 = vsub.s32 0, %v50
    %v52 = vsel %vm46, %v51, %v50
    %vm53 = vcmp.lt.s32.totalorder %v45, 0
    %v54 = vsub.s32 0, %v45
    %v55 = vsel %vm53, %v54, %v45
    %v56 = vshrl.u32 %v55, 4
    %v57 = vand.u32 %v55, 15
    %v58 = vsub.s32 0, %v57
    %v59 = vsel %vm53, %v58, %v57
    %vm60 = vcmp.ne.s32.totalorder %v52, 0
    %vm61 = vcmp.ne.s32.totalorder %v59, 0
    %vm62 = vcmp.lt.s32.totalorder %v52, 0
    %vm63 = vcmp.lt.s32.totalorder %v59, 0
    %vm64 = vmand %vm62, %vm60
    %vm65 = vmand %vm63, %vm61
    %v66 = vadd.s32 %v52, 16
    %v67 = vadd.s32 %v59, 16
    %v68 = vsel %vm64, %v66, %v52
    %v69 = vsel %vm65, %v67, %v59
    %vm70 = vcmp.eq.s32.totalorder %v68, 0
    %vm71 = vcmp.eq.s32.totalorder %v69, 0
    %vm72 = vcmp.eq.s32.totalorder %v68, 15
    %vm73 = vcmp.eq.s32.totalorder %v69, 15
    %vm74 = vcmp.lt.s32.totalorder %v44, 16
    %vm75 = vcmp.lt.s32.totalorder %v45, 16
    %vm76 = vcmp.ge.s32.totalorder %v44, 240
    %vm77 = vcmp.ge.s32.totalorder %v45, 240
    %v78 = vld [vmem:[#allocation5] sm:$0xf]
    %v81 = vcombine.high %v41, %v41
    %v82 = vcombine.high %v42, %v42
    %85 = vrot.lane.b32.xlu0 %v41, 16
    %v86 = vpop.permute.xlu0 %85
    %87 = vrot.lane.b32.xlu0 %v42, 16
    %v88 = vpop.permute.xlu0 %87
    %89 = vrot.lane.b32.xlu0 %v81, 16
    %v90 = vpop.permute.xlu0 %89
    %91 = vrot.lane.b32.xlu0 %v82, 16
    %v92 = vpop.permute.xlu0 %91
    %v93 = vsel %vm74, %v86, %v90
    %v94 = vsel %vm74, %v88, %v92
    %v95 = vsel %vm74, %v90, %v86
    %v96 = vsel %vm74, %v92, %v88
    %97 = vrot.lane.b32.xlu0 %v41, 112
    %v98 = vpop.permute.xlu0 %97
    %99 = vrot.lane.b32.xlu0 %v42, 112
    %v100 = vpop.permute.xlu0 %99
    %101 = vrot.lane.b32.xlu0 %v81, 112
    %v102 = vpop.permute.xlu0 %101
    %103 = vrot.lane.b32.xlu0 %v82, 112
    %v104 = vpop.permute.xlu0 %103
    %vm105 = vcmp.lt.s32.totalorder %v44, 112
    %v106 = vsel %vm105, %v98, %v102
    %v107 = vsel %vm105, %v100, %v104
    %v108 = vsel %vm105, %v102, %v98
    %v109 = vsel %vm105, %v104, %v100
    %v110 = vsel %vm74, 1, 0
    %v111 = vsel %vm75, 1, 0
    %vm112 = vcmp.eq.s32.totalorder %v110, 1
    %vm113 = vcmp.eq.s32.totalorder %v111, 1
    %v114 = vsel %vm112, %v106, %v95
    %v115 = vsel %vm113, %v108, %v93
    %v116 = vsel %vm112, %v107, %v96
    %v117 = vsel %vm113, %v109, %v94
    %v118 = vsel %vm76, 1, 0
    %v119 = vsel %vm77, 1, 0
    %vm120 = vcmp.eq.s32.totalorder %v118, 1
    %vm121 = vcmp.eq.s32.totalorder %v119, 1
    %v122 = vsel %vm120, %v95, %v106
    %v123 = vsel %vm121, %v93, %v108
    %v124 = vsel %vm120, %v96, %v107
    %v125 = vsel %vm121, %v94, %v109
    %126 = vrot.lane.b32.xlu0 %v114, 1
    %v127 = vpop.permute.xlu0 %126
    %128 = vrot.lane.b32.xlu0 %v116, 1
    %v129 = vpop.permute.xlu0 %128
    %130 = vrot.lane.b32.xlu0 %v115, 1
    %v131 = vpop.permute.xlu0 %130
    %132 = vrot.lane.b32.xlu0 %v117, 1
    %v133 = vpop.permute.xlu0 %132
    %vm134 = vcmp.lt.s32.totalorder %v44, 1
    %v135 = vsel %vm134, %v127, %v131
    %v136 = vsel %vm134, %v129, %v133
    %v137 = vsel %vm134, %v131, %v127
    %v138 = vsel %vm134, %v133, %v129
    %139 = vrot.lane.b32.xlu0 %v114, 127
    %v140 = vpop.permute.xlu0 %139
    %141 = vrot.lane.b32.xlu0 %v116, 127
    %v142 = vpop.permute.xlu0 %141
    %143 = vrot.lane.b32.xlu0 %v115, 127
    %v144 = vpop.permute.xlu0 %143
    %145 = vrot.lane.b32.xlu0 %v117, 127
    %v146 = vpop.permute.xlu0 %145
    %vm147 = vcmp.lt.s32.totalorder %v44, 127
    %v148 = vsel %vm147, %v140, %v144
    %v149 = vsel %vm147, %v142, %v146
    %v150 = vsel %vm147, %v144, %v140
    %v151 = vsel %vm147, %v146, %v142
    %v152 = vsel %vm70, 1, 0
    %v153 = vsel %vm71, 1, 0
    %vm154 = vcmp.eq.s32.totalorder %v152, 1
    %vm155 = vcmp.eq.s32.totalorder %v153, 1
    %v156 = vsel %vm154, %v148, %v137
    %v157 = vsel %vm155, %v150, %v135
    %v158 = vsel %vm154, %v149, %v138
    %v159 = vsel %vm155, %v151, %v136
    %v160 = vsel %vm72, 1, 0
    %v161 = vsel %vm73, 1, 0
    %vm162 = vcmp.eq.s32.totalorder %v160, 1
    %vm163 = vcmp.eq.s32.totalorder %v161, 1
    %v164 = vsel %vm162, %v137, %v148
    %v165 = vsel %vm163, %v135, %v150
    %v166 = vsel %vm162, %v138, %v149
    %v167 = vsel %vm163, %v136, %v151
    %168 = vrot.lane.b32.xlu0 %v41, 1
    %v169 = vpop.permute.xlu0 %168
    %170 = vrot.lane.b32.xlu0 %v42, 1
    %v171 = vpop.permute.xlu0 %170
    %172 = vrot.lane.b32.xlu0 %v81, 1
    %v173 = vpop.permute.xlu0 %172
    %174 = vrot.lane.b32.xlu0 %v82, 1
    %v175 = vpop.permute.xlu0 %174
    %v176 = vsel %vm134, %v169, %v173
    %v177 = vsel %vm134, %v171, %v175
    %v178 = vsel %vm134, %v173, %v169
    %v179 = vsel %vm134, %v175, %v171
    %180 = vrot.lane.b32.xlu0 %v41, 127
    %v181 = vpop.permute.xlu0 %180
    %182 = vrot.lane.b32.xlu0 %v42, 127
    %v183 = vpop.permute.xlu0 %182
    %184 = vrot.lane.b32.xlu0 %v81, 127
    %v185 = vpop.permute.xlu0 %184
    %186 = vrot.lane.b32.xlu0 %v82, 127
    %v187 = vpop.permute.xlu0 %186
    %v188 = vsel %vm147, %v181, %v185
    %v189 = vsel %vm147, %v183, %v187
    %v190 = vsel %vm147, %v185, %v181
    %v191 = vsel %vm147, %v187, %v183
    %v192 = vsel %vm154, %v188, %v178
    %v193 = vsel %vm155, %v190, %v176
    %v194 = vsel %vm154, %v189, %v179
    %v195 = vsel %vm155, %v191, %v177
    %v196 = vsel %vm162, %v178, %v188
    %v197 = vsel %vm163, %v176, %v190
    %v198 = vsel %vm162, %v179, %v189
    %v199 = vsel %vm163, %v177, %v191
    %200 = vrot.lane.b32.xlu0 %v122, 1
    %v201 = vpop.permute.xlu0 %200
    %202 = vrot.lane.b32.xlu0 %v124, 1
    %v203 = vpop.permute.xlu0 %202
    %204 = vrot.lane.b32.xlu0 %v123, 1
    %v205 = vpop.permute.xlu0 %204
    %206 = vrot.lane.b32.xlu0 %v125, 1
    %v207 = vpop.permute.xlu0 %206
    %v208 = vsel %vm134, %v201, %v205
    %v209 = vsel %vm134, %v203, %v207
    %v210 = vsel %vm134, %v205, %v201
    %v211 = vsel %vm134, %v207, %v203
    %212 = vrot.lane.b32.xlu0 %v122, 127
    %v213 = vpop.permute.xlu0 %212
    %214 = vrot.lane.b32.xlu0 %v124, 127
    %v215 = vpop.permute.xlu0 %214
    %216 = vrot.lane.b32.xlu0 %v123, 127
    %v217 = vpop.permute.xlu0 %216
    %218 = vrot.lane.b32.xlu0 %v125, 127
    %v219 = vpop.permute.xlu0 %218
    %v220 = vsel %vm147, %v213, %v217
    %v221 = vsel %vm147, %v215, %v219
    %v222 = vsel %vm147, %v217, %v213
    %v223 = vsel %vm147, %v219, %v215
    %v224 = vsel %vm154, %v220, %v210
    %v225 = vsel %vm155, %v222, %v208
    %v226 = vsel %vm154, %v221, %v211
    %v227 = vsel %vm155, %v223, %v209
    %v228 = vsel %vm162, %v210, %v220
    %v229 = vsel %vm163, %v208, %v222
    %v230 = vsel %vm162, %v211, %v221
    %v231 = vsel %vm163, %v209, %v223
    %233 = vset.pattern.permute.xlu0 0
    %234 = vperm.xlu0 %233, %v78
    %v235 = vpop.permute.xlu0 %234
    %v237 = vlaneseq
    %v238 = vshrl.u32 %v237, 7
    %v239 = vsub.s32 0, %v238
    %v240 = vrot.slane %v156, %v239
    %v241 = vlaneseq
    %v242 = vshrl.u32 %v241, 7
    %v243 = vsub.s32 0, %v242
    %v244 = vrot.slane %v157, %v243
    %v245 = vlaneseq
    %v246 = vshrl.u32 %v245, 7
    %v247 = vsub.s32 0, %v246
    %v248 = vrot.slane %v158, %v247
    %v249 = vlaneseq
    %v250 = vshrl.u32 %v249, 7
    %v251 = vsub.s32 0, %v250
    %v252 = vrot.slane %v159, %v251
    %v253 = vmul.f32 %v235, %v240
    %v254 = vmul.f32 %v235, %v244
    %v255 = vmul.f32 %v235, %v248
    %v256 = vmul.f32 %v235, %v252
    %257 = vset.pattern.permute.xlu0 1
    %258 = vperm.xlu0 %257, %v78
    %v259 = vpop.permute.xlu0 %258
    %v261 = vlaneseq
    %v262 = vshrl.u32 %v261, 7
    %v263 = vsub.s32 1, %v262
    %v264 = vrot.slane %v156, %v263
    %v265 = vlaneseq
    %v266 = vshrl.u32 %v265, 7
    %v267 = vsub.s32 1, %v266
    %v268 = vrot.slane %v157, %v267
    %v269 = vlaneseq
    %v270 = vshrl.u32 %v269, 7
    %v271 = vsub.s32 1, %v270
    %v272 = vrot.slane %v158, %v271
    %v273 = vlaneseq
    %v274 = vshrl.u32 %v273, 7
    %v275 = vsub.s32 1, %v274
    %v276 = vrot.slane %v159, %v275
    %v277 = vmul.f32 %v259, %v264
    %v278 = vmul.f32 %v259, %v268
    %v279 = vmul.f32 %v259, %v272
    %v280 = vmul.f32 %v259, %v276
    %v281 = vadd.f32 %v253, %v277
    %v282 = vadd.f32 %v254, %v278
    %v283 = vadd.f32 %v255, %v279
    %v284 = vadd.f32 %v256, %v280
    %285 = vset.pattern.permute.xlu0 2
    %286 = vperm.xlu0 %285, %v78
    %v287 = vpop.permute.xlu0 %286
    %v289 = vlaneseq
    %v290 = vshrl.u32 %v289, 7
    %v291 = vsub.s32 2, %v290
    %v292 = vrot.slane %v156, %v291
    %v293 = vlaneseq
    %v294 = vshrl.u32 %v293, 7
    %v295 = vsub.s32 2, %v294
    %v296 = vrot.slane %v157, %v295
    %v297 = vlaneseq
    %v298 = vshrl.u32 %v297, 7
    %v299 = vsub.s32 2, %v298
    %v300 = vrot.slane %v158, %v299
    %v301 = vlaneseq
    %v302 = vshrl.u32 %v301, 7
    %v303 = vsub.s32 2, %v302
    %v304 = vrot.slane %v159, %v303
    %v305 = vmul.f32 %v287, %v292
    %v306 = vmul.f32 %v287, %v296
    %v307 = vmul.f32 %v287, %v300
    %v308 = vmul.f32 %v287, %v304
    %v309 = vadd.f32 %v281, %v305
    %v310 = vadd.f32 %v282, %v306
    %v311 = vadd.f32 %v283, %v307
    %v312 = vadd.f32 %v284, %v308
    %313 = vset.pattern.permute.xlu0 3
    %314 = vperm.xlu0 %313, %v78
    %v315 = vpop.permute.xlu0 %314
    %v317 = vlaneseq
    %v318 = vshrl.u32 %v317, 7
    %v319 = vsub.s32 3, %v318
    %v320 = vrot.slane %v156, %v319
    %v321 = vlaneseq
    %v322 = vshrl.u32 %v321, 7
    %v323 = vsub.s32 3, %v322
    %v324 = vrot.slane %v157, %v323
    %v325 = vlaneseq
    %v326 = vshrl.u32 %v325, 7
    %v327 = vsub.s32 3, %v326
    %v328 = vrot.slane %v158, %v327
    %v329 = vlaneseq
    %v330 = vshrl.u32 %v329, 7
    %v331 = vsub.s32 3, %v330
    %v332 = vrot.slane %v159, %v331
    %v333 = vmul.f32 %v315, %v320
    %v334 = vmul.f32 %v315, %v324
    %v335 = vmul.f32 %v315, %v328
    %v336 = vmul.f32 %v315, %v332
    %v337 = vadd.f32 %v309, %v333
    %v338 = vadd.f32 %v310, %v334
    %v339 = vadd.f32 %v311, %v335
    %v340 = vadd.f32 %v312, %v336
    %341 = vset.pattern.permute.xlu0 4
    %342 = vperm.xlu0 %341, %v78
    %v343 = vpop.permute.xlu0 %342
    %v345 = vlaneseq
    %v346 = vshrl.u32 %v345, 7
    %v347 = vsub.s32 0, %v346
    %v348 = vrot.slane %v114, %v347
    %v349 = vlaneseq
    %v350 = vshrl.u32 %v349, 7
    %v351 = vsub.s32 0, %v350
    %v352 = vrot.slane %v115, %v351
    %v353 = vlaneseq
    %v354 = vshrl.u32 %v353, 7
    %v355 = vsub.s32 0, %v354
    %v356 = vrot.slane %v116, %v355
    %v357 = vlaneseq
    %v358 = vshrl.u32 %v357, 7
    %v359 = vsub.s32 0, %v358
    %v360 = vrot.slane %v117, %v359
    %v361 = vmul.f32 %v343, %v348
    %v362 = vmul.f32 %v343, %v352
    %v363 = vmul.f32 %v343, %v356
    %v364 = vmul.f32 %v343, %v360
    %v365 = vadd.f32 %v337, %v361
    %v366 = vadd.f32 %v338, %v362
    %v367 = vadd.f32 %v339, %v363
    %v368 = vadd.f32 %v340, %v364
    %369 = vset.pattern.permute.xlu0 5
    %370 = vperm.xlu0 %369, %v78
    %v371 = vpop.permute.xlu0 %370
    %v373 = vlaneseq
    %v374 = vshrl.u32 %v373, 7
    %v375 = vsub.s32 1, %v374
    %v376 = vrot.slane %v114, %v375
    %v377 = vlaneseq
    %v378 = vshrl.u32 %v377, 7
    %v379 = vsub.s32 1, %v378
    %v380 = vrot.slane %v115, %v379
    %v381 = vlaneseq
    %v382 = vshrl.u32 %v381, 7
    %v383 = vsub.s32 1, %v382
    %v384 = vrot.slane %v116, %v383
    %v385 = vlaneseq
    %v386 = vshrl.u32 %v385, 7
    %v387 = vsub.s32 1, %v386
    %v388 = vrot.slane %v117, %v387
    %v389 = vmul.f32 %v371, %v376
    %v390 = vmul.f32 %v371, %v380
    %v391 = vmul.f32 %v371, %v384
    %v392 = vmul.f32 %v371, %v388
    %v393 = vadd.f32 %v365, %v389
    %v394 = vadd.f32 %v366, %v390
    %v395 = vadd.f32 %v367, %v391
    %v396 = vadd.f32 %v368, %v392
    %397 = vset.pattern.permute.xlu0 6
    %398 = vperm.xlu0 %397, %v78
    %v399 = vpop.permute.xlu0 %398
    %v401 = vlaneseq
    %v402 = vshrl.u32 %v401, 7
    %v403 = vsub.s32 2, %v402
    %v404 = vrot.slane %v114, %v403
    %v405 = vlaneseq
    %v406 = vshrl.u32 %v405, 7
    %v407 = vsub.s32 2, %v406
    %v408 = vrot.slane %v115, %v407
    %v409 = vlaneseq
    %v410 = vshrl.u32 %v409, 7
    %v411 = vsub.s32 2, %v410
    %v412 = vrot.slane %v116, %v411
    %v413 = vlaneseq
    %v414 = vshrl.u32 %v413, 7
    %v415 = vsub.s32 2, %v414
    %v416 = vrot.slane %v117, %v415
    %v417 = vmul.f32 %v399, %v404
    %v418 = vmul.f32 %v399, %v408
    %v419 = vmul.f32 %v399, %v412
    %v420 = vmul.f32 %v399, %v416
    %v421 = vadd.f32 %v393, %v417
    %v422 = vadd.f32 %v394, %v418
    %v423 = vadd.f32 %v395, %v419
    %v424 = vadd.f32 %v396, %v420
    %425 = vset.pattern.permute.xlu0 7
    %426 = vperm.xlu0 %425, %v78
    %v427 = vpop.permute.xlu0 %426
    %v429 = vlaneseq
    %v430 = vshrl.u32 %v429, 7
    %v431 = vsub.s32 3, %v430
    %v432 = vrot.slane %v114, %v431
    %v433 = vlaneseq
    %v434 = vshrl.u32 %v433, 7
    %v435 = vsub.s32 3, %v434
    %v436 = vrot.slane %v115, %v435
    %v437 = vlaneseq
    %v438 = vshrl.u32 %v437, 7
    %v439 = vsub.s32 3, %v438
    %v440 = vrot.slane %v116, %v439
    %v441 = vlaneseq
    %v442 = vshrl.u32 %v441, 7
    %v443 = vsub.s32 3, %v442
    %v444 = vrot.slane %v117, %v443
    %v445 = vmul.f32 %v427, %v432
    %v446 = vmul.f32 %v427, %v436
    %v447 = vmul.f32 %v427, %v440
    %v448 = vmul.f32 %v427, %v444
    %v449 = vadd.f32 %v421, %v445
    %v450 = vadd.f32 %v422, %v446
    %v451 = vadd.f32 %v423, %v447
    %v452 = vadd.f32 %v424, %v448
    %453 = vset.pattern.permute.xlu0 8
    %454 = vperm.xlu0 %453, %v78
    %v455 = vpop.permute.xlu0 %454
    %v457 = vlaneseq
    %v458 = vshrl.u32 %v457, 7
    %v459 = vsub.s32 0, %v458
    %v460 = vrot.slane %v164, %v459
    %v461 = vlaneseq
    %v462 = vshrl.u32 %v461, 7
    %v463 = vsub.s32 0, %v462
    %v464 = vrot.slane %v165, %v463
    %v465 = vlaneseq
    %v466 = vshrl.u32 %v465, 7
    %v467 = vsub.s32 0, %v466
    %v468 = vrot.slane %v166, %v467
    %v469 = vlaneseq
    %v470 = vshrl.u32 %v469, 7
    %v471 = vsub.s32 0, %v470
    %v472 = vrot.slane %v167, %v471
    %v473 = vmul.f32 %v455, %v460
    %v474 = vmul.f32 %v455, %v464
    %v475 = vmul.f32 %v455, %v468
    %v476 = vmul.f32 %v455, %v472
    %v477 = vadd.f32 %v449, %v473
    %v478 = vadd.f32 %v450, %v474
    %v479 = vadd.f32 %v451, %v475
    %v480 = vadd.f32 %v452, %v476
    %481 = vset.pattern.permute.xlu0 9
    %482 = vperm.xlu0 %481, %v78
    %v483 = vpop.permute.xlu0 %482
    %v485 = vlaneseq
    %v486 = vshrl.u32 %v485, 7
    %v487 = vsub.s32 1, %v486
    %v488 = vrot.slane %v164, %v487
    %v489 = vlaneseq
    %v490 = vshrl.u32 %v489, 7
    %v491 = vsub.s32 1, %v490
    %v492 = vrot.slane %v165, %v491
    %v493 = vlaneseq
    %v494 = vshrl.u32 %v493, 7
    %v495 = vsub.s32 1, %v494
    %v496 = vrot.slane %v166, %v495
    %v497 = vlaneseq
    %v498 = vshrl.u32 %v497, 7
    %v499 = vsub.s32 1, %v498
    %v500 = vrot.slane %v167, %v499
    %v501 = vmul.f32 %v483, %v488
    %v502 = vmul.f32 %v483, %v492
    %v503 = vmul.f32 %v483, %v496
    %v504 = vmul.f32 %v483, %v500
    %v505 = vadd.f32 %v477, %v501
    %v506 = vadd.f32 %v478, %v502
    %v507 = vadd.f32 %v479, %v503
    %v508 = vadd.f32 %v480, %v504
    %509 = vset.pattern.permute.xlu0 10
    %510 = vperm.xlu0 %509, %v78
    %v511 = vpop.permute.xlu0 %510
    %v513 = vlaneseq
    %v514 = vshrl.u32 %v513, 7
    %v515 = vsub.s32 2, %v514
    %v516 = vrot.slane %v164, %v515
    %v517 = vlaneseq
    %v518 = vshrl.u32 %v517, 7
    %v519 = vsub.s32 2, %v518
    %v520 = vrot.slane %v165, %v519
    %v521 = vlaneseq
    %v522 = vshrl.u32 %v521, 7
    %v523 = vsub.s32 2, %v522
    %v524 = vrot.slane %v166, %v523
    %v525 = vlaneseq
    %v526 = vshrl.u32 %v525, 7
    %v527 = vsub.s32 2, %v526
    %v528 = vrot.slane %v167, %v527
    %v529 = vmul.f32 %v511, %v516
    %v530 = vmul.f32 %v511, %v520
    %v531 = vmul.f32 %v511, %v524
    %v532 = vmul.f32 %v511, %v528
    %v533 = vadd.f32 %v505, %v529
    %v534 = vadd.f32 %v506, %v530
    %v535 = vadd.f32 %v507, %v531
    %v536 = vadd.f32 %v508, %v532
    %537 = vset.pattern.permute.xlu0 11
    %538 = vperm.xlu0 %537, %v78
    %v539 = vpop.permute.xlu0 %538
    %v541 = vlaneseq
    %v542 = vshrl.u32 %v541, 7
    %v543 = vsub.s32 3, %v542
    %v544 = vrot.slane %v164, %v543
    %v545 = vlaneseq
    %v546 = vshrl.u32 %v545, 7
    %v547 = vsub.s32 3, %v546
    %v548 = vrot.slane %v165, %v547
    %v549 = vlaneseq
    %v550 = vshrl.u32 %v549, 7
    %v551 = vsub.s32 3, %v550
    %v552 = vrot.slane %v166, %v551
    %v553 = vlaneseq
    %v554 = vshrl.u32 %v553, 7
    %v555 = vsub.s32 3, %v554
    %v556 = vrot.slane %v167, %v555
    %v557 = vmul.f32 %v539, %v544
    %v558 = vmul.f32 %v539, %v548
    %v559 = vmul.f32 %v539, %v552
    %v560 = vmul.f32 %v539, %v556
    %v561 = vadd.f32 %v533, %v557
    %v562 = vadd.f32 %v534, %v558
    %v563 = vadd.f32 %v535, %v559
    %v564 = vadd.f32 %v536, %v560
    %565 = vset.pattern.permute.xlu0 12
    %566 = vperm.xlu0 %565, %v78
    %v567 = vpop.permute.xlu0 %566
    %v569 = vlaneseq
    %v570 = vshrl.u32 %v569, 7
    %v571 = vsub.s32 0, %v570
    %v572 = vrot.slane %v192, %v571
    %v573 = vlaneseq
    %v574 = vshrl.u32 %v573, 7
    %v575 = vsub.s32 0, %v574
    %v576 = vrot.slane %v193, %v575
    %v577 = vlaneseq
    %v578 = vshrl.u32 %v577, 7
    %v579 = vsub.s32 0, %v578
    %v580 = vrot.slane %v194, %v579
    %v581 = vlaneseq
    %v582 = vshrl.u32 %v581, 7
    %v583 = vsub.s32 0, %v582
    %v584 = vrot.slane %v195, %v583
    %v585 = vmul.f32 %v567, %v572
    %v586 = vmul.f32 %v567, %v576
    %v587 = vmul.f32 %v567, %v580
    %v588 = vmul.f32 %v567, %v584
    %v589 = vadd.f32 %v561, %v585
    %v590 = vadd.f32 %v562, %v586
    %v591 = vadd.f32 %v563, %v587
    %v592 = vadd.f32 %v564, %v588
    %593 = vset.pattern.permute.xlu0 13
    %594 = vperm.xlu0 %593, %v78
    %v595 = vpop.permute.xlu0 %594
    %v597 = vlaneseq
    %v598 = vshrl.u32 %v597, 7
    %v599 = vsub.s32 1, %v598
    %v600 = vrot.slane %v192, %v599
    %v601 = vlaneseq
    %v602 = vshrl.u32 %v601, 7
    %v603 = vsub.s32 1, %v602
    %v604 = vrot.slane %v193, %v603
    %v605 = vlaneseq
    %v606 = vshrl.u32 %v605, 7
    %v607 = vsub.s32 1, %v606
    %v608 = vrot.slane %v194, %v607
    %v609 = vlaneseq
    %v610 = vshrl.u32 %v609, 7
    %v611 = vsub.s32 1, %v610
    %v612 = vrot.slane %v195, %v611
    %v613 = vmul.f32 %v595, %v600
    %v614 = vmul.f32 %v595, %v604
    %v615 = vmul.f32 %v595, %v608
    %v616 = vmul.f32 %v595, %v612
    %v617 = vadd.f32 %v589, %v613
    %v618 = vadd.f32 %v590, %v614
    %v619 = vadd.f32 %v591, %v615
    %v620 = vadd.f32 %v592, %v616
    %621 = vset.pattern.permute.xlu0 14
    %622 = vperm.xlu0 %621, %v78
    %v623 = vpop.permute.xlu0 %622
    %v625 = vlaneseq
    %v626 = vshrl.u32 %v625, 7
    %v627 = vsub.s32 2, %v626
    %v628 = vrot.slane %v192, %v627
    %v629 = vlaneseq
    %v630 = vshrl.u32 %v629, 7
    %v631 = vsub.s32 2, %v630
    %v632 = vrot.slane %v193, %v631
    %v633 = vlaneseq
    %v634 = vshrl.u32 %v633, 7
    %v635 = vsub.s32 2, %v634
    %v636 = vrot.slane %v194, %v635
    %v637 = vlaneseq
    %v638 = vshrl.u32 %v637, 7
    %v639 = vsub.s32 2, %v638
    %v640 = vrot.slane %v195, %v639
    %v641 = vmul.f32 %v623, %v628
    %v642 = vmul.f32 %v623, %v632
    %v643 = vmul.f32 %v623, %v636
    %v644 = vmul.f32 %v623, %v640
    %v645 = vadd.f32 %v617, %v641
    %v646 = vadd.f32 %v618, %v642
    %v647 = vadd.f32 %v619, %v643
    %v648 = vadd.f32 %v620, %v644
    %649 = vset.pattern.permute.xlu0 15
    %650 = vperm.xlu0 %649, %v78
    %v651 = vpop.permute.xlu0 %650
    %v653 = vlaneseq
    %v654 = vshrl.u32 %v653, 7
    %v655 = vsub.s32 3, %v654
    %v656 = vrot.slane %v192, %v655
    %v657 = vlaneseq
    %v658 = vshrl.u32 %v657, 7
    %v659 = vsub.s32 3, %v658
    %v660 = vrot.slane %v193, %v659
    %v661 = vlaneseq
    %v662 = vshrl.u32 %v661, 7
    %v663 = vsub.s32 3, %v662
    %v664 = vrot.slane %v194, %v663
    %v665 = vlaneseq
    %v666 = vshrl.u32 %v665, 7
    %v667 = vsub.s32 3, %v666
    %v668 = vrot.slane %v195, %v667
    %v669 = vmul.f32 %v651, %v656
    %v670 = vmul.f32 %v651, %v660
    %v671 = vmul.f32 %v651, %v664
    %v672 = vmul.f32 %v651, %v668
    %v673 = vadd.f32 %v645, %v669
    %v674 = vadd.f32 %v646, %v670
    %v675 = vadd.f32 %v647, %v671
    %v676 = vadd.f32 %v648, %v672
    %677 = vset.pattern.permute.xlu0 16
    %678 = vperm.xlu0 %677, %v78
    %v679 = vpop.permute.xlu0 %678
    %v681 = vlaneseq
    %v682 = vshrl.u32 %v681, 7
    %v683 = vsub.s32 0, %v682
    %v684 = vrot.slane %v41, %v683
    %v685 = vlaneseq
    %v686 = vshrl.u32 %v685, 7
    %v687 = vsub.s32 4, %v686
    %v688 = vrot.slane %v41, %v687
    %v689 = vlaneseq
    %v690 = vshrl.u32 %v689, 7
    %v691 = vsub.s32 0, %v690
    %v692 = vrot.slane %v42, %v691
    %v693 = vlaneseq
    %v694 = vshrl.u32 %v693, 7
    %v695 = vsub.s32 4, %v694
    %v696 = vrot.slane %v42, %v695
    %v701 = vlaneseq
    %v702 = vshrl.u32 %v701, 7
    %v703 = vsub.s32 0, %v702
    %v704 = vrot.slane %v684, %v703
    %v705 = vlaneseq
    %v706 = vshrl.u32 %v705, 7
    %v707 = vsub.s32 0, %v706
    %v708 = vrot.slane %v688, %v707
    %v709 = vlaneseq
    %v710 = vshrl.u32 %v709, 7
    %v711 = vsub.s32 0, %v710
    %v712 = vrot.slane %v692, %v711
    %v713 = vlaneseq
    %v714 = vshrl.u32 %v713, 7
    %v715 = vsub.s32 0, %v714
    %v716 = vrot.slane %v696, %v715
    %v717 = vmul.f32 %v679, %v704
    %v718 = vmul.f32 %v679, %v708
    %v719 = vmul.f32 %v679, %v712
    %v720 = vmul.f32 %v679, %v716
    %v721 = vadd.f32 %v673, %v717
    %v722 = vadd.f32 %v674, %v718
    %v723 = vadd.f32 %v675, %v719
    %v724 = vadd.f32 %v676, %v720
    %725 = vset.pattern.permute.xlu0 17
    %726 = vperm.xlu0 %725, %v78
    %v727 = vpop.permute.xlu0 %726
    %v729 = vlaneseq
    %v730 = vshrl.u32 %v729, 7
    %v731 = vsub.s32 1, %v730
    %v732 = vrot.slane %v41, %v731
    %v733 = vlaneseq
    %v734 = vshrl.u32 %v733, 7
    %v735 = vsub.s32 5, %v734
    %v736 = vrot.slane %v41, %v735
    %v737 = vlaneseq
    %v738 = vshrl.u32 %v737, 7
    %v739 = vsub.s32 1, %v738
    %v740 = vrot.slane %v42, %v739
    %v741 = vlaneseq
    %v742 = vshrl.u32 %v741, 7
    %v743 = vsub.s32 5, %v742
    %v744 = vrot.slane %v42, %v743
    %v749 = vlaneseq
    %v750 = vshrl.u32 %v749, 7
    %v751 = vsub.s32 1, %v750
    %v752 = vrot.slane %v732, %v751
    %v753 = vlaneseq
    %v754 = vshrl.u32 %v753, 7
    %v755 = vsub.s32 1, %v754
    %v756 = vrot.slane %v736, %v755
    %v757 = vlaneseq
    %v758 = vshrl.u32 %v757, 7
    %v759 = vsub.s32 1, %v758
    %v760 = vrot.slane %v740, %v759
    %v761 = vlaneseq
    %v762 = vshrl.u32 %v761, 7
    %v763 = vsub.s32 1, %v762
    %v764 = vrot.slane %v744, %v763
    %v765 = vmul.f32 %v727, %v752
    %v766 = vmul.f32 %v727, %v756
    %v767 = vmul.f32 %v727, %v760
    %v768 = vmul.f32 %v727, %v764
    %v769 = vadd.f32 %v721, %v765
    %v770 = vadd.f32 %v722, %v766
    %v771 = vadd.f32 %v723, %v767
    %v772 = vadd.f32 %v724, %v768
    %773 = vset.pattern.permute.xlu0 18
    %774 = vperm.xlu0 %773, %v78
    %v775 = vpop.permute.xlu0 %774
    %v777 = vlaneseq
    %v778 = vshrl.u32 %v777, 7
    %v779 = vsub.s32 2, %v778
    %v780 = vrot.slane %v41, %v779
    %v781 = vlaneseq
    %v782 = vshrl.u32 %v781, 7
    %v783 = vsub.s32 6, %v782
    %v784 = vrot.slane %v41, %v783
    %v785 = vlaneseq
    %v786 = vshrl.u32 %v785, 7
    %v787 = vsub.s32 2, %v786
    %v788 = vrot.slane %v42, %v787
    %v789 = vlaneseq
    %v790 = vshrl.u32 %v789, 7
    %v791 = vsub.s32 6, %v790
    %v792 = vrot.slane %v42, %v791
    %v797 = vlaneseq
    %v798 = vshrl.u32 %v797, 7
    %v799 = vsub.s32 2, %v798
    %v800 = vrot.slane %v780, %v799
    %v801 = vlaneseq
    %v802 = vshrl.u32 %v801, 7
    %v803 = vsub.s32 2, %v802
    %v804 = vrot.slane %v784, %v803
    %v805 = vlaneseq
    %v806 = vshrl.u32 %v805, 7
    %v807 = vsub.s32 2, %v806
    %v808 = vrot.slane %v788, %v807
    %v809 = vlaneseq
    %v810 = vshrl.u32 %v809, 7
    %v811 = vsub.s32 2, %v810
    %v812 = vrot.slane %v792, %v811
    %v813 = vmul.f32 %v775, %v800
    %v814 = vmul.f32 %v775, %v804
    %v815 = vmul.f32 %v775, %v808
    %v816 = vmul.f32 %v775, %v812
    %v817 = vadd.f32 %v769, %v813
    %v818 = vadd.f32 %v770, %v814
    %v819 = vadd.f32 %v771, %v815
    %v820 = vadd.f32 %v772, %v816
    %821 = vset.pattern.permute.xlu0 19
    %822 = vperm.xlu0 %821, %v78
    %v823 = vpop.permute.xlu0 %822
    %v825 = vlaneseq
    %v826 = vshrl.u32 %v825, 7
    %v827 = vsub.s32 3, %v826
    %v828 = vrot.slane %v41, %v827
    %v829 = vlaneseq
    %v830 = vshrl.u32 %v829, 7
    %v831 = vsub.s32 7, %v830
    %v832 = vrot.slane %v41, %v831
    %v833 = vlaneseq
    %v834 = vshrl.u32 %v833, 7
    %v835 = vsub.s32 3, %v834
    %v836 = vrot.slane %v42, %v835
    %v837 = vlaneseq
    %v838 = vshrl.u32 %v837, 7
    %v839 = vsub.s32 7, %v838
    %v840 = vrot.slane %v42, %v839
    %v845 = vlaneseq
    %v846 = vshrl.u32 %v845, 7
    %v847 = vsub.s32 3, %v846
    %v848 = vrot.slane %v828, %v847
    %v849 = vlaneseq
    %v850 = vshrl.u32 %v849, 7
    %v851 = vsub.s32 3, %v850
    %v852 = vrot.slane %v832, %v851
    %v853 = vlaneseq
    %v854 = vshrl.u32 %v853, 7
    %v855 = vsub.s32 3, %v854
    %v856 = vrot.slane %v836, %v855
    %v857 = vlaneseq
    %v858 = vshrl.u32 %v857, 7
    %v859 = vsub.s32 3, %v858
    %v860 = vrot.slane %v840, %v859
    %v861 = vmul.f32 %v823, %v848
    %v862 = vmul.f32 %v823, %v852
    %v863 = vmul.f32 %v823, %v856
    %v864 = vmul.f32 %v823, %v860
    %v865 = vadd.f32 %v817, %v861
    %v866 = vadd.f32 %v818, %v862
    %v867 = vadd.f32 %v819, %v863
    %v868 = vadd.f32 %v820, %v864
    %869 = vset.pattern.permute.xlu0 20
    %870 = vperm.xlu0 %869, %v78
    %v871 = vpop.permute.xlu0 %870
    %v873 = vlaneseq
    %v874 = vshrl.u32 %v873, 7
    %v875 = vsub.s32 0, %v874
    %v876 = vrot.slane %v196, %v875
    %v877 = vlaneseq
    %v878 = vshrl.u32 %v877, 7
    %v879 = vsub.s32 0, %v878
    %v880 = vrot.slane %v197, %v879
    %v881 = vlaneseq
    %v882 = vshrl.u32 %v881, 7
    %v883 = vsub.s32 0, %v882
    %v884 = vrot.slane %v198, %v883
    %v885 = vlaneseq
    %v886 = vshrl.u32 %v885, 7
    %v887 = vsub.s32 0, %v886
    %v888 = vrot.slane %v199, %v887
    %v889 = vmul.f32 %v871, %v876
    %v890 = vmul.f32 %v871, %v880
    %v891 = vmul.f32 %v871, %v884
    %v892 = vmul.f32 %v871, %v888
    %v893 = vadd.f32 %v865, %v889
    %v894 = vadd.f32 %v866, %v890
    %v895 = vadd.f32 %v867, %v891
    %v896 = vadd.f32 %v868, %v892
    %897 = vset.pattern.permute.xlu0 21
    %898 = vperm.xlu0 %897, %v78
    %v899 = vpop.permute.xlu0 %898
    %v901 = vlaneseq
    %v902 = vshrl.u32 %v901, 7
    %v903 = vsub.s32 1, %v902
    %v904 = vrot.slane %v196, %v903
    %v905 = vlaneseq
    %v906 = vshrl.u32 %v905, 7
    %v907 = vsub.s32 1, %v906
    %v908 = vrot.slane %v197, %v907
    %v909 = vlaneseq
    %v910 = vshrl.u32 %v909, 7
    %v911 = vsub.s32 1, %v910
    %v912 = vrot.slane %v198, %v911
    %v913 = vlaneseq
    %v914 = vshrl.u32 %v913, 7
    %v915 = vsub.s32 1, %v914
    %v916 = vrot.slane %v199, %v915
    %v917 = vmul.f32 %v899, %v904
    %v918 = vmul.f32 %v899, %v908
    %v919 = vmul.f32 %v899, %v912
    %v920 = vmul.f32 %v899, %v916
    %v921 = vadd.f32 %v893, %v917
    %v922 = vadd.f32 %v894, %v918
    %v923 = vadd.f32 %v895, %v919
    %v924 = vadd.f32 %v896, %v920
    %925 = vset.pattern.permute.xlu0 22
    %926 = vperm.xlu0 %925, %v78
    %v927 = vpop.permute.xlu0 %926
    %v929 = vlaneseq
    %v930 = vshrl.u32 %v929, 7
    %v931 = vsub.s32 2, %v930
    %v932 = vrot.slane %v196, %v931
    %v933 = vlaneseq
    %v934 = vshrl.u32 %v933, 7
    %v935 = vsub.s32 2, %v934
    %v936 = vrot.slane %v197, %v935
    %v937 = vlaneseq
    %v938 = vshrl.u32 %v937, 7
    %v939 = vsub.s32 2, %v938
    %v940 = vrot.slane %v198, %v939
    %v941 = vlaneseq
    %v942 = vshrl.u32 %v941, 7
    %v943 = vsub.s32 2, %v942
    %v944 = vrot.slane %v199, %v943
    %v945 = vmul.f32 %v927, %v932
    %v946 = vmul.f32 %v927, %v936
    %v947 = vmul.f32 %v927, %v940
    %v948 = vmul.f32 %v927, %v944
    %v949 = vadd.f32 %v921, %v945
    %v950 = vadd.f32 %v922, %v946
    %v951 = vadd.f32 %v923, %v947
    %v952 = vadd.f32 %v924, %v948
    %953 = vset.pattern.permute.xlu0 23
    %954 = vperm.xlu0 %953, %v78
    %v955 = vpop.permute.xlu0 %954
    %v957 = vlaneseq
    %v958 = vshrl.u32 %v957, 7
    %v959 = vsub.s32 3, %v958
    %v960 = vrot.slane %v196, %v959
    %v961 = vlaneseq
    %v962 = vshrl.u32 %v961, 7
    %v963 = vsub.s32 3, %v962
    %v964 = vrot.slane %v197, %v963
    %v965 = vlaneseq
    %v966 = vshrl.u32 %v965, 7
    %v967 = vsub.s32 3, %v966
    %v968 = vrot.slane %v198, %v967
    %v969 = vlaneseq
    %v970 = vshrl.u32 %v969, 7
    %v971 = vsub.s32 3, %v970
    %v972 = vrot.slane %v199, %v971
    %v973 = vmul.f32 %v955, %v960
    %v974 = vmul.f32 %v955, %v964
    %v975 = vmul.f32 %v955, %v968
    %v976 = vmul.f32 %v955, %v972
    %v977 = vadd.f32 %v949, %v973
    %v978 = vadd.f32 %v950, %v974
    %v979 = vadd.f32 %v951, %v975
    %v980 = vadd.f32 %v952, %v976
    %981 = vset.pattern.permute.xlu0 24
    %982 = vperm.xlu0 %981, %v78
    %v983 = vpop.permute.xlu0 %982
    %v985 = vlaneseq
    %v986 = vshrl.u32 %v985, 7
    %v987 = vsub.s32 0, %v986
    %v988 = vrot.slane %v224, %v987
    %v989 = vlaneseq
    %v990 = vshrl.u32 %v989, 7
    %v991 = vsub.s32 0, %v990
    %v992 = vrot.slane %v225, %v991
    %v993 = vlaneseq
    %v994 = vshrl.u32 %v993, 7
    %v995 = vsub.s32 0, %v994
    %v996 = vrot.slane %v226, %v995
    %v997 = vlaneseq
    %v998 = vshrl.u32 %v997, 7
    %v999 = vsub.s32 0, %v998
    %v1000 = vrot.slane %v227, %v999
    %v1001 = vmul.f32 %v983, %v988
    %v1002 = vmul.f32 %v983, %v992
    %v1003 = vmul.f32 %v983, %v996
    %v1004 = vmul.f32 %v983, %v1000
    %v1005 = vadd.f32 %v977, %v1001
    %v1006 = vadd.f32 %v978, %v1002
    %v1007 = vadd.f32 %v979, %v1003
    %v1008 = vadd.f32 %v980, %v1004
    %1009 = vset.pattern.permute.xlu0 25
    %1010 = vperm.xlu0 %1009, %v78
    %v1011 = vpop.permute.xlu0 %1010
    %v1013 = vlaneseq
    %v1014 = vshrl.u32 %v1013, 7
    %v1015 = vsub.s32 1, %v1014
    %v1016 = vrot.slane %v224, %v1015
    %v1017 = vlaneseq
    %v1018 = vshrl.u32 %v1017, 7
    %v1019 = vsub.s32 1, %v1018
    %v1020 = vrot.slane %v225, %v1019
    %v1021 = vlaneseq
    %v1022 = vshrl.u32 %v1021, 7
    %v1023 = vsub.s32 1, %v1022
    %v1024 = vrot.slane %v226, %v1023
    %v1025 = vlaneseq
    %v1026 = vshrl.u32 %v1025, 7
    %v1027 = vsub.s32 1, %v1026
    %v1028 = vrot.slane %v227, %v1027
    %v1029 = vmul.f32 %v1011, %v1016
    %v1030 = vmul.f32 %v1011, %v1020
    %v1031 = vmul.f32 %v1011, %v1024
    %v1032 = vmul.f32 %v1011, %v1028
    %v1033 = vadd.f32 %v1005, %v1029
    %v1034 = vadd.f32 %v1006, %v1030
    %v1035 = vadd.f32 %v1007, %v1031
    %v1036 = vadd.f32 %v1008, %v1032
    %1037 = vset.pattern.permute.xlu0 26
    %1038 = vperm.xlu0 %1037, %v78
    %v1039 = vpop.permute.xlu0 %1038
    %v1041 = vlaneseq
    %v1042 = vshrl.u32 %v1041, 7
    %v1043 = vsub.s32 2, %v1042
    %v1044 = vrot.slane %v224, %v1043
    %v1045 = vlaneseq
    %v1046 = vshrl.u32 %v1045, 7
    %v1047 = vsub.s32 2, %v1046
    %v1048 = vrot.slane %v225, %v1047
    %v1049 = vlaneseq
    %v1050 = vshrl.u32 %v1049, 7
    %v1051 = vsub.s32 2, %v1050
    %v1052 = vrot.slane %v226, %v1051
    %v1053 = vlaneseq
    %v1054 = vshrl.u32 %v1053, 7
    %v1055 = vsub.s32 2, %v1054
    %v1056 = vrot.slane %v227, %v1055
    %v1057 = vmul.f32 %v1039, %v1044
    %v1058 = vmul.f32 %v1039, %v1048
    %v1059 = vmul.f32 %v1039, %v1052
    %v1060 = vmul.f32 %v1039, %v1056
    %v1061 = vadd.f32 %v1033, %v1057
    %v1062 = vadd.f32 %v1034, %v1058
    %v1063 = vadd.f32 %v1035, %v1059
    %v1064 = vadd.f32 %v1036, %v1060
    %1065 = vset.pattern.permute.xlu0 27
    %1066 = vperm.xlu0 %1065, %v78
    %v1067 = vpop.permute.xlu0 %1066
    %v1069 = vlaneseq
    %v1070 = vshrl.u32 %v1069, 7
    %v1071 = vsub.s32 3, %v1070
    %v1072 = vrot.slane %v224, %v1071
    %v1073 = vlaneseq
    %v1074 = vshrl.u32 %v1073, 7
    %v1075 = vsub.s32 3, %v1074
    %v1076 = vrot.slane %v225, %v1075
    %v1077 = vlaneseq
    %v1078 = vshrl.u32 %v1077, 7
    %v1079 = vsub.s32 3, %v1078
    %v1080 = vrot.slane %v226, %v1079
    %v1081 = vlaneseq
    %v1082 = vshrl.u32 %v1081, 7
    %v1083 = vsub.s32 3, %v1082
    %v1084 = vrot.slane %v227, %v1083
    %v1085 = vmul.f32 %v1067, %v1072
    %v1086 = vmul.f32 %v1067, %v1076
    %v1087 = vmul.f32 %v1067, %v1080
    %v1088 = vmul.f32 %v1067, %v1084
    %v1089 = vadd.f32 %v1061, %v1085
    %v1090 = vadd.f32 %v1062, %v1086
    %v1091 = vadd.f32 %v1063, %v1087
    %v1092 = vadd.f32 %v1064, %v1088
    %1093 = vset.pattern.permute.xlu0 28
    %1094 = vperm.xlu0 %1093, %v78
    %v1095 = vpop.permute.xlu0 %1094
    %v1097 = vlaneseq
    %v1098 = vshrl.u32 %v1097, 7
    %v1099 = vsub.s32 0, %v1098
    %v1100 = vrot.slane %v122, %v1099
    %v1101 = vlaneseq
    %v1102 = vshrl.u32 %v1101, 7
    %v1103 = vsub.s32 0, %v1102
    %v1104 = vrot.slane %v123, %v1103
    %v1105 = vlaneseq
    %v1106 = vshrl.u32 %v1105, 7
    %v1107 = vsub.s32 0, %v1106
    %v1108 = vrot.slane %v124, %v1107
    %v1109 = vlaneseq
    %v1110 = vshrl.u32 %v1109, 7
    %v1111 = vsub.s32 0, %v1110
    %v1112 = vrot.slane %v125, %v1111
    %v1113 = vmul.f32 %v1095, %v1100
    %v1114 = vmul.f32 %v1095, %v1104
    %v1115 = vmul.f32 %v1095, %v1108
    %v1116 = vmul.f32 %v1095, %v1112
    %v1117 = vadd.f32 %v1089, %v1113
    %v1118 = vadd.f32 %v1090, %v1114
    %v1119 = vadd.f32 %v1091, %v1115
    %v1120 = vadd.f32 %v1092, %v1116
    %1121 = vset.pattern.permute.xlu0 29
    %1122 = vperm.xlu0 %1121, %v78
    %v1123 = vpop.permute.xlu0 %1122
    %v1125 = vlaneseq
    %v1126 = vshrl.u32 %v1125, 7
    %v1127 = vsub.s32 1, %v1126
    %v1128 = vrot.slane %v122, %v1127
    %v1129 = vlaneseq
    %v1130 = vshrl.u32 %v1129, 7
    %v1131 = vsub.s32 1, %v1130
    %v1132 = vrot.slane %v123, %v1131
    %v1133 = vlaneseq
    %v1134 = vshrl.u32 %v1133, 7
    %v1135 = vsub.s32 1, %v1134
    %v1136 = vrot.slane %v124, %v1135
    %v1137 = vlaneseq
    %v1138 = vshrl.u32 %v1137, 7
    %v1139 = vsub.s32 1, %v1138
    %v1140 = vrot.slane %v125, %v1139
    %v1141 = vmul.f32 %v1123, %v1128
    %v1142 = vmul.f32 %v1123, %v1132
    %v1143 = vmul.f32 %v1123, %v1136
    %v1144 = vmul.f32 %v1123, %v1140
    %v1145 = vadd.f32 %v1117, %v1141
    %v1146 = vadd.f32 %v1118, %v1142
    %v1147 = vadd.f32 %v1119, %v1143
    %v1148 = vadd.f32 %v1120, %v1144
    %1149 = vset.pattern.permute.xlu0 30
    %1150 = vperm.xlu0 %1149, %v78
    %v1151 = vpop.permute.xlu0 %1150
    %v1153 = vlaneseq
    %v1154 = vshrl.u32 %v1153, 7
    %v1155 = vsub.s32 2, %v1154
    %v1156 = vrot.slane %v122, %v1155
    %v1157 = vlaneseq
    %v1158 = vshrl.u32 %v1157, 7
    %v1159 = vsub.s32 2, %v1158
    %v1160 = vrot.slane %v123, %v1159
    %v1161 = vlaneseq
    %v1162 = vshrl.u32 %v1161, 7
    %v1163 = vsub.s32 2, %v1162
    %v1164 = vrot.slane %v124, %v1163
    %v1165 = vlaneseq
    %v1166 = vshrl.u32 %v1165, 7
    %v1167 = vsub.s32 2, %v1166
    %v1168 = vrot.slane %v125, %v1167
    %v1169 = vmul.f32 %v1151, %v1156
    %v1170 = vmul.f32 %v1151, %v1160
    %v1171 = vmul.f32 %v1151, %v1164
    %v1172 = vmul.f32 %v1151, %v1168
    %v1173 = vadd.f32 %v1145, %v1169
    %v1174 = vadd.f32 %v1146, %v1170
    %v1175 = vadd.f32 %v1147, %v1171
    %v1176 = vadd.f32 %v1148, %v1172
    %1177 = vset.pattern.permute.xlu0 31
    %1178 = vperm.xlu0 %1177, %v78
    %v1179 = vpop.permute.xlu0 %1178
    %v1181 = vlaneseq
    %v1182 = vshrl.u32 %v1181, 7
    %v1183 = vsub.s32 3, %v1182
    %v1184 = vrot.slane %v122, %v1183
    %v1185 = vlaneseq
    %v1186 = vshrl.u32 %v1185, 7
    %v1187 = vsub.s32 3, %v1186
    %v1188 = vrot.slane %v123, %v1187
    %v1189 = vlaneseq
    %v1190 = vshrl.u32 %v1189, 7
    %v1191 = vsub.s32 3, %v1190
    %v1192 = vrot.slane %v124, %v1191
    %v1193 = vlaneseq
    %v1194 = vshrl.u32 %v1193, 7
    %v1195 = vsub.s32 3, %v1194
    %v1196 = vrot.slane %v125, %v1195
    %v1197 = vmul.f32 %v1179, %v1184
    %v1198 = vmul.f32 %v1179, %v1188
    %v1199 = vmul.f32 %v1179, %v1192
    %v1200 = vmul.f32 %v1179, %v1196
    %v1201 = vadd.f32 %v1173, %v1197
    %v1202 = vadd.f32 %v1174, %v1198
    %v1203 = vadd.f32 %v1175, %v1199
    %v1204 = vadd.f32 %v1176, %v1200
    %1205 = vset.pattern.permute.xlu0 32
    %1206 = vperm.xlu0 %1205, %v78
    %v1207 = vpop.permute.xlu0 %1206
    %v1209 = vlaneseq
    %v1210 = vshrl.u32 %v1209, 7
    %v1211 = vsub.s32 0, %v1210
    %v1212 = vrot.slane %v228, %v1211
    %v1213 = vlaneseq
    %v1214 = vshrl.u32 %v1213, 7
    %v1215 = vsub.s32 0, %v1214
    %v1216 = vrot.slane %v229, %v1215
    %v1217 = vlaneseq
    %v1218 = vshrl.u32 %v1217, 7
    %v1219 = vsub.s32 0, %v1218
    %v1220 = vrot.slane %v230, %v1219
    %v1221 = vlaneseq
    %v1222 = vshrl.u32 %v1221, 7
    %v1223 = vsub.s32 0, %v1222
    %v1224 = vrot.slane %v231, %v1223
    %v1225 = vmul.f32 %v1207, %v1212
    %v1226 = vmul.f32 %v1207, %v1216
    %v1227 = vmul.f32 %v1207, %v1220
    %v1228 = vmul.f32 %v1207, %v1224
    %v1229 = vadd.f32 %v1201, %v1225
    %v1230 = vadd.f32 %v1202, %v1226
    %v1231 = vadd.f32 %v1203, %v1227
    %v1232 = vadd.f32 %v1204, %v1228
    %1233 = vset.pattern.permute.xlu0 33
    %1234 = vperm.xlu0 %1233, %v78
    %v1235 = vpop.permute.xlu0 %1234
    %v1237 = vlaneseq
    %v1238 = vshrl.u32 %v1237, 7
    %v1239 = vsub.s32 1, %v1238
    %v1240 = vrot.slane %v228, %v1239
    %v1241 = vlaneseq
    %v1242 = vshrl.u32 %v1241, 7
    %v1243 = vsub.s32 1, %v1242
    %v1244 = vrot.slane %v229, %v1243
    %v1245 = vlaneseq
    %v1246 = vshrl.u32 %v1245, 7
    %v1247 = vsub.s32 1, %v1246
    %v1248 = vrot.slane %v230, %v1247
    %v1249 = vlaneseq
    %v1250 = vshrl.u32 %v1249, 7
    %v1251 = vsub.s32 1, %v1250
    %v1252 = vrot.slane %v231, %v1251
    %v1253 = vmul.f32 %v1235, %v1240
    %v1254 = vmul.f32 %v1235, %v1244
    %v1255 = vmul.f32 %v1235, %v1248
    %v1256 = vmul.f32 %v1235, %v1252
    %v1257 = vadd.f32 %v1229, %v1253
    %v1258 = vadd.f32 %v1230, %v1254
    %v1259 = vadd.f32 %v1231, %v1255
    %v1260 = vadd.f32 %v1232, %v1256
    %1261 = vset.pattern.permute.xlu0 34
    %1262 = vperm.xlu0 %1261, %v78
    %v1263 = vpop.permute.xlu0 %1262
    %v1265 = vlaneseq
    %v1266 = vshrl.u32 %v1265, 7
    %v1267 = vsub.s32 2, %v1266
    %v1268 = vrot.slane %v228, %v1267
    %v1269 = vlaneseq
    %v1270 = vshrl.u32 %v1269, 7
    %v1271 = vsub.s32 2, %v1270
    %v1272 = vrot.slane %v229, %v1271
    %v1273 = vlaneseq
    %v1274 = vshrl.u32 %v1273, 7
    %v1275 = vsub.s32 2, %v1274
    %v1276 = vrot.slane %v230, %v1275
    %v1277 = vlaneseq
    %v1278 = vshrl.u32 %v1277, 7
    %v1279 = vsub.s32 2, %v1278
    %v1280 = vrot.slane %v231, %v1279
    %v1281 = vmul.f32 %v1263, %v1268
    %v1282 = vmul.f32 %v1263, %v1272
    %v1283 = vmul.f32 %v1263, %v1276
    %v1284 = vmul.f32 %v1263, %v1280
    %v1285 = vadd.f32 %v1257, %v1281
    %v1286 = vadd.f32 %v1258, %v1282
    %v1287 = vadd.f32 %v1259, %v1283
    %v1288 = vadd.f32 %v1260, %v1284
    %1289 = vset.pattern.permute.xlu0 35
    %1290 = vperm.xlu0 %1289, %v78
    %v1291 = vpop.permute.xlu0 %1290
    %v1293 = vlaneseq
    %v1294 = vshrl.u32 %v1293, 7
    %v1295 = vsub.s32 3, %v1294
    %v1296 = vrot.slane %v228, %v1295
    %v1297 = vlaneseq
    %v1298 = vshrl.u32 %v1297, 7
    %v1299 = vsub.s32 3, %v1298
    %v1300 = vrot.slane %v229, %v1299
    %v1301 = vlaneseq
    %v1302 = vshrl.u32 %v1301, 7
    %v1303 = vsub.s32 3, %v1302
    %v1304 = vrot.slane %v230, %v1303
    %v1305 = vlaneseq
    %v1306 = vshrl.u32 %v1305, 7
    %v1307 = vsub.s32 3, %v1306
    %v1308 = vrot.slane %v231, %v1307
    %v1309 = vmul.f32 %v1291, %v1296
    %v1310 = vmul.f32 %v1291, %v1300
    %v1311 = vmul.f32 %v1291, %v1304
    %v1312 = vmul.f32 %v1291, %v1308
    %v1313 = vadd.f32 %v1285, %v1309
    %v1314 = vadd.f32 %v1286, %v1310
    %v1315 = vadd.f32 %v1287, %v1311
    %v1316 = vadd.f32 %v1288, %v1312
    %vm1317 = vcmask 1043456
    %v1318 = vsel %vm1317, %v1313, 0.0
    %v1319 = vsel %vm1317, %v1314, 0.0
    %v1320 = vadd.f32 %v1318, %v1319
    %1321 = vadd.xlane.f32.xlu0 %v1320
    %v1322 = vpop.xlane.xlu0 %1321
    %v1323 = vsel %vm1317, %v1315, 0.0
    %v1324 = vsel %vm1317, %v1316, 0.0
    %v1325 = vadd.f32 %v1323, %v1324
    %1326 = vadd.xlane.f32.xlu0 %v1325
    %v1327 = vpop.xlane.xlu0 %1326
    %v1328 = vmul.f32 %v1322, 0.00390625
    %v1329 = vmul.f32 %v1327, 0.00390625
    %v1330 = vsub.f32 %v1313, %v1328
    %v1331 = vsub.f32 %v1314, %v1328
    %v1332 = vsub.f32 %v1315, %v1329
    %v1333 = vsub.f32 %v1316, %v1329
    %v1334 = vmul.f32 %v1330, %v1330
    %v1335 = vmul.f32 %v1331, %v1331
    %v1336 = vmul.f32 %v1332, %v1332
    %v1337 = vmul.f32 %v1333, %v1333
    %v1338 = vsel %vm1317, %v1334, 0.0
    %v1339 = vsel %vm1317, %v1335, 0.0
    %v1340 = vadd.f32 %v1338, %v1339
    %1341 = vadd.xlane.f32.xlu0 %v1340
    %v1342 = vpop.xlane.xlu0 %1341
    %v1343 = vsel %vm1317, %v1336, 0.0
    %v1344 = vsel %vm1317, %v1337, 0.0
    %v1345 = vadd.f32 %v1343, %v1344
    %1346 = vadd.xlane.f32.xlu0 %v1345
    %v1347 = vpop.xlane.xlu0 %1346
    %v1348 = vmul.f32 %v1342, 0.00390625
    %v1349 = vmul.f32 %v1347, 0.00390625
    %v1350 = vadd.f32 %v1348, 1e-05
    %v1351 = vadd.f32 %v1349, 1e-05
    %v1352 = vrsqrt.pop %v1350
    %v1353 = vrsqrt.pop %v1351
    %v1354 = vmul.f32 %v1330, %v1352
    %v1355 = vmul.f32 %v1331, %v1352
    %v1356 = vmul.f32 %v1332, %v1353
    %v1357 = vmul.f32 %v1333, %v1353
    %v1358 = vmax.f32 %v1354, 0.0
    %v1359 = vmax.f32 %v1355, 0.0
    %v1360 = vmax.f32 %v1356, 0.0
    %v1361 = vmax.f32 %v1357, 0.0
    %v1362 = vld [vmem:[%s2] sm:$0xf]
    %1363 = vrot.lane.b32.xlu0 %v1358, 16
    %v1364 = vpop.permute.xlu0 %1363
    %1365 = vrot.lane.b32.xlu0 %v1360, 16
    %v1366 = vpop.permute.xlu0 %1365
    %1367 = vrot.lane.b32.xlu0 %v1359, 16
    %v1368 = vpop.permute.xlu0 %1367
    %1369 = vrot.lane.b32.xlu0 %v1361, 16
    %v1370 = vpop.permute.xlu0 %1369
    %v1371 = vsel %vm74, %v1364, %v1368
    %v1372 = vsel %vm74, %v1366, %v1370
    %v1373 = vsel %vm74, %v1368, %v1364
    %v1374 = vsel %vm74, %v1370, %v1366
    %1375 = vrot.lane.b32.xlu0 %v1358, 112
    %v1376 = vpop.permute.xlu0 %1375
    %1377 = vrot.lane.b32.xlu0 %v1360, 112
    %v1378 = vpop.permute.xlu0 %1377
    %1379 = vrot.lane.b32.xlu0 %v1359, 112
    %v1380 = vpop.permute.xlu0 %1379
    %1381 = vrot.lane.b32.xlu0 %v1361, 112
    %v1382 = vpop.permute.xlu0 %1381
    %v1383 = vsel %vm105, %v1376, %v1380
    %v1384 = vsel %vm105, %v1378, %v1382
    %v1385 = vsel %vm105, %v1380, %v1376
    %v1386 = vsel %vm105, %v1382, %v1378
    %v1387 = vsel %vm112, %v1383, %v1373
    %v1388 = vsel %vm113, %v1385, %v1371
    %v1389 = vsel %vm112, %v1384, %v1374
    %v1390 = vsel %vm113, %v1386, %v1372
    %v1391 = vsel %vm120, %v1373, %v1383
    %v1392 = vsel %vm121, %v1371, %v1385
    %v1393 = vsel %vm120, %v1374, %v1384
    %v1394 = vsel %vm121, %v1372, %v1386
    %1395 = vrot.lane.b32.xlu0 %v1387, 1
    %v1396 = vpop.permute.xlu0 %1395
    %1397 = vrot.lane.b32.xlu0 %v1389, 1
    %v1398 = vpop.permute.xlu0 %1397
    %1399 = vrot.lane.b32.xlu0 %v1388, 1
    %v1400 = vpop.permute.xlu0 %1399
    %1401 = vrot.lane.b32.xlu0 %v1390, 1
    %v1402 = vpop.permute.xlu0 %1401
    %v1403 = vsel %vm134, %v1396, %v1400
    %v1404 = vsel %vm134, %v1398, %v1402
    %v1405 = vsel %vm134, %v1400, %v1396
    %v1406 = vsel %vm134, %v1402, %v1398
    %1407 = vrot.lane.b32.xlu0 %v1387, 127
    %v1408 = vpop.permute.xlu0 %1407
    %1409 = vrot.lane.b32.xlu0 %v1389, 127
    %v1410 = vpop.permute.xlu0 %1409
    %1411 = vrot.lane.b32.xlu0 %v1388, 127
    %v1412 = vpop.permute.xlu0 %1411
    %1413 = vrot.lane.b32.xlu0 %v1390, 127
    %v1414 = vpop.permute.xlu0 %1413
    %v1415 = vsel %vm147, %v1408, %v1412
    %v1416 = vsel %vm147, %v1410, %v1414
    %v1417 = vsel %vm147, %v1412, %v1408
    %v1418 = vsel %vm147, %v1414, %v1410
    %v1419 = vsel %vm154, %v1415, %v1405
    %v1420 = vsel %vm155, %v1417, %v1403
    %v1421 = vsel %vm154, %v1416, %v1406
    %v1422 = vsel %vm155, %v1418, %v1404
    %v1423 = vsel %vm162, %v1405, %v1415
    %v1424 = vsel %vm163, %v1403, %v1417
    %v1425 = vsel %vm162, %v1406, %v1416
    %v1426 = vsel %vm163, %v1404, %v1418
    %1427 = vrot.lane.b32.xlu0 %v1358, 1
    %v1428 = vpop.permute.xlu0 %1427
    %1429 = vrot.lane.b32.xlu0 %v1360, 1
    %v1430 = vpop.permute.xlu0 %1429
    %1431 = vrot.lane.b32.xlu0 %v1359, 1
    %v1432 = vpop.permute.xlu0 %1431
    %1433 = vrot.lane.b32.xlu0 %v1361, 1
    %v1434 = vpop.permute.xlu0 %1433
    %v1435 = vsel %vm134, %v1428, %v1432
    %v1436 = vsel %vm134, %v1430, %v1434
    %v1437 = vsel %vm134, %v1432, %v1428
    %v1438 = vsel %vm134, %v1434, %v1430
    %1439 = vrot.lane.b32.xlu0 %v1358, 127
    %v1440 = vpop.permute.xlu0 %1439
    %1441 = vrot.lane.b32.xlu0 %v1360, 127
    %v1442 = vpop.permute.xlu0 %1441
    %1443 = vrot.lane.b32.xlu0 %v1359, 127
    %v1444 = vpop.permute.xlu0 %1443
    %1445 = vrot.lane.b32.xlu0 %v1361, 127
    %v1446 = vpop.permute.xlu0 %1445
    %v1447 = vsel %vm147, %v1440, %v1444
    %v1448 = vsel %vm147, %v1442, %v1446
    %v1449 = vsel %vm147, %v1444, %v1440
    %v1450 = vsel %vm147, %v1446, %v1442
    %v1451 = vsel %vm154, %v1447, %v1437
    %v1452 = vsel %vm155, %v1449, %v1435
    %v1453 = vsel %vm154, %v1448, %v1438
    %v1454 = vsel %vm155, %v1450, %v1436
    %v1455 = vsel %vm162, %v1437, %v1447
    %v1456 = vsel %vm163, %v1435, %v1449
    %v1457 = vsel %vm162, %v1438, %v1448
    %v1458 = vsel %vm163, %v1436, %v1450
    %1459 = vrot.lane.b32.xlu0 %v1391, 1
    %v1460 = vpop.permute.xlu0 %1459
    %1461 = vrot.lane.b32.xlu0 %v1393, 1
    %v1462 = vpop.permute.xlu0 %1461
    %1463 = vrot.lane.b32.xlu0 %v1392, 1
    %v1464 = vpop.permute.xlu0 %1463
    %1465 = vrot.lane.b32.xlu0 %v1394, 1
    %v1466 = vpop.permute.xlu0 %1465
    %v1467 = vsel %vm134, %v1460, %v1464
    %v1468 = vsel %vm134, %v1462, %v1466
    %v1469 = vsel %vm134, %v1464, %v1460
    %v1470 = vsel %vm134, %v1466, %v1462
    %1471 = vrot.lane.b32.xlu0 %v1391, 127
    %v1472 = vpop.permute.xlu0 %1471
    %1473 = vrot.lane.b32.xlu0 %v1393, 127
    %v1474 = vpop.permute.xlu0 %1473
    %1475 = vrot.lane.b32.xlu0 %v1392, 127
    %v1476 = vpop.permute.xlu0 %1475
    %1477 = vrot.lane.b32.xlu0 %v1394, 127
    %v1478 = vpop.permute.xlu0 %1477
    %v1479 = vsel %vm147, %v1472, %v1476
    %v1480 = vsel %vm147, %v1474, %v1478
    %v1481 = vsel %vm147, %v1476, %v1472
    %v1482 = vsel %vm147, %v1478, %v1474
    %v1483 = vsel %vm154, %v1479, %v1469
    %v1484 = vsel %vm155, %v1481, %v1467
    %v1485 = vsel %vm154, %v1480, %v1470
    %v1486 = vsel %vm155, %v1482, %v1468
    %v1487 = vsel %vm162, %v1469, %v1479
    %v1488 = vsel %vm163, %v1467, %v1481
    %v1489 = vsel %vm162, %v1470, %v1480
    %v1490 = vsel %vm163, %v1468, %v1482
    %1492 = vset.pattern.permute.xlu0 0
    %1493 = vperm.xlu0 %1492, %v1362
    %v1494 = vpop.permute.xlu0 %1493
    %v1496 = vlaneseq
    %v1497 = vshrl.u32 %v1496, 7
    %v1498 = vsub.s32 0, %v1497
    %v1499 = vrot.slane %v1419, %v1498
    %v1500 = vlaneseq
    %v1501 = vshrl.u32 %v1500, 7
    %v1502 = vsub.s32 0, %v1501
    %v1503 = vrot.slane %v1420, %v1502
    %v1504 = vlaneseq
    %v1505 = vshrl.u32 %v1504, 7
    %v1506 = vsub.s32 0, %v1505
    %v1507 = vrot.slane %v1421, %v1506
    %v1508 = vlaneseq
    %v1509 = vshrl.u32 %v1508, 7
    %v1510 = vsub.s32 0, %v1509
    %v1511 = vrot.slane %v1422, %v1510
    %v1512 = vmul.f32 %v1494, %v1499
    %v1513 = vmul.f32 %v1494, %v1503
    %v1514 = vmul.f32 %v1494, %v1507
    %v1515 = vmul.f32 %v1494, %v1511
    %1516 = vset.pattern.permute.xlu0 1
    %1517 = vperm.xlu0 %1516, %v1362
    %v1518 = vpop.permute.xlu0 %1517
    %v1520 = vlaneseq
    %v1521 = vshrl.u32 %v1520, 7
    %v1522 = vsub.s32 1, %v1521
    %v1523 = vrot.slane %v1419, %v1522
    %v1524 = vlaneseq
    %v1525 = vshrl.u32 %v1524, 7
    %v1526 = vsub.s32 1, %v1525
    %v1527 = vrot.slane %v1420, %v1526
    %v1528 = vlaneseq
    %v1529 = vshrl.u32 %v1528, 7
    %v1530 = vsub.s32 1, %v1529
    %v1531 = vrot.slane %v1421, %v1530
    %v1532 = vlaneseq
    %v1533 = vshrl.u32 %v1532, 7
    %v1534 = vsub.s32 1, %v1533
    %v1535 = vrot.slane %v1422, %v1534
    %v1536 = vmul.f32 %v1518, %v1523
    %v1537 = vmul.f32 %v1518, %v1527
    %v1538 = vmul.f32 %v1518, %v1531
    %v1539 = vmul.f32 %v1518, %v1535
    %v1540 = vadd.f32 %v1512, %v1536
    %v1541 = vadd.f32 %v1513, %v1537
    %v1542 = vadd.f32 %v1514, %v1538
    %v1543 = vadd.f32 %v1515, %v1539
    %1544 = vset.pattern.permute.xlu0 2
    %1545 = vperm.xlu0 %1544, %v1362
    %v1546 = vpop.permute.xlu0 %1545
    %v1548 = vlaneseq
    %v1549 = vshrl.u32 %v1548, 7
    %v1550 = vsub.s32 2, %v1549
    %v1551 = vrot.slane %v1419, %v1550
    %v1552 = vlaneseq
    %v1553 = vshrl.u32 %v1552, 7
    %v1554 = vsub.s32 2, %v1553
    %v1555 = vrot.slane %v1420, %v1554
    %v1556 = vlaneseq
    %v1557 = vshrl.u32 %v1556, 7
    %v1558 = vsub.s32 2, %v1557
    %v1559 = vrot.slane %v1421, %v1558
    %v1560 = vlaneseq
    %v1561 = vshrl.u32 %v1560, 7
    %v1562 = vsub.s32 2, %v1561
    %v1563 = vrot.slane %v1422, %v1562
    %v1564 = vmul.f32 %v1546, %v1551
    %v1565 = vmul.f32 %v1546, %v1555
    %v1566 = vmul.f32 %v1546, %v1559
    %v1567 = vmul.f32 %v1546, %v1563
    %v1568 = vadd.f32 %v1540, %v1564
    %v1569 = vadd.f32 %v1541, %v1565
    %v1570 = vadd.f32 %v1542, %v1566
    %v1571 = vadd.f32 %v1543, %v1567
    %1572 = vset.pattern.permute.xlu0 3
    %1573 = vperm.xlu0 %1572, %v1362
    %v1574 = vpop.permute.xlu0 %1573
    %v1576 = vlaneseq
    %v1577 = vshrl.u32 %v1576, 7
    %v1578 = vsub.s32 3, %v1577
    %v1579 = vrot.slane %v1419, %v1578
    %v1580 = vlaneseq
    %v1581 = vshrl.u32 %v1580, 7
    %v1582 = vsub.s32 3, %v1581
    %v1583 = vrot.slane %v1420, %v1582
    %v1584 = vlaneseq
    %v1585 = vshrl.u32 %v1584, 7
    %v1586 = vsub.s32 3, %v1585
    %v1587 = vrot.slane %v1421, %v1586
    %v1588 = vlaneseq
    %v1589 = vshrl.u32 %v1588, 7
    %v1590 = vsub.s32 3, %v1589
    %v1591 = vrot.slane %v1422, %v1590
    %v1592 = vmul.f32 %v1574, %v1579
    %v1593 = vmul.f32 %v1574, %v1583
    %v1594 = vmul.f32 %v1574, %v1587
    %v1595 = vmul.f32 %v1574, %v1591
    %v1596 = vadd.f32 %v1568, %v1592
    %v1597 = vadd.f32 %v1569, %v1593
    %v1598 = vadd.f32 %v1570, %v1594
    %v1599 = vadd.f32 %v1571, %v1595
    %1600 = vset.pattern.permute.xlu0 4
    %1601 = vperm.xlu0 %1600, %v1362
    %v1602 = vpop.permute.xlu0 %1601
    %v1604 = vlaneseq
    %v1605 = vshrl.u32 %v1604, 7
    %v1606 = vsub.s32 0, %v1605
    %v1607 = vrot.slane %v1387, %v1606
    %v1608 = vlaneseq
    %v1609 = vshrl.u32 %v1608, 7
    %v1610 = vsub.s32 0, %v1609
    %v1611 = vrot.slane %v1388, %v1610
    %v1612 = vlaneseq
    %v1613 = vshrl.u32 %v1612, 7
    %v1614 = vsub.s32 0, %v1613
    %v1615 = vrot.slane %v1389, %v1614
    %v1616 = vlaneseq
    %v1617 = vshrl.u32 %v1616, 7
    %v1618 = vsub.s32 0, %v1617
    %v1619 = vrot.slane %v1390, %v1618
    %v1620 = vmul.f32 %v1602, %v1607
    %v1621 = vmul.f32 %v1602, %v1611
    %v1622 = vmul.f32 %v1602, %v1615
    %v1623 = vmul.f32 %v1602, %v1619
    %v1624 = vadd.f32 %v1596, %v1620
    %v1625 = vadd.f32 %v1597, %v1621
    %v1626 = vadd.f32 %v1598, %v1622
    %v1627 = vadd.f32 %v1599, %v1623
    %1628 = vset.pattern.permute.xlu0 5
    %1629 = vperm.xlu0 %1628, %v1362
    %v1630 = vpop.permute.xlu0 %1629
    %v1632 = vlaneseq
    %v1633 = vshrl.u32 %v1632, 7
    %v1634 = vsub.s32 1, %v1633
    %v1635 = vrot.slane %v1387, %v1634
    %v1636 = vlaneseq
    %v1637 = vshrl.u32 %v1636, 7
    %v1638 = vsub.s32 1, %v1637
    %v1639 = vrot.slane %v1388, %v1638
    %v1640 = vlaneseq
    %v1641 = vshrl.u32 %v1640, 7
    %v1642 = vsub.s32 1, %v1641
    %v1643 = vrot.slane %v1389, %v1642
    %v1644 = vlaneseq
    %v1645 = vshrl.u32 %v1644, 7
    %v1646 = vsub.s32 1, %v1645
    %v1647 = vrot.slane %v1390, %v1646
    %v1648 = vmul.f32 %v1630, %v1635
    %v1649 = vmul.f32 %v1630, %v1639
    %v1650 = vmul.f32 %v1630, %v1643
    %v1651 = vmul.f32 %v1630, %v1647
    %v1652 = vadd.f32 %v1624, %v1648
    %v1653 = vadd.f32 %v1625, %v1649
    %v1654 = vadd.f32 %v1626, %v1650
    %v1655 = vadd.f32 %v1627, %v1651
    %1656 = vset.pattern.permute.xlu0 6
    %1657 = vperm.xlu0 %1656, %v1362
    %v1658 = vpop.permute.xlu0 %1657
    %v1660 = vlaneseq
    %v1661 = vshrl.u32 %v1660, 7
    %v1662 = vsub.s32 2, %v1661
    %v1663 = vrot.slane %v1387, %v1662
    %v1664 = vlaneseq
    %v1665 = vshrl.u32 %v1664, 7
    %v1666 = vsub.s32 2, %v1665
    %v1667 = vrot.slane %v1388, %v1666
    %v1668 = vlaneseq
    %v1669 = vshrl.u32 %v1668, 7
    %v1670 = vsub.s32 2, %v1669
    %v1671 = vrot.slane %v1389, %v1670
    %v1672 = vlaneseq
    %v1673 = vshrl.u32 %v1672, 7
    %v1674 = vsub.s32 2, %v1673
    %v1675 = vrot.slane %v1390, %v1674
    %v1676 = vmul.f32 %v1658, %v1663
    %v1677 = vmul.f32 %v1658, %v1667
    %v1678 = vmul.f32 %v1658, %v1671
    %v1679 = vmul.f32 %v1658, %v1675
    %v1680 = vadd.f32 %v1652, %v1676
    %v1681 = vadd.f32 %v1653, %v1677
    %v1682 = vadd.f32 %v1654, %v1678
    %v1683 = vadd.f32 %v1655, %v1679
    %1684 = vset.pattern.permute.xlu0 7
    %1685 = vperm.xlu0 %1684, %v1362
    %v1686 = vpop.permute.xlu0 %1685
    %v1688 = vlaneseq
    %v1689 = vshrl.u32 %v1688, 7
    %v1690 = vsub.s32 3, %v1689
    %v1691 = vrot.slane %v1387, %v1690
    %v1692 = vlaneseq
    %v1693 = vshrl.u32 %v1692, 7
    %v1694 = vsub.s32 3, %v1693
    %v1695 = vrot.slane %v1388, %v1694
    %v1696 = vlaneseq
    %v1697 = vshrl.u32 %v1696, 7
    %v1698 = vsub.s32 3, %v1697
    %v1699 = vrot.slane %v1389, %v1698
    %v1700 = vlaneseq
    %v1701 = vshrl.u32 %v1700, 7
    %v1702 = vsub.s32 3, %v1701
    %v1703 = vrot.slane %v1390, %v1702
    %v1704 = vmul.f32 %v1686, %v1691
    %v1705 = vmul.f32 %v1686, %v1695
    %v1706 = vmul.f32 %v1686, %v1699
    %v1707 = vmul.f32 %v1686, %v1703
    %v1708 = vadd.f32 %v1680, %v1704
    %v1709 = vadd.f32 %v1681, %v1705
    %v1710 = vadd.f32 %v1682, %v1706
    %v1711 = vadd.f32 %v1683, %v1707
    %1712 = vset.pattern.permute.xlu0 8
    %1713 = vperm.xlu0 %1712, %v1362
    %v1714 = vpop.permute.xlu0 %1713
    %v1716 = vlaneseq
    %v1717 = vshrl.u32 %v1716, 7
    %v1718 = vsub.s32 0, %v1717
    %v1719 = vrot.slane %v1423, %v1718
    %v1720 = vlaneseq
    %v1721 = vshrl.u32 %v1720, 7
    %v1722 = vsub.s32 0, %v1721
    %v1723 = vrot.slane %v1424, %v1722
    %v1724 = vlaneseq
    %v1725 = vshrl.u32 %v1724, 7
    %v1726 = vsub.s32 0, %v1725
    %v1727 = vrot.slane %v1425, %v1726
    %v1728 = vlaneseq
    %v1729 = vshrl.u32 %v1728, 7
    %v1730 = vsub.s32 0, %v1729
    %v1731 = vrot.slane %v1426, %v1730
    %v1732 = vmul.f32 %v1714, %v1719
    %v1733 = vmul.f32 %v1714, %v1723
    %v1734 = vmul.f32 %v1714, %v1727
    %v1735 = vmul.f32 %v1714, %v1731
    %v1736 = vadd.f32 %v1708, %v1732
    %v1737 = vadd.f32 %v1709, %v1733
    %v1738 = vadd.f32 %v1710, %v1734
    %v1739 = vadd.f32 %v1711, %v1735
    %1740 = vset.pattern.permute.xlu0 9
    %1741 = vperm.xlu0 %1740, %v1362
    %v1742 = vpop.permute.xlu0 %1741
    %v1744 = vlaneseq
    %v1745 = vshrl.u32 %v1744, 7
    %v1746 = vsub.s32 1, %v1745
    %v1747 = vrot.slane %v1423, %v1746
    %v1748 = vlaneseq
    %v1749 = vshrl.u32 %v1748, 7
    %v1750 = vsub.s32 1, %v1749
    %v1751 = vrot.slane %v1424, %v1750
    %v1752 = vlaneseq
    %v1753 = vshrl.u32 %v1752, 7
    %v1754 = vsub.s32 1, %v1753
    %v1755 = vrot.slane %v1425, %v1754
    %v1756 = vlaneseq
    %v1757 = vshrl.u32 %v1756, 7
    %v1758 = vsub.s32 1, %v1757
    %v1759 = vrot.slane %v1426, %v1758
    %v1760 = vmul.f32 %v1742, %v1747
    %v1761 = vmul.f32 %v1742, %v1751
    %v1762 = vmul.f32 %v1742, %v1755
    %v1763 = vmul.f32 %v1742, %v1759
    %v1764 = vadd.f32 %v1736, %v1760
    %v1765 = vadd.f32 %v1737, %v1761
    %v1766 = vadd.f32 %v1738, %v1762
    %v1767 = vadd.f32 %v1739, %v1763
    %1768 = vset.pattern.permute.xlu0 10
    %1769 = vperm.xlu0 %1768, %v1362
    %v1770 = vpop.permute.xlu0 %1769
    %v1772 = vlaneseq
    %v1773 = vshrl.u32 %v1772, 7
    %v1774 = vsub.s32 2, %v1773
    %v1775 = vrot.slane %v1423, %v1774
    %v1776 = vlaneseq
    %v1777 = vshrl.u32 %v1776, 7
    %v1778 = vsub.s32 2, %v1777
    %v1779 = vrot.slane %v1424, %v1778
    %v1780 = vlaneseq
    %v1781 = vshrl.u32 %v1780, 7
    %v1782 = vsub.s32 2, %v1781
    %v1783 = vrot.slane %v1425, %v1782
    %v1784 = vlaneseq
    %v1785 = vshrl.u32 %v1784, 7
    %v1786 = vsub.s32 2, %v1785
    %v1787 = vrot.slane %v1426, %v1786
    %v1788 = vmul.f32 %v1770, %v1775
    %v1789 = vmul.f32 %v1770, %v1779
    %v1790 = vmul.f32 %v1770, %v1783
    %v1791 = vmul.f32 %v1770, %v1787
    %v1792 = vadd.f32 %v1764, %v1788
    %v1793 = vadd.f32 %v1765, %v1789
    %v1794 = vadd.f32 %v1766, %v1790
    %v1795 = vadd.f32 %v1767, %v1791
    %1796 = vset.pattern.permute.xlu0 11
    %1797 = vperm.xlu0 %1796, %v1362
    %v1798 = vpop.permute.xlu0 %1797
    %v1800 = vlaneseq
    %v1801 = vshrl.u32 %v1800, 7
    %v1802 = vsub.s32 3, %v1801
    %v1803 = vrot.slane %v1423, %v1802
    %v1804 = vlaneseq
    %v1805 = vshrl.u32 %v1804, 7
    %v1806 = vsub.s32 3, %v1805
    %v1807 = vrot.slane %v1424, %v1806
    %v1808 = vlaneseq
    %v1809 = vshrl.u32 %v1808, 7
    %v1810 = vsub.s32 3, %v1809
    %v1811 = vrot.slane %v1425, %v1810
    %v1812 = vlaneseq
    %v1813 = vshrl.u32 %v1812, 7
    %v1814 = vsub.s32 3, %v1813
    %v1815 = vrot.slane %v1426, %v1814
    %v1816 = vmul.f32 %v1798, %v1803
    %v1817 = vmul.f32 %v1798, %v1807
    %v1818 = vmul.f32 %v1798, %v1811
    %v1819 = vmul.f32 %v1798, %v1815
    %v1820 = vadd.f32 %v1792, %v1816
    %v1821 = vadd.f32 %v1793, %v1817
    %v1822 = vadd.f32 %v1794, %v1818
    %v1823 = vadd.f32 %v1795, %v1819
    %1824 = vset.pattern.permute.xlu0 12
    %1825 = vperm.xlu0 %1824, %v1362
    %v1826 = vpop.permute.xlu0 %1825
    %v1828 = vlaneseq
    %v1829 = vshrl.u32 %v1828, 7
    %v1830 = vsub.s32 0, %v1829
    %v1831 = vrot.slane %v1451, %v1830
    %v1832 = vlaneseq
    %v1833 = vshrl.u32 %v1832, 7
    %v1834 = vsub.s32 0, %v1833
    %v1835 = vrot.slane %v1452, %v1834
    %v1836 = vlaneseq
    %v1837 = vshrl.u32 %v1836, 7
    %v1838 = vsub.s32 0, %v1837
    %v1839 = vrot.slane %v1453, %v1838
    %v1840 = vlaneseq
    %v1841 = vshrl.u32 %v1840, 7
    %v1842 = vsub.s32 0, %v1841
    %v1843 = vrot.slane %v1454, %v1842
    %v1844 = vmul.f32 %v1826, %v1831
    %v1845 = vmul.f32 %v1826, %v1835
    %v1846 = vmul.f32 %v1826, %v1839
    %v1847 = vmul.f32 %v1826, %v1843
    %v1848 = vadd.f32 %v1820, %v1844
    %v1849 = vadd.f32 %v1821, %v1845
    %v1850 = vadd.f32 %v1822, %v1846
    %v1851 = vadd.f32 %v1823, %v1847
    %1852 = vset.pattern.permute.xlu0 13
    %1853 = vperm.xlu0 %1852, %v1362
    %v1854 = vpop.permute.xlu0 %1853
    %v1856 = vlaneseq
    %v1857 = vshrl.u32 %v1856, 7
    %v1858 = vsub.s32 1, %v1857
    %v1859 = vrot.slane %v1451, %v1858
    %v1860 = vlaneseq
    %v1861 = vshrl.u32 %v1860, 7
    %v1862 = vsub.s32 1, %v1861
    %v1863 = vrot.slane %v1452, %v1862
    %v1864 = vlaneseq
    %v1865 = vshrl.u32 %v1864, 7
    %v1866 = vsub.s32 1, %v1865
    %v1867 = vrot.slane %v1453, %v1866
    %v1868 = vlaneseq
    %v1869 = vshrl.u32 %v1868, 7
    %v1870 = vsub.s32 1, %v1869
    %v1871 = vrot.slane %v1454, %v1870
    %v1872 = vmul.f32 %v1854, %v1859
    %v1873 = vmul.f32 %v1854, %v1863
    %v1874 = vmul.f32 %v1854, %v1867
    %v1875 = vmul.f32 %v1854, %v1871
    %v1876 = vadd.f32 %v1848, %v1872
    %v1877 = vadd.f32 %v1849, %v1873
    %v1878 = vadd.f32 %v1850, %v1874
    %v1879 = vadd.f32 %v1851, %v1875
    %1880 = vset.pattern.permute.xlu0 14
    %1881 = vperm.xlu0 %1880, %v1362
    %v1882 = vpop.permute.xlu0 %1881
    %v1884 = vlaneseq
    %v1885 = vshrl.u32 %v1884, 7
    %v1886 = vsub.s32 2, %v1885
    %v1887 = vrot.slane %v1451, %v1886
    %v1888 = vlaneseq
    %v1889 = vshrl.u32 %v1888, 7
    %v1890 = vsub.s32 2, %v1889
    %v1891 = vrot.slane %v1452, %v1890
    %v1892 = vlaneseq
    %v1893 = vshrl.u32 %v1892, 7
    %v1894 = vsub.s32 2, %v1893
    %v1895 = vrot.slane %v1453, %v1894
    %v1896 = vlaneseq
    %v1897 = vshrl.u32 %v1896, 7
    %v1898 = vsub.s32 2, %v1897
    %v1899 = vrot.slane %v1454, %v1898
    %v1900 = vmul.f32 %v1882, %v1887
    %v1901 = vmul.f32 %v1882, %v1891
    %v1902 = vmul.f32 %v1882, %v1895
    %v1903 = vmul.f32 %v1882, %v1899
    %v1904 = vadd.f32 %v1876, %v1900
    %v1905 = vadd.f32 %v1877, %v1901
    %v1906 = vadd.f32 %v1878, %v1902
    %v1907 = vadd.f32 %v1879, %v1903
    %1908 = vset.pattern.permute.xlu0 15
    %1909 = vperm.xlu0 %1908, %v1362
    %v1910 = vpop.permute.xlu0 %1909
    %v1912 = vlaneseq
    %v1913 = vshrl.u32 %v1912, 7
    %v1914 = vsub.s32 3, %v1913
    %v1915 = vrot.slane %v1451, %v1914
    %v1916 = vlaneseq
    %v1917 = vshrl.u32 %v1916, 7
    %v1918 = vsub.s32 3, %v1917
    %v1919 = vrot.slane %v1452, %v1918
    %v1920 = vlaneseq
    %v1921 = vshrl.u32 %v1920, 7
    %v1922 = vsub.s32 3, %v1921
    %v1923 = vrot.slane %v1453, %v1922
    %v1924 = vlaneseq
    %v1925 = vshrl.u32 %v1924, 7
    %v1926 = vsub.s32 3, %v1925
    %v1927 = vrot.slane %v1454, %v1926
    %v1928 = vmul.f32 %v1910, %v1915
    %v1929 = vmul.f32 %v1910, %v1919
    %v1930 = vmul.f32 %v1910, %v1923
    %v1931 = vmul.f32 %v1910, %v1927
    %v1932 = vadd.f32 %v1904, %v1928
    %v1933 = vadd.f32 %v1905, %v1929
    %v1934 = vadd.f32 %v1906, %v1930
    %v1935 = vadd.f32 %v1907, %v1931
    %1936 = vset.pattern.permute.xlu0 16
    %1937 = vperm.xlu0 %1936, %v1362
    %v1938 = vpop.permute.xlu0 %1937
    %v1940 = vlaneseq
    %v1941 = vshrl.u32 %v1940, 7
    %v1942 = vsub.s32 0, %v1941
    %v1943 = vrot.slane %v1358, %v1942
    %v1944 = vlaneseq
    %v1945 = vshrl.u32 %v1944, 7
    %v1946 = vsub.s32 0, %v1945
    %v1947 = vrot.slane %v1359, %v1946
    %v1948 = vlaneseq
    %v1949 = vshrl.u32 %v1948, 7
    %v1950 = vsub.s32 0, %v1949
    %v1951 = vrot.slane %v1360, %v1950
    %v1952 = vlaneseq
    %v1953 = vshrl.u32 %v1952, 7
    %v1954 = vsub.s32 0, %v1953
    %v1955 = vrot.slane %v1361, %v1954
    %v1956 = vmul.f32 %v1938, %v1943
    %v1957 = vmul.f32 %v1938, %v1947
    %v1958 = vmul.f32 %v1938, %v1951
    %v1959 = vmul.f32 %v1938, %v1955
    %v1960 = vadd.f32 %v1932, %v1956
    %v1961 = vadd.f32 %v1933, %v1957
    %v1962 = vadd.f32 %v1934, %v1958
    %v1963 = vadd.f32 %v1935, %v1959
    %1964 = vset.pattern.permute.xlu0 17
    %1965 = vperm.xlu0 %1964, %v1362
    %v1966 = vpop.permute.xlu0 %1965
    %v1968 = vlaneseq
    %v1969 = vshrl.u32 %v1968, 7
    %v1970 = vsub.s32 1, %v1969
    %v1971 = vrot.slane %v1358, %v1970
    %v1972 = vlaneseq
    %v1973 = vshrl.u32 %v1972, 7
    %v1974 = vsub.s32 1, %v1973
    %v1975 = vrot.slane %v1359, %v1974
    %v1976 = vlaneseq
    %v1977 = vshrl.u32 %v1976, 7
    %v1978 = vsub.s32 1, %v1977
    %v1979 = vrot.slane %v1360, %v1978
    %v1980 = vlaneseq
    %v1981 = vshrl.u32 %v1980, 7
    %v1982 = vsub.s32 1, %v1981
    %v1983 = vrot.slane %v1361, %v1982
    %v1984 = vmul.f32 %v1966, %v1971
    %v1985 = vmul.f32 %v1966, %v1975
    %v1986 = vmul.f32 %v1966, %v1979
    %v1987 = vmul.f32 %v1966, %v1983
    %v1988 = vadd.f32 %v1960, %v1984
    %v1989 = vadd.f32 %v1961, %v1985
    %v1990 = vadd.f32 %v1962, %v1986
    %v1991 = vadd.f32 %v1963, %v1987
    %1992 = vset.pattern.permute.xlu0 18
    %1993 = vperm.xlu0 %1992, %v1362
    %v1994 = vpop.permute.xlu0 %1993
    %v1996 = vlaneseq
    %v1997 = vshrl.u32 %v1996, 7
    %v1998 = vsub.s32 2, %v1997
    %v1999 = vrot.slane %v1358, %v1998
    %v2000 = vlaneseq
    %v2001 = vshrl.u32 %v2000, 7
    %v2002 = vsub.s32 2, %v2001
    %v2003 = vrot.slane %v1359, %v2002
    %v2004 = vlaneseq
    %v2005 = vshrl.u32 %v2004, 7
    %v2006 = vsub.s32 2, %v2005
    %v2007 = vrot.slane %v1360, %v2006
    %v2008 = vlaneseq
    %v2009 = vshrl.u32 %v2008, 7
    %v2010 = vsub.s32 2, %v2009
    %v2011 = vrot.slane %v1361, %v2010
    %v2012 = vmul.f32 %v1994, %v1999
    %v2013 = vmul.f32 %v1994, %v2003
    %v2014 = vmul.f32 %v1994, %v2007
    %v2015 = vmul.f32 %v1994, %v2011
    %v2016 = vadd.f32 %v1988, %v2012
    %v2017 = vadd.f32 %v1989, %v2013
    %v2018 = vadd.f32 %v1990, %v2014
    %v2019 = vadd.f32 %v1991, %v2015
    %2020 = vset.pattern.permute.xlu0 19
    %2021 = vperm.xlu0 %2020, %v1362
    %v2022 = vpop.permute.xlu0 %2021
    %v2024 = vlaneseq
    %v2025 = vshrl.u32 %v2024, 7
    %v2026 = vsub.s32 3, %v2025
    %v2027 = vrot.slane %v1358, %v2026
    %v2028 = vlaneseq
    %v2029 = vshrl.u32 %v2028, 7
    %v2030 = vsub.s32 3, %v2029
    %v2031 = vrot.slane %v1359, %v2030
    %v2032 = vlaneseq
    %v2033 = vshrl.u32 %v2032, 7
    %v2034 = vsub.s32 3, %v2033
    %v2035 = vrot.slane %v1360, %v2034
    %v2036 = vlaneseq
    %v2037 = vshrl.u32 %v2036, 7
    %v2038 = vsub.s32 3, %v2037
    %v2039 = vrot.slane %v1361, %v2038
    %v2040 = vmul.f32 %v2022, %v2027
    %v2041 = vmul.f32 %v2022, %v2031
    %v2042 = vmul.f32 %v2022, %v2035
    %v2043 = vmul.f32 %v2022, %v2039
    %v2044 = vadd.f32 %v2016, %v2040
    %v2045 = vadd.f32 %v2017, %v2041
    %v2046 = vadd.f32 %v2018, %v2042
    %v2047 = vadd.f32 %v2019, %v2043
    %2048 = vset.pattern.permute.xlu0 20
    %2049 = vperm.xlu0 %2048, %v1362
    %v2050 = vpop.permute.xlu0 %2049
    %v2052 = vlaneseq
    %v2053 = vshrl.u32 %v2052, 7
    %v2054 = vsub.s32 0, %v2053
    %v2055 = vrot.slane %v1455, %v2054
    %v2056 = vlaneseq
    %v2057 = vshrl.u32 %v2056, 7
    %v2058 = vsub.s32 0, %v2057
    %v2059 = vrot.slane %v1456, %v2058
    %v2060 = vlaneseq
    %v2061 = vshrl.u32 %v2060, 7
    %v2062 = vsub.s32 0, %v2061
    %v2063 = vrot.slane %v1457, %v2062
    %v2064 = vlaneseq
    %v2065 = vshrl.u32 %v2064, 7
    %v2066 = vsub.s32 0, %v2065
    %v2067 = vrot.slane %v1458, %v2066
    %v2068 = vmul.f32 %v2050, %v2055
    %v2069 = vmul.f32 %v2050, %v2059
    %v2070 = vmul.f32 %v2050, %v2063
    %v2071 = vmul.f32 %v2050, %v2067
    %v2072 = vadd.f32 %v2044, %v2068
    %v2073 = vadd.f32 %v2045, %v2069
    %v2074 = vadd.f32 %v2046, %v2070
    %v2075 = vadd.f32 %v2047, %v2071
    %2076 = vset.pattern.permute.xlu0 21
    %2077 = vperm.xlu0 %2076, %v1362
    %v2078 = vpop.permute.xlu0 %2077
    %v2080 = vlaneseq
    %v2081 = vshrl.u32 %v2080, 7
    %v2082 = vsub.s32 1, %v2081
    %v2083 = vrot.slane %v1455, %v2082
    %v2084 = vlaneseq
    %v2085 = vshrl.u32 %v2084, 7
    %v2086 = vsub.s32 1, %v2085
    %v2087 = vrot.slane %v1456, %v2086
    %v2088 = vlaneseq
    %v2089 = vshrl.u32 %v2088, 7
    %v2090 = vsub.s32 1, %v2089
    %v2091 = vrot.slane %v1457, %v2090
    %v2092 = vlaneseq
    %v2093 = vshrl.u32 %v2092, 7
    %v2094 = vsub.s32 1, %v2093
    %v2095 = vrot.slane %v1458, %v2094
    %v2096 = vmul.f32 %v2078, %v2083
    %v2097 = vmul.f32 %v2078, %v2087
    %v2098 = vmul.f32 %v2078, %v2091
    %v2099 = vmul.f32 %v2078, %v2095
    %v2100 = vadd.f32 %v2072, %v2096
    %v2101 = vadd.f32 %v2073, %v2097
    %v2102 = vadd.f32 %v2074, %v2098
    %v2103 = vadd.f32 %v2075, %v2099
    %2104 = vset.pattern.permute.xlu0 22
    %2105 = vperm.xlu0 %2104, %v1362
    %v2106 = vpop.permute.xlu0 %2105
    %v2108 = vlaneseq
    %v2109 = vshrl.u32 %v2108, 7
    %v2110 = vsub.s32 2, %v2109
    %v2111 = vrot.slane %v1455, %v2110
    %v2112 = vlaneseq
    %v2113 = vshrl.u32 %v2112, 7
    %v2114 = vsub.s32 2, %v2113
    %v2115 = vrot.slane %v1456, %v2114
    %v2116 = vlaneseq
    %v2117 = vshrl.u32 %v2116, 7
    %v2118 = vsub.s32 2, %v2117
    %v2119 = vrot.slane %v1457, %v2118
    %v2120 = vlaneseq
    %v2121 = vshrl.u32 %v2120, 7
    %v2122 = vsub.s32 2, %v2121
    %v2123 = vrot.slane %v1458, %v2122
    %v2124 = vmul.f32 %v2106, %v2111
    %v2125 = vmul.f32 %v2106, %v2115
    %v2126 = vmul.f32 %v2106, %v2119
    %v2127 = vmul.f32 %v2106, %v2123
    %v2128 = vadd.f32 %v2100, %v2124
    %v2129 = vadd.f32 %v2101, %v2125
    %v2130 = vadd.f32 %v2102, %v2126
    %v2131 = vadd.f32 %v2103, %v2127
    %2132 = vset.pattern.permute.xlu0 23
    %2133 = vperm.xlu0 %2132, %v1362
    %v2134 = vpop.permute.xlu0 %2133
    %v2136 = vlaneseq
    %v2137 = vshrl.u32 %v2136, 7
    %v2138 = vsub.s32 3, %v2137
    %v2139 = vrot.slane %v1455, %v2138
    %v2140 = vlaneseq
    %v2141 = vshrl.u32 %v2140, 7
    %v2142 = vsub.s32 3, %v2141
    %v2143 = vrot.slane %v1456, %v2142
    %v2144 = vlaneseq
    %v2145 = vshrl.u32 %v2144, 7
    %v2146 = vsub.s32 3, %v2145
    %v2147 = vrot.slane %v1457, %v2146
    %v2148 = vlaneseq
    %v2149 = vshrl.u32 %v2148, 7
    %v2150 = vsub.s32 3, %v2149
    %v2151 = vrot.slane %v1458, %v2150
    %v2152 = vmul.f32 %v2134, %v2139
    %v2153 = vmul.f32 %v2134, %v2143
    %v2154 = vmul.f32 %v2134, %v2147
    %v2155 = vmul.f32 %v2134, %v2151
    %v2156 = vadd.f32 %v2128, %v2152
    %v2157 = vadd.f32 %v2129, %v2153
    %v2158 = vadd.f32 %v2130, %v2154
    %v2159 = vadd.f32 %v2131, %v2155
    %2160 = vset.pattern.permute.xlu0 24
    %2161 = vperm.xlu0 %2160, %v1362
    %v2162 = vpop.permute.xlu0 %2161
    %v2164 = vlaneseq
    %v2165 = vshrl.u32 %v2164, 7
    %v2166 = vsub.s32 0, %v2165
    %v2167 = vrot.slane %v1483, %v2166
    %v2168 = vlaneseq
    %v2169 = vshrl.u32 %v2168, 7
    %v2170 = vsub.s32 0, %v2169
    %v2171 = vrot.slane %v1484, %v2170
    %v2172 = vlaneseq
    %v2173 = vshrl.u32 %v2172, 7
    %v2174 = vsub.s32 0, %v2173
    %v2175 = vrot.slane %v1485, %v2174
    %v2176 = vlaneseq
    %v2177 = vshrl.u32 %v2176, 7
    %v2178 = vsub.s32 0, %v2177
    %v2179 = vrot.slane %v1486, %v2178
    %v2180 = vmul.f32 %v2162, %v2167
    %v2181 = vmul.f32 %v2162, %v2171
    %v2182 = vmul.f32 %v2162, %v2175
    %v2183 = vmul.f32 %v2162, %v2179
    %v2184 = vadd.f32 %v2156, %v2180
    %v2185 = vadd.f32 %v2157, %v2181
    %v2186 = vadd.f32 %v2158, %v2182
    %v2187 = vadd.f32 %v2159, %v2183
    %2188 = vset.pattern.permute.xlu0 25
    %2189 = vperm.xlu0 %2188, %v1362
    %v2190 = vpop.permute.xlu0 %2189
    %v2192 = vlaneseq
    %v2193 = vshrl.u32 %v2192, 7
    %v2194 = vsub.s32 1, %v2193
    %v2195 = vrot.slane %v1483, %v2194
    %v2196 = vlaneseq
    %v2197 = vshrl.u32 %v2196, 7
    %v2198 = vsub.s32 1, %v2197
    %v2199 = vrot.slane %v1484, %v2198
    %v2200 = vlaneseq
    %v2201 = vshrl.u32 %v2200, 7
    %v2202 = vsub.s32 1, %v2201
    %v2203 = vrot.slane %v1485, %v2202
    %v2204 = vlaneseq
    %v2205 = vshrl.u32 %v2204, 7
    %v2206 = vsub.s32 1, %v2205
    %v2207 = vrot.slane %v1486, %v2206
    %v2208 = vmul.f32 %v2190, %v2195
    %v2209 = vmul.f32 %v2190, %v2199
    %v2210 = vmul.f32 %v2190, %v2203
    %v2211 = vmul.f32 %v2190, %v2207
    %v2212 = vadd.f32 %v2184, %v2208
    %v2213 = vadd.f32 %v2185, %v2209
    %v2214 = vadd.f32 %v2186, %v2210
    %v2215 = vadd.f32 %v2187, %v2211
    %2216 = vset.pattern.permute.xlu0 26
    %2217 = vperm.xlu0 %2216, %v1362
    %v2218 = vpop.permute.xlu0 %2217
    %v2220 = vlaneseq
    %v2221 = vshrl.u32 %v2220, 7
    %v2222 = vsub.s32 2, %v2221
    %v2223 = vrot.slane %v1483, %v2222
    %v2224 = vlaneseq
    %v2225 = vshrl.u32 %v2224, 7
    %v2226 = vsub.s32 2, %v2225
    %v2227 = vrot.slane %v1484, %v2226
    %v2228 = vlaneseq
    %v2229 = vshrl.u32 %v2228, 7
    %v2230 = vsub.s32 2, %v2229
    %v2231 = vrot.slane %v1485, %v2230
    %v2232 = vlaneseq
    %v2233 = vshrl.u32 %v2232, 7
    %v2234 = vsub.s32 2, %v2233
    %v2235 = vrot.slane %v1486, %v2234
    %v2236 = vmul.f32 %v2218, %v2223
    %v2237 = vmul.f32 %v2218, %v2227
    %v2238 = vmul.f32 %v2218, %v2231
    %v2239 = vmul.f32 %v2218, %v2235
    %v2240 = vadd.f32 %v2212, %v2236
    %v2241 = vadd.f32 %v2213, %v2237
    %v2242 = vadd.f32 %v2214, %v2238
    %v2243 = vadd.f32 %v2215, %v2239
    %2244 = vset.pattern.permute.xlu0 27
    %2245 = vperm.xlu0 %2244, %v1362
    %v2246 = vpop.permute.xlu0 %2245
    %v2248 = vlaneseq
    %v2249 = vshrl.u32 %v2248, 7
    %v2250 = vsub.s32 3, %v2249
    %v2251 = vrot.slane %v1483, %v2250
    %v2252 = vlaneseq
    %v2253 = vshrl.u32 %v2252, 7
    %v2254 = vsub.s32 3, %v2253
    %v2255 = vrot.slane %v1484, %v2254
    %v2256 = vlaneseq
    %v2257 = vshrl.u32 %v2256, 7
    %v2258 = vsub.s32 3, %v2257
    %v2259 = vrot.slane %v1485, %v2258
    %v2260 = vlaneseq
    %v2261 = vshrl.u32 %v2260, 7
    %v2262 = vsub.s32 3, %v2261
    %v2263 = vrot.slane %v1486, %v2262
    %v2264 = vmul.f32 %v2246, %v2251
    %v2265 = vmul.f32 %v2246, %v2255
    %v2266 = vmul.f32 %v2246, %v2259
    %v2267 = vmul.f32 %v2246, %v2263
    %v2268 = vadd.f32 %v2240, %v2264
    %v2269 = vadd.f32 %v2241, %v2265
    %v2270 = vadd.f32 %v2242, %v2266
    %v2271 = vadd.f32 %v2243, %v2267
    %2272 = vset.pattern.permute.xlu0 28
    %2273 = vperm.xlu0 %2272, %v1362
    %v2274 = vpop.permute.xlu0 %2273
    %v2276 = vlaneseq
    %v2277 = vshrl.u32 %v2276, 7
    %v2278 = vsub.s32 0, %v2277
    %v2279 = vrot.slane %v1391, %v2278
    %v2280 = vlaneseq
    %v2281 = vshrl.u32 %v2280, 7
    %v2282 = vsub.s32 0, %v2281
    %v2283 = vrot.slane %v1392, %v2282
    %v2284 = vlaneseq
    %v2285 = vshrl.u32 %v2284, 7
    %v2286 = vsub.s32 0, %v2285
    %v2287 = vrot.slane %v1393, %v2286
    %v2288 = vlaneseq
    %v2289 = vshrl.u32 %v2288, 7
    %v2290 = vsub.s32 0, %v2289
    %v2291 = vrot.slane %v1394, %v2290
    %v2292 = vmul.f32 %v2274, %v2279
    %v2293 = vmul.f32 %v2274, %v2283
    %v2294 = vmul.f32 %v2274, %v2287
    %v2295 = vmul.f32 %v2274, %v2291
    %v2296 = vadd.f32 %v2268, %v2292
    %v2297 = vadd.f32 %v2269, %v2293
    %v2298 = vadd.f32 %v2270, %v2294
    %v2299 = vadd.f32 %v2271, %v2295
    %2300 = vset.pattern.permute.xlu0 29
    %2301 = vperm.xlu0 %2300, %v1362
    %v2302 = vpop.permute.xlu0 %2301
    %v2304 = vlaneseq
    %v2305 = vshrl.u32 %v2304, 7
    %v2306 = vsub.s32 1, %v2305
    %v2307 = vrot.slane %v1391, %v2306
    %v2308 = vlaneseq
    %v2309 = vshrl.u32 %v2308, 7
    %v2310 = vsub.s32 1, %v2309
    %v2311 = vrot.slane %v1392, %v2310
    %v2312 = vlaneseq
    %v2313 = vshrl.u32 %v2312, 7
    %v2314 = vsub.s32 1, %v2313
    %v2315 = vrot.slane %v1393, %v2314
    %v2316 = vlaneseq
    %v2317 = vshrl.u32 %v2316, 7
    %v2318 = vsub.s32 1, %v2317
    %v2319 = vrot.slane %v1394, %v2318
    %v2320 = vmul.f32 %v2302, %v2307
    %v2321 = vmul.f32 %v2302, %v2311
    %v2322 = vmul.f32 %v2302, %v2315
    %v2323 = vmul.f32 %v2302, %v2319
    %v2324 = vadd.f32 %v2296, %v2320
    %v2325 = vadd.f32 %v2297, %v2321
    %v2326 = vadd.f32 %v2298, %v2322
    %v2327 = vadd.f32 %v2299, %v2323
    %2328 = vset.pattern.permute.xlu0 30
    %2329 = vperm.xlu0 %2328, %v1362
    %v2330 = vpop.permute.xlu0 %2329
    %v2332 = vlaneseq
    %v2333 = vshrl.u32 %v2332, 7
    %v2334 = vsub.s32 2, %v2333
    %v2335 = vrot.slane %v1391, %v2334
    %v2336 = vlaneseq
    %v2337 = vshrl.u32 %v2336, 7
    %v2338 = vsub.s32 2, %v2337
    %v2339 = vrot.slane %v1392, %v2338
    %v2340 = vlaneseq
    %v2341 = vshrl.u32 %v2340, 7
    %v2342 = vsub.s32 2, %v2341
    %v2343 = vrot.slane %v1393, %v2342
    %v2344 = vlaneseq
    %v2345 = vshrl.u32 %v2344, 7
    %v2346 = vsub.s32 2, %v2345
    %v2347 = vrot.slane %v1394, %v2346
    %v2348 = vmul.f32 %v2330, %v2335
    %v2349 = vmul.f32 %v2330, %v2339
    %v2350 = vmul.f32 %v2330, %v2343
    %v2351 = vmul.f32 %v2330, %v2347
    %v2352 = vadd.f32 %v2324, %v2348
    %v2353 = vadd.f32 %v2325, %v2349
    %v2354 = vadd.f32 %v2326, %v2350
    %v2355 = vadd.f32 %v2327, %v2351
    %2356 = vset.pattern.permute.xlu0 31
    %2357 = vperm.xlu0 %2356, %v1362
    %v2358 = vpop.permute.xlu0 %2357
    %v2360 = vlaneseq
    %v2361 = vshrl.u32 %v2360, 7
    %v2362 = vsub.s32 3, %v2361
    %v2363 = vrot.slane %v1391, %v2362
    %v2364 = vlaneseq
    %v2365 = vshrl.u32 %v2364, 7
    %v2366 = vsub.s32 3, %v2365
    %v2367 = vrot.slane %v1392, %v2366
    %v2368 = vlaneseq
    %v2369 = vshrl.u32 %v2368, 7
    %v2370 = vsub.s32 3, %v2369
    %v2371 = vrot.slane %v1393, %v2370
    %v2372 = vlaneseq
    %v2373 = vshrl.u32 %v2372, 7
    %v2374 = vsub.s32 3, %v2373
    %v2375 = vrot.slane %v1394, %v2374
    %v2376 = vmul.f32 %v2358, %v2363
    %v2377 = vmul.f32 %v2358, %v2367
    %v2378 = vmul.f32 %v2358, %v2371
    %v2379 = vmul.f32 %v2358, %v2375
    %v2380 = vadd.f32 %v2352, %v2376
    %v2381 = vadd.f32 %v2353, %v2377
    %v2382 = vadd.f32 %v2354, %v2378
    %v2383 = vadd.f32 %v2355, %v2379
    %2384 = vset.pattern.permute.xlu0 32
    %2385 = vperm.xlu0 %2384, %v1362
    %v2386 = vpop.permute.xlu0 %2385
    %v2388 = vlaneseq
    %v2389 = vshrl.u32 %v2388, 7
    %v2390 = vsub.s32 0, %v2389
    %v2391 = vrot.slane %v1487, %v2390
    %v2392 = vlaneseq
    %v2393 = vshrl.u32 %v2392, 7
    %v2394 = vsub.s32 0, %v2393
    %v2395 = vrot.slane %v1488, %v2394
    %v2396 = vlaneseq
    %v2397 = vshrl.u32 %v2396, 7
    %v2398 = vsub.s32 0, %v2397
    %v2399 = vrot.slane %v1489, %v2398
    %v2400 = vlaneseq
    %v2401 = vshrl.u32 %v2400, 7
    %v2402 = vsub.s32 0, %v2401
    %v2403 = vrot.slane %v1490, %v2402
    %v2404 = vmul.f32 %v2386, %v2391
    %v2405 = vmul.f32 %v2386, %v2395
    %v2406 = vmul.f32 %v2386, %v2399
    %v2407 = vmul.f32 %v2386, %v2403
    %v2408 = vadd.f32 %v2380, %v2404
    %v2409 = vadd.f32 %v2381, %v2405
    %v2410 = vadd.f32 %v2382, %v2406
    %v2411 = vadd.f32 %v2383, %v2407
    %2412 = vset.pattern.permute.xlu0 33
    %2413 = vperm.xlu0 %2412, %v1362
    %v2414 = vpop.permute.xlu0 %2413
    %v2416 = vlaneseq
    %v2417 = vshrl.u32 %v2416, 7
    %v2418 = vsub.s32 1, %v2417
    %v2419 = vrot.slane %v1487, %v2418
    %v2420 = vlaneseq
    %v2421 = vshrl.u32 %v2420, 7
    %v2422 = vsub.s32 1, %v2421
    %v2423 = vrot.slane %v1488, %v2422
    %v2424 = vlaneseq
    %v2425 = vshrl.u32 %v2424, 7
    %v2426 = vsub.s32 1, %v2425
    %v2427 = vrot.slane %v1489, %v2426
    %v2428 = vlaneseq
    %v2429 = vshrl.u32 %v2428, 7
    %v2430 = vsub.s32 1, %v2429
    %v2431 = vrot.slane %v1490, %v2430
    %v2432 = vmul.f32 %v2414, %v2419
    %v2433 = vmul.f32 %v2414, %v2423
    %v2434 = vmul.f32 %v2414, %v2427
    %v2435 = vmul.f32 %v2414, %v2431
    %v2436 = vadd.f32 %v2408, %v2432
    %v2437 = vadd.f32 %v2409, %v2433
    %v2438 = vadd.f32 %v2410, %v2434
    %v2439 = vadd.f32 %v2411, %v2435
    %2440 = vset.pattern.permute.xlu0 34
    %2441 = vperm.xlu0 %2440, %v1362
    %v2442 = vpop.permute.xlu0 %2441
    %v2444 = vlaneseq
    %v2445 = vshrl.u32 %v2444, 7
    %v2446 = vsub.s32 2, %v2445
    %v2447 = vrot.slane %v1487, %v2446
    %v2448 = vlaneseq
    %v2449 = vshrl.u32 %v2448, 7
    %v2450 = vsub.s32 2, %v2449
    %v2451 = vrot.slane %v1488, %v2450
    %v2452 = vlaneseq
    %v2453 = vshrl.u32 %v2452, 7
    %v2454 = vsub.s32 2, %v2453
    %v2455 = vrot.slane %v1489, %v2454
    %v2456 = vlaneseq
    %v2457 = vshrl.u32 %v2456, 7
    %v2458 = vsub.s32 2, %v2457
    %v2459 = vrot.slane %v1490, %v2458
    %v2460 = vmul.f32 %v2442, %v2447
    %v2461 = vmul.f32 %v2442, %v2451
    %v2462 = vmul.f32 %v2442, %v2455
    %v2463 = vmul.f32 %v2442, %v2459
    %v2464 = vadd.f32 %v2436, %v2460
    %v2465 = vadd.f32 %v2437, %v2461
    %v2466 = vadd.f32 %v2438, %v2462
    %v2467 = vadd.f32 %v2439, %v2463
    %2468 = vset.pattern.permute.xlu0 35
    %2469 = vperm.xlu0 %2468, %v1362
    %v2470 = vpop.permute.xlu0 %2469
    %v2472 = vlaneseq
    %v2473 = vshrl.u32 %v2472, 7
    %v2474 = vsub.s32 3, %v2473
    %v2475 = vrot.slane %v1487, %v2474
    %v2476 = vlaneseq
    %v2477 = vshrl.u32 %v2476, 7
    %v2478 = vsub.s32 3, %v2477
    %v2479 = vrot.slane %v1488, %v2478
    %v2480 = vlaneseq
    %v2481 = vshrl.u32 %v2480, 7
    %v2482 = vsub.s32 3, %v2481
    %v2483 = vrot.slane %v1489, %v2482
    %v2484 = vlaneseq
    %v2485 = vshrl.u32 %v2484, 7
    %v2486 = vsub.s32 3, %v2485
    %v2487 = vrot.slane %v1490, %v2486
    %v2488 = vmul.f32 %v2470, %v2475
    %v2489 = vmul.f32 %v2470, %v2479
    %v2490 = vmul.f32 %v2470, %v2483
    %v2491 = vmul.f32 %v2470, %v2487
    %v2492 = vadd.f32 %v2464, %v2488
    %v2493 = vadd.f32 %v2465, %v2489
    %v2494 = vadd.f32 %v2466, %v2490
    %v2495 = vadd.f32 %v2467, %v2491
    %v2496 = vsel %vm1317, %v2492, 0.0
    %v2497 = vsel %vm1317, %v2493, 0.0
    %v2498 = vadd.f32 %v2496, %v2497
    %2499 = vadd.xlane.f32.xlu0 %v2498
    %v2500 = vpop.xlane.xlu0 %2499
    %v2501 = vsel %vm1317, %v2494, 0.0
    %v2502 = vsel %vm1317, %v2495, 0.0
    %v2503 = vadd.f32 %v2501, %v2502
    %2504 = vadd.xlane.f32.xlu0 %v2503
    %v2505 = vpop.xlane.xlu0 %2504
    %v2506 = vmul.f32 %v2500, 0.00390625
    %v2507 = vmul.f32 %v2505, 0.00390625
    %v2508 = vsub.f32 %v2492, %v2506
    %v2509 = vsub.f32 %v2493, %v2506
    %v2510 = vsub.f32 %v2494, %v2507
    %v2511 = vsub.f32 %v2495, %v2507
    %v2512 = vmul.f32 %v2508, %v2508
    %v2513 = vmul.f32 %v2509, %v2509
    %v2514 = vmul.f32 %v2510, %v2510
    %v2515 = vmul.f32 %v2511, %v2511
    %v2516 = vsel %vm1317, %v2512, 0.0
    %v2517 = vsel %vm1317, %v2513, 0.0
    %v2518 = vadd.f32 %v2516, %v2517
    %2519 = vadd.xlane.f32.xlu0 %v2518
    %v2520 = vpop.xlane.xlu0 %2519
    %v2521 = vsel %vm1317, %v2514, 0.0
    %v2522 = vsel %vm1317, %v2515, 0.0
    %v2523 = vadd.f32 %v2521, %v2522
    %2524 = vadd.xlane.f32.xlu0 %v2523
    %v2525 = vpop.xlane.xlu0 %2524
    %v2526 = vmul.f32 %v2520, 0.00390625
    %v2527 = vmul.f32 %v2525, 0.00390625
    %v2528 = vadd.f32 %v2526, 1e-05
    %v2529 = vadd.f32 %v2527, 1e-05
    %v2530 = vrsqrt.pop %v2528
    %v2531 = vrsqrt.pop %v2529
    %v2532 = vmul.f32 %v2508, %v2530
    %v2533 = vmul.f32 %v2509, %v2530
    %v2534 = vmul.f32 %v2510, %v2531
    %v2535 = vmul.f32 %v2511, %v2531
    %v2540 = vcombine.low %v2532, %v2533
    %v2541 = vcombine.low %v2534, %v2535
    %v2544 = vadd.f32 %v41, %v2540
    %v2545 = vadd.f32 %v42, %v2541
    %2546 = vst [vmem:[#allocation7] sm:$0xff] %v2544
    %2547 = vst [vmem:[#allocation7 + $0x8] sm:$0xff] %v2545
    // Predicated region
    $region22: #{tpu_custom_call.1} parent=1 // pred_check
      _
    $region23: #{tpu_custom_call.1} parent=1 // pred_check_branch
      %2549 = sbr.rel (0) target = $region25
    $region24: #{tpu_custom_call.1} parent=1 // pred_region
      %s2551 = ssub.s32 256, 256
      %2552 = vsyncadd [#allocation4], %s2551
      %s2553 = sshll.u32 [#allocation7], 4
      %s2554 = int_to_ptr.vmem [resolvable:$true] %s2553
      %2559 = dma.vmem_to_hbm [thread:$0]  %s2554, 256, %s3, [#allocation4], 128, 128, 8
    $region25: #{tpu_custom_call.1} parent=1 // pred_fallthru
      _
    // Predicated region
    $region26: #{tpu_custom_call.1} parent=1 // pred_check
      _
    $region27: #{tpu_custom_call.1} parent=1 // pred_check_branch
      %2561 = sbr.rel (0) target = $region29
    $region28: #{tpu_custom_call.1} parent=1 // pred_region
      %2562 = dma.done [#allocation4], 256
    $region29: #{tpu_custom_call.1} parent=1 // pred_fallthru
      _
    %2563 = vsyncpa [#allocation3], 1
    %2564 = vsyncpa [#allocation6], 1
    %2565 = vsyncpa [#allocation4], 1

</llo_original>
